<compile_context>
chip_gen: v6e
topology: v6e:2x2x1
jax: 0.10.0
libtpu: 0.0.40
codegen_flags: <defaults>
</compile_context>

<pallas_src>
import functools
import math

import jax
import jax.numpy as jnp
import numpy as np
from jax.experimental import pallas as pl
from jax.experimental.pallas import tpu as pltpu


# ---------------------------------------------------------------------------
# Generation-aware budgets / tiling helpers
# ---------------------------------------------------------------------------
def _vmem_budget_bytes():
    """Scoped-VMEM budget: ~3/4 of physical VMEM (96 MiB on v5e/v6e's 128 MiB,
    48 MiB on v7x's 64 MiB), leaving headroom for Mosaic-internal scratch."""
    try:
        cap = int(pltpu.get_tpu_info().vmem_capacity_bytes)
    except Exception:  # no TPU info available -> conservative v7x-safe default
        cap = 64 * 1024 * 1024
    cap = max(cap, 32 * 1024 * 1024)
    return (cap * 3) // 4


def _pick_tile(total, target, multiple=8):
    """Largest tile <= target that divides `total` and is a multiple of
    `multiple`; falls back to the full extent (full-dim blocks are exempt
    from the (8, 128) divisibility rule)."""
    t = min(target, total)
    if total % t == 0:
        return t
    t -= t % multiple
    while t >= multiple:
        if total % t == 0:
            return t
        t -= multiple
    # TODO(synk): ragged extents fall back to one full-size block; masked
    # partial tiles would be needed to tile them properly.
    return total


def _resident_spec(block_shape, index_map, single_buffer):
    """BlockSpec for a block whose index never changes (weights / biases).
    Single-buffering halves its VMEM footprint; falls back to the default
    (double-buffered) spec on jax versions without BlockSpec.pipeline_mode."""
    if single_buffer:
        try:
            return pl.BlockSpec(block_shape, index_map,
                                pipeline_mode=pl.Buffered(1))
        except Exception:
            pass
    return pl.BlockSpec(block_shape, index_map)


# ---------------------------------------------------------------------------
# Kernel 1: fused Q/K/V projection.
#   activations: (tile_m, d_model)
#   w_ref:       (3, d_model, d_model)  [Wq^T * 1/sqrt(d_k), Wk^T, Wv^T]
#   b_ref:       (3, 1, d_model) f32
#   o_ref:       (3, tile_m, d_model)
# ---------------------------------------------------------------------------
def _qkv_proj_self_kernel(x_ref, w_ref, b_ref, o_ref):
    # self-attention fast path: one activation read feeds all three projections
    x = x_ref[...]
    for idx in range(3):
        acc = jnp.dot(x, w_ref[idx], preferred_element_type=jnp.float32)
        o_ref[idx] = (acc + b_ref[idx]).astype(o_ref.dtype)


def _qkv_proj_kernel(q_ref, k_ref, v_ref, w_ref, b_ref, o_ref):
    for idx, x_ref in enumerate((q_ref, k_ref, v_ref)):
        acc = jnp.dot(x_ref[...], w_ref[idx],
                      preferred_element_type=jnp.float32)
        o_ref[idx] = (acc + b_ref[idx]).astype(o_ref.dtype)


def pallas_qkv_proj(q2, k2, v2, w_stack, b_stack, *, tile_m, out_dtype,
                    vmem_limit, self_attention, single_buffer_weights):
    M, d_model = q2.shape
    tm = _pick_tile(M, tile_m)
    act_spec = pl.BlockSpec((tm, d_model), lambda i: (i, 0))
    w_spec = _resident_spec((3, d_model, d_model), lambda i: (0, 0, 0),
                            single_buffer_weights)
    b_spec = _resident_spec((3, 1, d_model), lambda i: (0, 0, 0),
                            single_buffer_weights)
    out_spec = pl.BlockSpec((3, tm, d_model), lambda i: (0, i, 0))
    cp = pltpu.CompilerParams(dimension_semantics=("parallel",),
                              vmem_limit_bytes=vmem_limit)
    out_shape = jax.ShapeDtypeStruct((3, M, d_model), out_dtype)
    grid = (pl.cdiv(M, tm),)

    if self_attention:
        return pl.pallas_call(
            _qkv_proj_self_kernel, grid=grid,
            in_specs=[act_spec, w_spec, b_spec],
            out_specs=out_spec, out_shape=out_shape, compiler_params=cp,
        )(q2, w_stack, b_stack)

    return pl.pallas_call(
        _qkv_proj_kernel, grid=grid,
        in_specs=[act_spec, act_spec, act_spec, w_spec, b_spec],
        out_specs=out_spec, out_shape=out_shape, compiler_params=cp,
    )(q2, k2, v2, w_stack, b_stack)


# ---------------------------------------------------------------------------
# Kernel 2: flash-style attention + fused output projection.
#   grid = (B, S // tq, S // tk); kv axis is the innermost ("arbitrary") axis.
#   q/k/v blocks: (1, 1, tile, d_model) slices of the stacked (3,B,S,d) array
#   wo_ref:       (heads, d_k, d_model)  resident  (= out_w.T, head-split)
#   bo_ref:       (1, d_model) f32       resident
#   o_ref:        (1, tq, d_model)       written only on the last kv step
# ---------------------------------------------------------------------------
def _flash_attn_kernel(q_ref, k_ref, v_ref, wo_ref, bo_ref, o_ref,
                       m_sc, l_sc, acc_sc, *, heads, d_k, approx_recip):
    ki = pl.program_id(2)

    @pl.when(ki == 0)
    def _init():
        m_sc[...] = jnp.full(m_sc.shape, -jnp.inf, dtype=m_sc.dtype)
        l_sc[...] = jnp.zeros(l_sc.shape, dtype=l_sc.dtype)
        acc_sc[...] = jnp.zeros(acc_sc.shape, dtype=acc_sc.dtype)

    tq = q_ref.shape[2]
    tk = k_ref.shape[2]
    # Free last-dim split; heads become a batch dim of the MXU einsums.
    q = q_ref[0, 0].reshape(tq, heads, d_k)
    k = k_ref[0, 0].reshape(tk, heads, d_k)
    v = v_ref[0, 0].reshape(tk, heads, d_k)

    # scores[h, q, k] — q already carries the 1/sqrt(d_k) scale; f32 accum.
    s = jnp.einsum("qhd,khd->hqk", q, k,
                   preferred_element_type=jnp.float32)      # (H, tq, tk)

    # online softmax (all math in f32)
    m_prev = m_sc[...]                                       # (H, tq, 1)
    m_new = jnp.maximum(m_prev, jnp.max(s, axis=-1, keepdims=True))
    alpha = jnp.exp(m_prev - m_new)
    p = jnp.exp(s - m_new)                                   # (H, tq, tk)
    l_sc[...] = alpha * l_sc[...] + jnp.sum(p, axis=-1, keepdims=True)
    pv = jnp.einsum("hqk,khd->hqd", p.astype(v.dtype), v,
                    preferred_element_type=jnp.float32)      # (H, tq, d_k)
    acc_sc[...] = alpha * acc_sc[...] + pv
    m_sc[...] = m_new

    @pl.when(ki == pl.num_programs(2) - 1)
    def _finalize():
        inv_l = pl.reciprocal(l_sc[...], approx=approx_recip)   # (H, tq, 1)
        attn = (acc_sc[...] * inv_l).astype(wo_ref.dtype)       # (H, tq, d_k)
        d_model = heads * d_k
        # Fused output projection: out = sum_h attn_h @ Wo_h  (+ bias).
        # No concat / transpose: each head contributes a dense (tq, d_model)
        # MXU matmul accumulated in f32.
        out = jnp.zeros((tq, d_model), jnp.float32)
        for h in range(heads):
            out = out + jnp.dot(attn[h], wo_ref[h],
                                preferred_element_type=jnp.float32)
        o_ref[0] = (out + bo_ref[...]).astype(o_ref.dtype)


def pallas_flash_attention(qkv, wo_hdk, bo, *, heads, d_k, tile_q, tile_k,
                           out_dtype, vmem_limit, approx_recip,
                           single_buffer_weights):
    _, B, S, d_model = qkv.shape
    tq = _pick_tile(S, tile_q)
    tk = _pick_tile(S, tile_k)

    kernel = functools.partial(_flash_attn_kernel, heads=heads, d_k=d_k,
                               approx_recip=approx_recip)

    # The stacked (3, B, S, d_model) array is passed three times with the
    # stack index baked into each index_map: no host-side slices/copies.
    q_spec = pl.BlockSpec((1, 1, tq, d_model), lambda b, qi, ki: (0, b, qi, 0))
    k_spec = pl.BlockSpec((1, 1, tk, d_model), lambda b, qi, ki: (1, b, ki, 0))
    v_spec = pl.BlockSpec((1, 1, tk, d_model), lambda b, qi, ki: (2, b, ki, 0))
    wo_spec = _resident_spec((heads, d_k, d_model),
                             lambda b, qi, ki: (0, 0, 0), single_buffer_weights)
    bo_spec = _resident_spec((1, d_model), lambda b, qi, ki: (0, 0),
                             single_buffer_weights)

    return pl.pallas_call(
        kernel,
        grid=(B, S // tq, S // tk),
        in_specs=[q_spec, k_spec, v_spec, wo_spec, bo_spec],
        out_specs=pl.BlockSpec((1, tq, d_model), lambda b, qi, ki: (b, qi, 0)),
        out_shape=jax.ShapeDtypeStruct((B, S, d_model), out_dtype),
        scratch_shapes=[
            pltpu.VMEM((heads, tq, 1), jnp.float32),    # running max m
            pltpu.VMEM((heads, tq, 1), jnp.float32),    # running denom l
            pltpu.VMEM((heads, tq, d_k), jnp.float32),  # running numerator
        ],
        compiler_params=pltpu.CompilerParams(
            dimension_semantics=("parallel", "parallel", "arbitrary"),
            vmem_limit_bytes=vmem_limit),
    )(qkv, qkv, qkv, wo_hdk, bo)


# ---------------------------------------------------------------------------
# Full MultiHeadAttention forward.
# ---------------------------------------------------------------------------
def multi_head_attention(params, q, k, v, heads, *,
                         compute_dtype=jnp.bfloat16,
                         approx_softmax_recip=False,
                         tile_m=None, tile_q=256, tile_k=512,
                         single_buffer_weights=True,
                         is_self_attention=None):
    B, S, d_model = q.shape
    assert d_model % heads == 0
    d_k = d_model // heads
    M = B * S
    scale = 1.0 / math.sqrt(d_k)

    vmem_limit = _vmem_budget_bytes()
    if tile_m is None:
        # bigger M tiles on 128-MiB parts (v5e/v6e), smaller on v7x (64 MiB)
        tile_m = 512 if vmem_limit >= 80 * 1024 * 1024 else 256
    if is_self_attention is None:
        is_self_attention = (q is k) and (k is v)

    # Fold the 1/sqrt(d_k) score scale into the Q projection (zero kernel
    # cost; the weight prep folds away under jit).
    w_q_t = (params["q_w"] * scale).T
    b_q = params["q_b"] * scale
    w_stack = jnp.stack([w_q_t, params["k_w"].T, params["v_w"].T],
                        axis=0).astype(compute_dtype)
    b_stack = jnp.stack([b_q, params["k_b"], params["v_b"]],
                        axis=0).reshape(3, 1, d_model).astype(jnp.float32)

    q2 = q.reshape(M, d_model).astype(compute_dtype)
    k2 = k.reshape(M, d_model).astype(compute_dtype)
    v2 = v.reshape(M, d_model).astype(compute_dtype)

    qkv = pallas_qkv_proj(q2, k2, v2, w_stack, b_stack,
                          tile_m=tile_m, out_dtype=compute_dtype,
                          vmem_limit=vmem_limit,
                          self_attention=is_self_attention,
                          single_buffer_weights=single_buffer_weights)
    qkv = qkv.reshape(3, B, S, d_model)   # free reshape, no relayout

    # out = concat @ out_w.T + out_b;  out_w.T split per head for the fused
    # epilogue:  wo_hdk[h] = out_w.T[h*d_k:(h+1)*d_k, :]
    wo_hdk = params["out_w"].T.reshape(heads, d_k, d_model).astype(compute_dtype)
    bo = params["out_b"].reshape(1, d_model).astype(jnp.float32)

    return pallas_flash_attention(
        qkv, wo_hdk, bo, heads=heads, d_k=d_k,
        tile_q=tile_q, tile_k=tile_k, out_dtype=jnp.float32,
        vmem_limit=vmem_limit, approx_recip=approx_softmax_recip,
        single_buffer_weights=single_buffer_weights)


# ---------------------------------------------------------------------------
# Pure-JAX reference (matches the PyTorch module in eval mode, mask=None).
# ---------------------------------------------------------------------------
def reference_mha(params, q, k, v, heads):
    B, S, d_model = q.shape
    d_k = d_model // heads

    def lin(name, x):
        return x @ params[name + "_w"].T + params[name + "_b"]

    def split(t):
        return t.reshape(B, S, heads, d_k).transpose(0, 2, 1, 3)

    qh, kh, vh = split(lin("q", q)), split(lin("k", k)), split(lin("v", v))
    scores = jnp.einsum("bhqd,bhkd->bhqk", qh, kh) / math.sqrt(d_k)
    p = jax.nn.softmax(scores, axis=-1)
    oh = jnp.einsum("bhqk,bhkd->bhqd", p, vh)
    concat = oh.transpose(0, 2, 1, 3).reshape(B, S, d_model)
    return concat @ params["out_w"].T + params["out_b"]


def _make_params(key, d_model):
    keys = jax.random.split(key, 8)
    wscale = 1.0 / math.sqrt(d_model)
    return {
        "q_w": jax.random.normal(keys[0], (d_model, d_model), jnp.float32) * wscale,
        "q_b": jax.random.normal(keys[1], (d_model,), jnp.float32) * 0.01,
        "k_w": jax.random.normal(keys[2], (d_model, d_model), jnp.float32) * wscale,
        "k_b": jax.random.normal(keys[3], (d_model,), jnp.float32) * 0.01,
        "v_w": jax.random.normal(keys[4], (d_model, d_model), jnp.float32) * wscale,
        "v_b": jax.random.normal(keys[5], (d_model,), jnp.float32) * 0.01,
        "out_w": jax.random.normal(keys[6], (d_model, d_model), jnp.float32) * wscale,
        "out_b": jax.random.normal(keys[7], (d_model,), jnp.float32) * 0.01,
    }


# ---------------------------------------------------------------------------
if __name__ == "__main__":
    root = jax.random.PRNGKey(0)
    pkey, dkey, pkey2, dkey2 = jax.random.split(root, 4)

    # --- primary small test (module-consistent shapes) ---
    B, S, d_model, heads = 2, 8, 32, 4
    params = _make_params(pkey, d_model)
    kq, kk, kv = jax.random.split(dkey, 3)
    q = jax.random.normal(kq, (B, S, d_model), jnp.float32)
    k = jax.random.normal(kk, (B, S, d_model), jnp.float32)
    v = jax.random.normal(kv, (B, S, d_model), jnp.float32)
    ref = reference_mha(params, q, k, v, heads)

    SINGLE_BUFFER_WEIGHTS = True

    def _jit_mha(**kw):
        kwargs = dict(heads=heads, compute_dtype=jnp.float32,
                      approx_softmax_recip=False,
                      single_buffer_weights=SINGLE_BUFFER_WEIGHTS)
        kwargs.update(kw)
        return jax.jit(functools.partial(multi_head_attention, **kwargs))

    # exact f32 path (with fallback to double-buffered resident weights on
    # jax versions that reject BlockSpec(pipeline_mode=pl.Buffered(1)))
    try:
        out_f32 = jax.block_until_ready(_jit_mha()(params, q, k, v))
    except Exception:
        SINGLE_BUFFER_WEIGHTS = False
        out_f32 = jax.block_until_ready(_jit_mha()(params, q, k, v))
    np.testing.assert_allclose(np.asarray(out_f32), np.asarray(ref),
                               rtol=1e-4, atol=1e-4)

    # self-attention fast path (single activation read in the QKV projection)
    out_self = jax.block_until_ready(
        _jit_mha(is_self_attention=True)(params, q, q, q))
    ref_self = reference_mha(params, q, q, q, heads)
    np.testing.assert_allclose(np.asarray(out_self), np.asarray(ref_self),
                               rtol=1e-4, atol=1e-4)

    # bf16 MXU-operand fast path with approximate softmax reciprocal
    out_bf16 = jax.block_until_ready(
        _jit_mha(compute_dtype=jnp.bfloat16,
                 approx_softmax_recip=True)(params, q, k, v))
    np.testing.assert_allclose(np.asarray(out_bf16), np.asarray(ref),
                               rtol=1e-1, atol=1e-1)

    # --- second test: exercises multi-step online-softmax (2 kv tiles),
    #     q tiling and the gridded projections on aligned shapes ---
    B2, S2, d_model2, heads2 = 2, 256, 128, 8
    params2 = _make_params(pkey2, d_model2)
    kq2, kk2, kv2 = jax.random.split(dkey2, 3)
    qa = jax.random.normal(kq2, (B2, S2, d_model2), jnp.float32)
    ka = jax.random.normal(kk2, (B2, S2, d_model2), jnp.float32)
    va = jax.random.normal(kv2, (B2, S2, d_model2), jnp.float32)
    ref2 = reference_mha(params2, qa, ka, va, heads2)

    fn2 = jax.jit(functools.partial(
        multi_head_attention, heads=heads2, compute_dtype=jnp.float32,
        approx_softmax_recip=False, tile_m=256, tile_q=128, tile_k=128,
        single_buffer_weights=SINGLE_BUFFER_WEIGHTS))
    out2 = jax.block_until_ready(fn2(params2, qa, ka, va))
    np.testing.assert_allclose(np.asarray(out2), np.asarray(ref2),
                               rtol=1e-3, atol=1e-3)

    print("KERNEL_OK")
</pallas_src>

<mosaic_0001>
module attributes {stable_mosaic.version = 11 : i64} {
  func.func @_qkv_proj_kernel(%arg0: i32, %arg1: memref<16x32xf32, #tpu.memory_space<vmem>>, %arg2: memref<16x32xf32, #tpu.memory_space<vmem>>, %arg3: memref<16x32xf32, #tpu.memory_space<vmem>>, %arg4: memref<3x32x32xf32, #tpu.memory_space<vmem>>, %arg5: memref<3x1x32xf32, #tpu.memory_space<vmem>>, %arg6: memref<3x16x32xf32, #tpu.memory_space<vmem>>) attributes {dimension_semantics = [#tpu.dimension_semantics<parallel>], iteration_bounds = array<i64: 1>, scalar_prefetch = 0 : i64, scratch_operands = 0 : i64, tpu.core_type = #tpu.core_type<tc>, window_params = [{transform_indices = @transform_0, window_bounds = array<i64: 16, 32>}, {transform_indices = @transform_1, window_bounds = array<i64: 16, 32>}, {transform_indices = @transform_2, window_bounds = array<i64: 16, 32>}, {pipeline_mode = #tpu.pipeline_mode<synchronous>, transform_indices = @transform_3, window_bounds = array<i64: 3, 32, 32>}, {pipeline_mode = #tpu.pipeline_mode<synchronous>, transform_indices = @transform_4, window_bounds = array<i64: 3, 1, 32>}, {transform_indices = @transform_5, window_bounds = array<i64: 3, 16, 32>}]} {
    %c0 = arith.constant 0 : index
    %c0_0 = arith.constant 0 : index
    %0 = vector.load %arg1[%c0, %c0_0] : memref<16x32xf32, #tpu.memory_space<vmem>>, vector<16x32xf32>
    %c0_1 = arith.constant 0 : index
    %c0_2 = arith.constant 0 : index
    %c0_3 = arith.constant 0 : index
    %1 = vector.load %arg4[%c0_1, %c0_2, %c0_3] : memref<3x32x32xf32, #tpu.memory_space<vmem>>, vector<1x32x32xf32>
    %2 = vector.shape_cast %1 : vector<1x32x32xf32> to vector<32x32xf32>
    %cst = arith.constant dense<0.000000e+00> : vector<16x32xf32>
    %3 = tpu.matmul %0, %2, %cst {dimension_numbers = #tpu.dot_dimension_numbers<[1], [0], [0], [1], [0, 0, 1, 1], [], []>} : vector<16x32xf32>, vector<32x32xf32>, vector<16x32xf32> -> vector<16x32xf32>
    %c0_4 = arith.constant 0 : index
    %c0_5 = arith.constant 0 : index
    %c0_6 = arith.constant 0 : index
    %4 = vector.load %arg5[%c0_4, %c0_5, %c0_6] : memref<3x1x32xf32, #tpu.memory_space<vmem>>, vector<1x1x32xf32>
    %5 = vector.shape_cast %4 : vector<1x1x32xf32> to vector<1x32xf32>
    %6 = vector.broadcast %5 : vector<1x32xf32> to vector<16x32xf32>
    %7 = arith.addf %3, %6 : vector<16x32xf32>
    %c0_7 = arith.constant 0 : index
    %c0_8 = arith.constant 0 : index
    %c0_9 = arith.constant 0 : index
    %8 = vector.load %arg6[%c0_7, %c0_8, %c0_9] : memref<3x16x32xf32, #tpu.memory_space<vmem>>, vector<1x16x32xf32>
    %9 = vector.shape_cast %8 : vector<1x16x32xf32> to vector<16x32xf32>
    %10 = vector.shape_cast %7 : vector<16x32xf32> to vector<1x16x32xf32>
    tpu.vector_store %arg6[%c0_7, %c0_8, %c0_9], %10 {strides = array<i32>} : memref<3x16x32xf32, #tpu.memory_space<vmem>>, vector<1x16x32xf32>,
    %c0_10 = arith.constant 0 : index
    %c0_11 = arith.constant 0 : index
    %11 = vector.load %arg2[%c0_10, %c0_11] : memref<16x32xf32, #tpu.memory_space<vmem>>, vector<16x32xf32>
    %c1 = arith.constant 1 : index
    %c0_12 = arith.constant 0 : index
    %c0_13 = arith.constant 0 : index
    %12 = vector.load %arg4[%c1, %c0_12, %c0_13] : memref<3x32x32xf32, #tpu.memory_space<vmem>>, vector<1x32x32xf32>
    %13 = vector.shape_cast %12 : vector<1x32x32xf32> to vector<32x32xf32>
    %cst_14 = arith.constant dense<0.000000e+00> : vector<16x32xf32>
    %14 = tpu.matmul %11, %13, %cst_14 {dimension_numbers = #tpu.dot_dimension_numbers<[1], [0], [0], [1], [0, 0, 1, 1], [], []>} : vector<16x32xf32>, vector<32x32xf32>, vector<16x32xf32> -> vector<16x32xf32>
    %c1_15 = arith.constant 1 : index
    %c0_16 = arith.constant 0 : index
    %c0_17 = arith.constant 0 : index
    %15 = vector.load %arg5[%c1_15, %c0_16, %c0_17] : memref<3x1x32xf32, #tpu.memory_space<vmem>>, vector<1x1x32xf32>
    %16 = vector.shape_cast %15 : vector<1x1x32xf32> to vector<1x32xf32>
    %17 = vector.broadcast %16 : vector<1x32xf32> to vector<16x32xf32>
    %18 = arith.addf %14, %17 : vector<16x32xf32>
    %c1_18 = arith.constant 1 : index
    %c0_19 = arith.constant 0 : index
    %c0_20 = arith.constant 0 : index
    %19 = vector.load %arg6[%c1_18, %c0_19, %c0_20] : memref<3x16x32xf32, #tpu.memory_space<vmem>>, vector<1x16x32xf32>
    %20 = vector.shape_cast %19 : vector<1x16x32xf32> to vector<16x32xf32>
    %21 = vector.shape_cast %18 : vector<16x32xf32> to vector<1x16x32xf32>
    tpu.vector_store %arg6[%c1_18, %c0_19, %c0_20], %21 {strides = array<i32>} : memref<3x16x32xf32, #tpu.memory_space<vmem>>, vector<1x16x32xf32>,
    %c0_21 = arith.constant 0 : index
    %c0_22 = arith.constant 0 : index
    %22 = vector.load %arg3[%c0_21, %c0_22] : memref<16x32xf32, #tpu.memory_space<vmem>>, vector<16x32xf32>
    %c2 = arith.constant 2 : index
    %c0_23 = arith.constant 0 : index
    %c0_24 = arith.constant 0 : index
    %23 = vector.load %arg4[%c2, %c0_23, %c0_24] : memref<3x32x32xf32, #tpu.memory_space<vmem>>, vector<1x32x32xf32>
    %24 = vector.shape_cast %23 : vector<1x32x32xf32> to vector<32x32xf32>
    %cst_25 = arith.constant dense<0.000000e+00> : vector<16x32xf32>
    %25 = tpu.matmul %22, %24, %cst_25 {dimension_numbers = #tpu.dot_dimension_numbers<[1], [0], [0], [1], [0, 0, 1, 1], [], []>} : vector<16x32xf32>, vector<32x32xf32>, vector<16x32xf32> -> vector<16x32xf32>
    %c2_26 = arith.constant 2 : index
    %c0_27 = arith.constant 0 : index
    %c0_28 = arith.constant 0 : index
    %26 = vector.load %arg5[%c2_26, %c0_27, %c0_28] : memref<3x1x32xf32, #tpu.memory_space<vmem>>, vector<1x1x32xf32>
    %27 = vector.shape_cast %26 : vector<1x1x32xf32> to vector<1x32xf32>
    %28 = vector.broadcast %27 : vector<1x32xf32> to vector<16x32xf32>
    %29 = arith.addf %25, %28 : vector<16x32xf32>
    %c2_29 = arith.constant 2 : index
    %c0_30 = arith.constant 0 : index
    %c0_31 = arith.constant 0 : index
    %30 = vector.load %arg6[%c2_29, %c0_30, %c0_31] : memref<3x16x32xf32, #tpu.memory_space<vmem>>, vector<1x16x32xf32>
    %31 = vector.shape_cast %30 : vector<1x16x32xf32> to vector<16x32xf32>
    %32 = vector.shape_cast %29 : vector<16x32xf32> to vector<1x16x32xf32>
    tpu.vector_store %arg6[%c2_29, %c0_30, %c0_31], %32 {strides = array<i32>} : memref<3x16x32xf32, #tpu.memory_space<vmem>>, vector<1x16x32xf32>,
    return
  }
  func.func @transform_0(%arg0: i32) -> (i32, i32) {
    %c0_i32 = arith.constant 0 : i32
    %c0_i32_0 = arith.constant 0 : i32
    return %arg0, %c0_i32 : i32, i32
  }
  func.func @transform_1(%arg0: i32) -> (i32, i32) {
    %c0_i32 = arith.constant 0 : i32
    %c0_i32_0 = arith.constant 0 : i32
    return %arg0, %c0_i32 : i32, i32
  }
  func.func @transform_2(%arg0: i32) -> (i32, i32) {
    %c0_i32 = arith.constant 0 : i32
    %c0_i32_0 = arith.constant 0 : i32
    return %arg0, %c0_i32 : i32, i32
  }
  func.func @transform_3(%arg0: i32) -> (i32, i32, i32) {
    %c0_i32 = arith.constant 0 : i32
    %c0_i32_0 = arith.constant 0 : i32
    %c0_i32_1 = arith.constant 0 : i32
    %c0_i32_2 = arith.constant 0 : i32
    return %c0_i32, %c0_i32_0, %c0_i32_1 : i32, i32, i32
  }
  func.func @transform_4(%arg0: i32) -> (i32, i32, i32) {
    %c0_i32 = arith.constant 0 : i32
    %c0_i32_0 = arith.constant 0 : i32
    %c0_i32_1 = arith.constant 0 : i32
    %c0_i32_2 = arith.constant 0 : i32
    return %c0_i32, %c0_i32_0, %c0_i32_1 : i32, i32, i32
  }
  func.func @transform_5(%arg0: i32) -> (i32, i32, i32) {
    %c0_i32 = arith.constant 0 : i32
    %c0_i32_0 = arith.constant 0 : i32
    %c0_i32_1 = arith.constant 0 : i32
    return %c0_i32, %arg0, %c0_i32_0 : i32, i32, i32
  }
}

module attributes {stable_mosaic.version = 11 : i64} {
  func.func @_flash_attn_kernel(%arg0: i32, %arg1: i32, %arg2: i32, %arg3: memref<1x1x8x32xf32, #tpu.memory_space<vmem>>, %arg4: memref<1x1x8x32xf32, #tpu.memory_space<vmem>>, %arg5: memref<1x1x8x32xf32, #tpu.memory_space<vmem>>, %arg6: memref<4x8x32xf32, #tpu.memory_space<vmem>>, %arg7: memref<1x32xf32, #tpu.memory_space<vmem>>, %arg8: memref<1x8x32xf32, #tpu.memory_space<vmem>>, %arg9: memref<4x8x1xf32, #tpu.memory_space<vmem>>, %arg10: memref<4x8x1xf32, #tpu.memory_space<vmem>>, %arg11: memref<4x8x8xf32, #tpu.memory_space<vmem>>) attributes {dimension_semantics = [#tpu.dimension_semantics<parallel>, #tpu.dimension_semantics<parallel>, #tpu.dimension_semantics<arbitrary>], iteration_bounds = array<i64: 2, 1, 1>, scalar_prefetch = 0 : i64, scratch_operands = 3 : i64, tpu.core_type = #tpu.core_type<tc>, window_params = [{transform_indices = @transform_0, window_bounds = array<i64: 1, 1, 8, 32>}, {transform_indices = @transform_1, window_bounds = array<i64: 1, 1, 8, 32>}, {transform_indices = @transform_2, window_bounds = array<i64: 1, 1, 8, 32>}, {pipeline_mode = #tpu.pipeline_mode<synchronous>, transform_indices = @transform_3, window_bounds = array<i64: 4, 8, 32>}, {pipeline_mode = #tpu.pipeline_mode<synchronous>, transform_indices = @transform_4, window_bounds = array<i64: 1, 32>}, {transform_indices = @transform_5, window_bounds = array<i64: 1, 8, 32>}]} {
    %c0_i32 = arith.constant 0 : i32
    %0 = arith.cmpi eq, %arg2, %c0_i32 : i32
    %1 = arith.extui %0 : i1 to i32
    %c0_i32_0 = arith.constant 0 : i32
    %2 = arith.cmpi ne, %1, %c0_i32_0 : i32
    scf.if %2 {
      %cst_35 = arith.constant 0xFF800000 : f32
      %38 = vector.broadcast %cst_35 : f32 to vector<4x8x1xf32>
      %c0_36 = arith.constant 0 : index
      %c0_37 = arith.constant 0 : index
      %c0_38 = arith.constant 0 : index
      %39 = vector.load %arg9[%c0_36, %c0_37, %c0_38] : memref<4x8x1xf32, #tpu.memory_space<vmem>>, vector<4x8x1xf32>
      tpu.vector_store %arg9[%c0_36, %c0_37, %c0_38], %38 {strides = array<i32>} : memref<4x8x1xf32, #tpu.memory_space<vmem>>, vector<4x8x1xf32>,
      %cst_39 = arith.constant 0.000000e+00 : f32
      %40 = vector.broadcast %cst_39 : f32 to vector<4x8x1xf32>
      %c0_40 = arith.constant 0 : index
      %c0_41 = arith.constant 0 : index
      %c0_42 = arith.constant 0 : index
      %41 = vector.load %arg10[%c0_40, %c0_41, %c0_42] : memref<4x8x1xf32, #tpu.memory_space<vmem>>, vector<4x8x1xf32>
      tpu.vector_store %arg10[%c0_40, %c0_41, %c0_42], %40 {strides = array<i32>} : memref<4x8x1xf32, #tpu.memory_space<vmem>>, vector<4x8x1xf32>,
      %cst_43 = arith.constant 0.000000e+00 : f32
      %42 = vector.broadcast %cst_43 : f32 to vector<4x8x8xf32>
      %c0_44 = arith.constant 0 : index
      %c0_45 = arith.constant 0 : index
      %c0_46 = arith.constant 0 : index
      %43 = vector.load %arg11[%c0_44, %c0_45, %c0_46] : memref<4x8x8xf32, #tpu.memory_space<vmem>>, vector<4x8x8xf32>
      tpu.vector_store %arg11[%c0_44, %c0_45, %c0_46], %42 {strides = array<i32>} : memref<4x8x8xf32, #tpu.memory_space<vmem>>, vector<4x8x8xf32>,
    } else {
    }
    %c0 = arith.constant 0 : index
    %c0_1 = arith.constant 0 : index
    %c0_2 = arith.constant 0 : index
    %c0_3 = arith.constant 0 : index
    %3 = vector.load %arg3[%c0, %c0_1, %c0_2, %c0_3] : memref<1x1x8x32xf32, #tpu.memory_space<vmem>>, vector<1x1x8x32xf32>
    %4 = vector.shape_cast %3 : vector<1x1x8x32xf32> to vector<8x32xf32>
    %5 = vector.shape_cast %4 : vector<8x32xf32> to vector<8x4x8xf32>
    %c0_4 = arith.constant 0 : index
    %c0_5 = arith.constant 0 : index
    %c0_6 = arith.constant 0 : index
    %c0_7 = arith.constant 0 : index
    %6 = vector.load %arg4[%c0_4, %c0_5, %c0_6, %c0_7] : memref<1x1x8x32xf32, #tpu.memory_space<vmem>>, vector<1x1x8x32xf32>
    %7 = vector.shape_cast %6 : vector<1x1x8x32xf32> to vector<8x32xf32>
    %8 = vector.shape_cast %7 : vector<8x32xf32> to vector<8x4x8xf32>
    %c0_8 = arith.constant 0 : index
    %c0_9 = arith.constant 0 : index
    %c0_10 = arith.constant 0 : index
    %c0_11 = arith.constant 0 : index
    %9 = vector.load %arg5[%c0_8, %c0_9, %c0_10, %c0_11] : memref<1x1x8x32xf32, #tpu.memory_space<vmem>>, vector<1x1x8x32xf32>
    %10 = vector.shape_cast %9 : vector<1x1x8x32xf32> to vector<8x32xf32>
    %11 = vector.shape_cast %10 : vector<8x32xf32> to vector<8x4x8xf32>
    "tpu.trace_start"() <{level = 10 : i32, message = "qhd,khd->hqk"}> : () -> ()
    %cst = arith.constant dense<0.000000e+00> : vector<4x8x8xf32>
    %12 = tpu.matmul %5, %8, %cst {dimension_numbers = #tpu.dot_dimension_numbers<[2], [2], [0], [0], [0, 1, 0, 0, 1, 0], [1], [1]>} : vector<8x4x8xf32>, vector<8x4x8xf32>, vector<4x8x8xf32> -> vector<4x8x8xf32>
    "tpu.trace_stop"() : () -> ()
    %c0_12 = arith.constant 0 : index
    %c0_13 = arith.constant 0 : index
    %c0_14 = arith.constant 0 : index
    %13 = vector.load %arg9[%c0_12, %c0_13, %c0_14] : memref<4x8x1xf32, #tpu.memory_space<vmem>>, vector<4x8x1xf32>
    %cst_15 = arith.constant dense<0xFF800000> : vector<4x8xf32>
    %14 = vector.multi_reduction <maximumf>, %12, %cst_15 [2] : vector<4x8x8xf32> to vector<4x8xf32>
    %15 = vector.shape_cast %14 : vector<4x8xf32> to vector<4x8x1xf32>
    %16 = arith.maximumf %13, %15 : vector<4x8x1xf32>
    %17 = arith.subf %13, %16 : vector<4x8x1xf32>
    %18 = math.exp %17 : vector<4x8x1xf32>
    %19 = vector.broadcast %16 : vector<4x8x1xf32> to vector<4x8x8xf32>
    %20 = arith.subf %12, %19 : vector<4x8x8xf32>
    %21 = math.exp %20 : vector<4x8x8xf32>
    %c0_16 = arith.constant 0 : index
    %c0_17 = arith.constant 0 : index
    %c0_18 = arith.constant 0 : index
    %22 = vector.load %arg10[%c0_16, %c0_17, %c0_18] : memref<4x8x1xf32, #tpu.memory_space<vmem>>, vector<4x8x1xf32>
    %23 = arith.mulf %18, %22 : vector<4x8x1xf32>
    %cst_19 = arith.constant dense<0.000000e+00> : vector<4x8xf32>
    %24 = vector.multi_reduction <add>, %21, %cst_19 [2] : vector<4x8x8xf32> to vector<4x8xf32>
    %25 = vector.shape_cast %24 : vector<4x8xf32> to vector<4x8x1xf32>
    %26 = arith.addf %23, %25 : vector<4x8x1xf32>
    %c0_20 = arith.constant 0 : index
    %c0_21 = arith.constant 0 : index
    %c0_22 = arith.constant 0 : index
    %27 = vector.load %arg10[%c0_20, %c0_21, %c0_22] : memref<4x8x1xf32, #tpu.memory_space<vmem>>, vector<4x8x1xf32>
    tpu.vector_store %arg10[%c0_20, %c0_21, %c0_22], %26 {strides = array<i32>} : memref<4x8x1xf32, #tpu.memory_space<vmem>>, vector<4x8x1xf32>,
    "tpu.trace_start"() <{level = 10 : i32, message = "hqk,khd->hqd"}> : () -> ()
    %cst_23 = arith.constant dense<0.000000e+00> : vector<4x8x8xf32>
    %28 = tpu.matmul %21, %11, %cst_23 {dimension_numbers = #tpu.dot_dimension_numbers<[2], [0], [1], [2], [0, 0, 0, 1, 1, 2], [0], [1]>} : vector<4x8x8xf32>, vector<8x4x8xf32>, vector<4x8x8xf32> -> vector<4x8x8xf32>
    "tpu.trace_stop"() : () -> ()
    %c0_24 = arith.constant 0 : index
    %c0_25 = arith.constant 0 : index
    %c0_26 = arith.constant 0 : index
    %29 = vector.load %arg11[%c0_24, %c0_25, %c0_26] : memref<4x8x8xf32, #tpu.memory_space<vmem>>, vector<4x8x8xf32>
    %30 = vector.broadcast %18 : vector<4x8x1xf32> to vector<4x8x8xf32>
    %31 = arith.mulf %30, %29 : vector<4x8x8xf32>
    %32 = arith.addf %31, %28 : vector<4x8x8xf32>
    %c0_27 = arith.constant 0 : index
    %c0_28 = arith.constant 0 : index
    %c0_29 = arith.constant 0 : index
    %33 = vector.load %arg11[%c0_27, %c0_28, %c0_29] : memref<4x8x8xf32, #tpu.memory_space<vmem>>, vector<4x8x8xf32>
    tpu.vector_store %arg11[%c0_27, %c0_28, %c0_29], %32 {strides = array<i32>} : memref<4x8x8xf32, #tpu.memory_space<vmem>>, vector<4x8x8xf32>,
    %c0_30 = arith.constant 0 : index
    %c0_31 = arith.constant 0 : index
    %c0_32 = arith.constant 0 : index
    %34 = vector.load %arg9[%c0_30, %c0_31, %c0_32] : memref<4x8x1xf32, #tpu.memory_space<vmem>>, vector<4x8x1xf32>
    tpu.vector_store %arg9[%c0_30, %c0_31, %c0_32], %16 {strides = array<i32>} : memref<4x8x1xf32, #tpu.memory_space<vmem>>, vector<4x8x1xf32>,
    %c0_i32_33 = arith.constant 0 : i32
    %35 = arith.cmpi eq, %arg2, %c0_i32_33 : i32
    %36 = arith.extui %35 : i1 to i32
    %c0_i32_34 = arith.constant 0 : i32
    %37 = arith.cmpi ne, %36, %c0_i32_34 : i32
    scf.if %37 {
      %c0_35 = arith.constant 0 : index
      %c0_36 = arith.constant 0 : index
      %c0_37 = arith.constant 0 : index
      %38 = vector.load %arg10[%c0_35, %c0_36, %c0_37] : memref<4x8x1xf32, #tpu.memory_space<vmem>>, vector<4x8x1xf32>
      %39 = tpu.reciprocal %38 : vector<4x8x1xf32> -> vector<4x8x1xf32>
      %c0_38 = arith.constant 0 : index
      %c0_39 = arith.constant 0 : index
      %c0_40 = arith.constant 0 : index
      %40 = vector.load %arg11[%c0_38, %c0_39, %c0_40] : memref<4x8x8xf32, #tpu.memory_space<vmem>>, vector<4x8x8xf32>
      %41 = vector.broadcast %39 : vector<4x8x1xf32> to vector<4x8x8xf32>
      %42 = arith.mulf %40, %41 : vector<4x8x8xf32>
      %cst_41 = arith.constant 0.000000e+00 : f32
      %43 = vector.broadcast %cst_41 : f32 to vector<8x32xf32>
      %44 = vector.extract_strided_slice %42 {offsets = [0, 0, 0], sizes = [1, 8, 8], strides = [1, 1, 1]} : vector<4x8x8xf32> to vector<1x8x8xf32>
      %45 = vector.shape_cast %44 : vector<1x8x8xf32> to vector<8x8xf32>
      %c0_42 = arith.constant 0 : index
      %c0_43 = arith.constant 0 : index
      %c0_44 = arith.constant 0 : index
      %46 = vector.load %arg6[%c0_42, %c0_43, %c0_44] : memref<4x8x32xf32, #tpu.memory_space<vmem>>, vector<1x8x32xf32>
      %47 = vector.shape_cast %46 : vector<1x8x32xf32> to vector<8x32xf32>
      %cst_45 = arith.constant dense<0.000000e+00> : vector<8x32xf32>
      %48 = tpu.matmul %45, %47, %cst_45 {dimension_numbers = #tpu.dot_dimension_numbers<[1], [0], [0], [1], [0, 0, 1, 1], [], []>} : vector<8x8xf32>, vector<8x32xf32>, vector<8x32xf32> -> vector<8x32xf32>
      %49 = arith.addf %43, %48 : vector<8x32xf32>
      %50 = vector.extract_strided_slice %42 {offsets = [1, 0, 0], sizes = [1, 8, 8], strides = [1, 1, 1]} : vector<4x8x8xf32> to vector<1x8x8xf32>
      %51 = vector.shape_cast %50 : vector<1x8x8xf32> to vector<8x8xf32>
      %c1 = arith.constant 1 : index
      %c0_46 = arith.constant 0 : index
      %c0_47 = arith.constant 0 : index
      %52 = vector.load %arg6[%c1, %c0_46, %c0_47] : memref<4x8x32xf32, #tpu.memory_space<vmem>>, vector<1x8x32xf32>
      %53 = vector.shape_cast %52 : vector<1x8x32xf32> to vector<8x32xf32>
      %cst_48 = arith.constant dense<0.000000e+00> : vector<8x32xf32>
      %54 = tpu.matmul %51, %53, %cst_48 {dimension_numbers = #tpu.dot_dimension_numbers<[1], [0], [0], [1], [0, 0, 1, 1], [], []>} : vector<8x8xf32>, vector<8x32xf32>, vector<8x32xf32> -> vector<8x32xf32>
      %55 = arith.addf %49, %54 : vector<8x32xf32>
      %56 = vector.extract_strided_slice %42 {offsets = [2, 0, 0], sizes = [1, 8, 8], strides = [1, 1, 1]} : vector<4x8x8xf32> to vector<1x8x8xf32>
      %57 = vector.shape_cast %56 : vector<1x8x8xf32> to vector<8x8xf32>
      %c2 = arith.constant 2 : index
      %c0_49 = arith.constant 0 : index
      %c0_50 = arith.constant 0 : index
      %58 = vector.load %arg6[%c2, %c0_49, %c0_50] : memref<4x8x32xf32, #tpu.memory_space<vmem>>, vector<1x8x32xf32>
      %59 = vector.shape_cast %58 : vector<1x8x32xf32> to vector<8x32xf32>
      %cst_51 = arith.constant dense<0.000000e+00> : vector<8x32xf32>
      %60 = tpu.matmul %57, %59, %cst_51 {dimension_numbers = #tpu.dot_dimension_numbers<[1], [0], [0], [1], [0, 0, 1, 1], [], []>} : vector<8x8xf32>, vector<8x32xf32>, vector<8x32xf32> -> vector<8x32xf32>
      %61 = arith.addf %55, %60 : vector<8x32xf32>
      %62 = vector.extract_strided_slice %42 {offsets = [3, 0, 0], sizes = [1, 8, 8], strides = [1, 1, 1]} : vector<4x8x8xf32> to vector<1x8x8xf32>
      %63 = vector.shape_cast %62 : vector<1x8x8xf32> to vector<8x8xf32>
      %c3 = arith.constant 3 : index
      %c0_52 = arith.constant 0 : index
      %c0_53 = arith.constant 0 : index
      %64 = vector.load %arg6[%c3, %c0_52, %c0_53] : memref<4x8x32xf32, #tpu.memory_space<vmem>>, vector<1x8x32xf32>
      %65 = vector.shape_cast %64 : vector<1x8x32xf32> to vector<8x32xf32>
      %cst_54 = arith.constant dense<0.000000e+00> : vector<8x32xf32>
      %66 = tpu.matmul %63, %65, %cst_54 {dimension_numbers = #tpu.dot_dimension_numbers<[1], [0], [0], [1], [0, 0, 1, 1], [], []>} : vector<8x8xf32>, vector<8x32xf32>, vector<8x32xf32> -> vector<8x32xf32>
      %67 = arith.addf %61, %66 : vector<8x32xf32>
      %c0_55 = arith.constant 0 : index
      %c0_56 = arith.constant 0 : index
      %68 = vector.load %arg7[%c0_55, %c0_56] : memref<1x32xf32, #tpu.memory_space<vmem>>, vector<1x32xf32>
      %69 = vector.broadcast %68 : vector<1x32xf32> to vector<8x32xf32>
      %70 = arith.addf %67, %69 : vector<8x32xf32>
      %c0_57 = arith.constant 0 : index
      %c0_58 = arith.constant 0 : index
      %c0_59 = arith.constant 0 : index
      %71 = vector.load %arg8[%c0_57, %c0_58, %c0_59] : memref<1x8x32xf32, #tpu.memory_space<vmem>>, vector<1x8x32xf32>
      %72 = vector.shape_cast %71 : vector<1x8x32xf32> to vector<8x32xf32>
      %73 = vector.shape_cast %70 : vector<8x32xf32> to vector<1x8x32xf32>
      tpu.vector_store %arg8[%c0_57, %c0_58, %c0_59], %73 {strides = array<i32>} : memref<1x8x32xf32, #tpu.memory_space<vmem>>, vector<1x8x32xf32>,
    } else {
    }
    return
  }
  func.func @transform_0(%arg0: i32, %arg1: i32, %arg2: i32) -> (i32, i32, i32, i32) {
    %c0_i32 = arith.constant 0 : i32
    %c0_i32_0 = arith.constant 0 : i32
    %c0_i32_1 = arith.constant 0 : i32
    return %c0_i32, %arg0, %arg1, %c0_i32_0 : i32, i32, i32, i32
  }
  func.func @transform_1(%arg0: i32, %arg1: i32, %arg2: i32) -> (i32, i32, i32, i32) {
    %c1_i32 = arith.constant 1 : i32
    %c0_i32 = arith.constant 0 : i32
    %c0_i32_0 = arith.constant 0 : i32
    return %c1_i32, %arg0, %arg2, %c0_i32 : i32, i32, i32, i32
  }
  func.func @transform_2(%arg0: i32, %arg1: i32, %arg2: i32) -> (i32, i32, i32, i32) {
    %c2_i32 = arith.constant 2 : i32
    %c0_i32 = arith.constant 0 : i32
    %c0_i32_0 = arith.constant 0 : i32
    return %c2_i32, %arg0, %arg2, %c0_i32 : i32, i32, i32, i32
  }
  func.func @transform_3(%arg0: i32, %arg1: i32, %arg2: i32) -> (i32, i32, i32) {
    %c0_i32 = arith.constant 0 : i32
    %c0_i32_0 = arith.constant 0 : i32
    %c0_i32_1 = arith.constant 0 : i32
    %c0_i32_2 = arith.constant 0 : i32
    return %c0_i32, %c0_i32_0, %c0_i32_1 : i32, i32, i32
  }
  func.func @transform_4(%arg0: i32, %arg1: i32, %arg2: i32) -> (i32, i32) {
    %c0_i32 = arith.constant 0 : i32
    %c0_i32_0 = arith.constant 0 : i32
    %c0_i32_1 = arith.constant 0 : i32
    return %c0_i32, %c0_i32_0 : i32, i32
  }
  func.func @transform_5(%arg0: i32, %arg1: i32, %arg2: i32) -> (i32, i32, i32) {
    %c0_i32 = arith.constant 0 : i32
    %c0_i32_0 = arith.constant 0 : i32
    return %arg0, %arg1, %c0_i32 : i32, i32, i32
  }
}

module attributes {stable_mosaic.version = 11 : i64} {
  func.func @_qkv_proj_kernel(%arg0: i32, %arg1: memref<16x32xf32, #tpu.memory_space<vmem>>, %arg2: memref<16x32xf32, #tpu.memory_space<vmem>>, %arg3: memref<16x32xf32, #tpu.memory_space<vmem>>, %arg4: memref<3x32x32xf32, #tpu.memory_space<vmem>>, %arg5: memref<3x1x32xf32, #tpu.memory_space<vmem>>, %arg6: memref<3x16x32xf32, #tpu.memory_space<vmem>>) attributes {dimension_semantics = [#tpu.dimension_semantics<parallel>], iteration_bounds = array<i64: 1>, scalar_prefetch = 0 : i64, scratch_operands = 0 : i64, tpu.core_type = #tpu.core_type<tc>, window_params = [{transform_indices = @transform_0, window_bounds = array<i64: 16, 32>}, {transform_indices = @transform_1, window_bounds = array<i64: 16, 32>}, {transform_indices = @transform_2, window_bounds = array<i64: 16, 32>}, {pipeline_mode = #tpu.pipeline_mode<synchronous>, transform_indices = @transform_3, window_bounds = array<i64: 3, 32, 32>}, {pipeline_mode = #tpu.pipeline_mode<synchronous>, transform_indices = @transform_4, window_bounds = array<i64: 3, 1, 32>}, {transform_indices = @transform_5, window_bounds = array<i64: 3, 16, 32>}]} {
    %c0 = arith.constant 0 : index
    %c0_0 = arith.constant 0 : index
    %0 = vector.load %arg1[%c0, %c0_0] : memref<16x32xf32, #tpu.memory_space<vmem>>, vector<16x32xf32>
    %c0_1 = arith.constant 0 : index
    %c0_2 = arith.constant 0 : index
    %c0_3 = arith.constant 0 : index
    %1 = vector.load %arg4[%c0_1, %c0_2, %c0_3] : memref<3x32x32xf32, #tpu.memory_space<vmem>>, vector<1x32x32xf32>
    %2 = vector.shape_cast %1 : vector<1x32x32xf32> to vector<32x32xf32>
    %cst = arith.constant dense<0.000000e+00> : vector<16x32xf32>
    %3 = tpu.matmul %0, %2, %cst {dimension_numbers = #tpu.dot_dimension_numbers<[1], [0], [0], [1], [0, 0, 1, 1], [], []>} : vector<16x32xf32>, vector<32x32xf32>, vector<16x32xf32> -> vector<16x32xf32>
    %c0_4 = arith.constant 0 : index
    %c0_5 = arith.constant 0 : index
    %c0_6 = arith.constant 0 : index
    %4 = vector.load %arg5[%c0_4, %c0_5, %c0_6] : memref<3x1x32xf32, #tpu.memory_space<vmem>>, vector<1x1x32xf32>
    %5 = vector.shape_cast %4 : vector<1x1x32xf32> to vector<1x32xf32>
    %6 = vector.broadcast %5 : vector<1x32xf32> to vector<16x32xf32>
    %7 = arith.addf %3, %6 : vector<16x32xf32>
    %c0_7 = arith.constant 0 : index
    %c0_8 = arith.constant 0 : index
    %c0_9 = arith.constant 0 : index
    %8 = vector.load %arg6[%c0_7, %c0_8, %c0_9] : memref<3x16x32xf32, #tpu.memory_space<vmem>>, vector<1x16x32xf32>
    %9 = vector.shape_cast %8 : vector<1x16x32xf32> to vector<16x32xf32>
    %10 = vector.shape_cast %7 : vector<16x32xf32> to vector<1x16x32xf32>
    tpu.vector_store %arg6[%c0_7, %c0_8, %c0_9], %10 {strides = array<i32>} : memref<3x16x32xf32, #tpu.memory_space<vmem>>, vector<1x16x32xf32>,
    %c0_10 = arith.constant 0 : index
    %c0_11 = arith.constant 0 : index
    %11 = vector.load %arg2[%c0_10, %c0_11] : memref<16x32xf32, #tpu.memory_space<vmem>>, vector<16x32xf32>
    %c1 = arith.constant 1 : index
    %c0_12 = arith.constant 0 : index
    %c0_13 = arith.constant 0 : index
    %12 = vector.load %arg4[%c1, %c0_12, %c0_13] : memref<3x32x32xf32, #tpu.memory_space<vmem>>, vector<1x32x32xf32>
    %13 = vector.shape_cast %12 : vector<1x32x32xf32> to vector<32x32xf32>
    %cst_14 = arith.constant dense<0.000000e+00> : vector<16x32xf32>
    %14 = tpu.matmul %11, %13, %cst_14 {dimension_numbers = #tpu.dot_dimension_numbers<[1], [0], [0], [1], [0, 0, 1, 1], [], []>} : vector<16x32xf32>, vector<32x32xf32>, vector<16x32xf32> -> vector<16x32xf32>
    %c1_15 = arith.constant 1 : index
    %c0_16 = arith.constant 0 : index
    %c0_17 = arith.constant 0 : index
    %15 = vector.load %arg5[%c1_15, %c0_16, %c0_17] : memref<3x1x32xf32, #tpu.memory_space<vmem>>, vector<1x1x32xf32>
    %16 = vector.shape_cast %15 : vector<1x1x32xf32> to vector<1x32xf32>
    %17 = vector.broadcast %16 : vector<1x32xf32> to vector<16x32xf32>
    %18 = arith.addf %14, %17 : vector<16x32xf32>
    %c1_18 = arith.constant 1 : index
    %c0_19 = arith.constant 0 : index
    %c0_20 = arith.constant 0 : index
    %19 = vector.load %arg6[%c1_18, %c0_19, %c0_20] : memref<3x16x32xf32, #tpu.memory_space<vmem>>, vector<1x16x32xf32>
    %20 = vector.shape_cast %19 : vector<1x16x32xf32> to vector<16x32xf32>
    %21 = vector.shape_cast %18 : vector<16x32xf32> to vector<1x16x32xf32>
    tpu.vector_store %arg6[%c1_18, %c0_19, %c0_20], %21 {strides = array<i32>} : memref<3x16x32xf32, #tpu.memory_space<vmem>>, vector<1x16x32xf32>,
    %c0_21 = arith.constant 0 : index
    %c0_22 = arith.constant 0 : index
    %22 = vector.load %arg3[%c0_21, %c0_22] : memref<16x32xf32, #tpu.memory_space<vmem>>, vector<16x32xf32>
    %c2 = arith.constant 2 : index
    %c0_23 = arith.constant 0 : index
    %c0_24 = arith.constant 0 : index
    %23 = vector.load %arg4[%c2, %c0_23, %c0_24] : memref<3x32x32xf32, #tpu.memory_space<vmem>>, vector<1x32x32xf32>
    %24 = vector.shape_cast %23 : vector<1x32x32xf32> to vector<32x32xf32>
    %cst_25 = arith.constant dense<0.000000e+00> : vector<16x32xf32>
    %25 = tpu.matmul %22, %24, %cst_25 {dimension_numbers = #tpu.dot_dimension_numbers<[1], [0], [0], [1], [0, 0, 1, 1], [], []>} : vector<16x32xf32>, vector<32x32xf32>, vector<16x32xf32> -> vector<16x32xf32>
    %c2_26 = arith.constant 2 : index
    %c0_27 = arith.constant 0 : index
    %c0_28 = arith.constant 0 : index
    %26 = vector.load %arg5[%c2_26, %c0_27, %c0_28] : memref<3x1x32xf32, #tpu.memory_space<vmem>>, vector<1x1x32xf32>
    %27 = vector.shape_cast %26 : vector<1x1x32xf32> to vector<1x32xf32>
    %28 = vector.broadcast %27 : vector<1x32xf32> to vector<16x32xf32>
    %29 = arith.addf %25, %28 : vector<16x32xf32>
    %c2_29 = arith.constant 2 : index
    %c0_30 = arith.constant 0 : index
    %c0_31 = arith.constant 0 : index
    %30 = vector.load %arg6[%c2_29, %c0_30, %c0_31] : memref<3x16x32xf32, #tpu.memory_space<vmem>>, vector<1x16x32xf32>
    %31 = vector.shape_cast %30 : vector<1x16x32xf32> to vector<16x32xf32>
    %32 = vector.shape_cast %29 : vector<16x32xf32> to vector<1x16x32xf32>
    tpu.vector_store %arg6[%c2_29, %c0_30, %c0_31], %32 {strides = array<i32>} : memref<3x16x32xf32, #tpu.memory_space<vmem>>, vector<1x16x32xf32>,
    return
  }
  func.func @transform_0(%arg0: i32) -> (i32, i32) {
    %c0_i32 = arith.constant 0 : i32
    %c0_i32_0 = arith.constant 0 : i32
    return %arg0, %c0_i32 : i32, i32
  }
  func.func @transform_1(%arg0: i32) -> (i32, i32) {
    %c0_i32 = arith.constant 0 : i32
    %c0_i32_0 = arith.constant 0 : i32
    return %arg0, %c0_i32 : i32, i32
  }
  func.func @transform_2(%arg0: i32) -> (i32, i32) {
    %c0_i32 = arith.constant 0 : i32
    %c0_i32_0 = arith.constant 0 : i32
    return %arg0, %c0_i32 : i32, i32
  }
  func.func @transform_3(%arg0: i32) -> (i32, i32, i32) {
    %c0_i32 = arith.constant 0 : i32
    %c0_i32_0 = arith.constant 0 : i32
    %c0_i32_1 = arith.constant 0 : i32
    %c0_i32_2 = arith.constant 0 : i32
    return %c0_i32, %c0_i32_0, %c0_i32_1 : i32, i32, i32
  }
  func.func @transform_4(%arg0: i32) -> (i32, i32, i32) {
    %c0_i32 = arith.constant 0 : i32
    %c0_i32_0 = arith.constant 0 : i32
    %c0_i32_1 = arith.constant 0 : i32
    %c0_i32_2 = arith.constant 0 : i32
    return %c0_i32, %c0_i32_0, %c0_i32_1 : i32, i32, i32
  }
  func.func @transform_5(%arg0: i32) -> (i32, i32, i32) {
    %c0_i32 = arith.constant 0 : i32
    %c0_i32_0 = arith.constant 0 : i32
    %c0_i32_1 = arith.constant 0 : i32
    return %c0_i32, %arg0, %c0_i32_0 : i32, i32, i32
  }
}

module attributes {stable_mosaic.version = 11 : i64} {
  func.func @_flash_attn_kernel(%arg0: i32, %arg1: i32, %arg2: i32, %arg3: memref<1x1x8x32xf32, #tpu.memory_space<vmem>>, %arg4: memref<1x1x8x32xf32, #tpu.memory_space<vmem>>, %arg5: memref<1x1x8x32xf32, #tpu.memory_space<vmem>>, %arg6: memref<4x8x32xf32, #tpu.memory_space<vmem>>, %arg7: memref<1x32xf32, #tpu.memory_space<vmem>>, %arg8: memref<1x8x32xf32, #tpu.memory_space<vmem>>, %arg9: memref<4x8x1xf32, #tpu.memory_space<vmem>>, %arg10: memref<4x8x1xf32, #tpu.memory_space<vmem>>, %arg11: memref<4x8x8xf32, #tpu.memory_space<vmem>>) attributes {dimension_semantics = [#tpu.dimension_semantics<parallel>, #tpu.dimension_semantics<parallel>, #tpu.dimension_semantics<arbitrary>], iteration_bounds = array<i64: 2, 1, 1>, scalar_prefetch = 0 : i64, scratch_operands = 3 : i64, tpu.core_type = #tpu.core_type<tc>, window_params = [{transform_indices = @transform_0, window_bounds = array<i64: 1, 1, 8, 32>}, {transform_indices = @transform_1, window_bounds = array<i64: 1, 1, 8, 32>}, {transform_indices = @transform_2, window_bounds = array<i64: 1, 1, 8, 32>}, {pipeline_mode = #tpu.pipeline_mode<synchronous>, transform_indices = @transform_3, window_bounds = array<i64: 4, 8, 32>}, {pipeline_mode = #tpu.pipeline_mode<synchronous>, transform_indices = @transform_4, window_bounds = array<i64: 1, 32>}, {transform_indices = @transform_5, window_bounds = array<i64: 1, 8, 32>}]} {
    %c0_i32 = arith.constant 0 : i32
    %0 = arith.cmpi eq, %arg2, %c0_i32 : i32
    %1 = arith.extui %0 : i1 to i32
    %c0_i32_0 = arith.constant 0 : i32
    %2 = arith.cmpi ne, %1, %c0_i32_0 : i32
    scf.if %2 {
      %cst_35 = arith.constant 0xFF800000 : f32
      %38 = vector.broadcast %cst_35 : f32 to vector<4x8x1xf32>
      %c0_36 = arith.constant 0 : index
      %c0_37 = arith.constant 0 : index
      %c0_38 = arith.constant 0 : index
      %39 = vector.load %arg9[%c0_36, %c0_37, %c0_38] : memref<4x8x1xf32, #tpu.memory_space<vmem>>, vector<4x8x1xf32>
      tpu.vector_store %arg9[%c0_36, %c0_37, %c0_38], %38 {strides = array<i32>} : memref<4x8x1xf32, #tpu.memory_space<vmem>>, vector<4x8x1xf32>,
      %cst_39 = arith.constant 0.000000e+00 : f32
      %40 = vector.broadcast %cst_39 : f32 to vector<4x8x1xf32>
      %c0_40 = arith.constant 0 : index
      %c0_41 = arith.constant 0 : index
      %c0_42 = arith.constant 0 : index
      %41 = vector.load %arg10[%c0_40, %c0_41, %c0_42] : memref<4x8x1xf32, #tpu.memory_space<vmem>>, vector<4x8x1xf32>
      tpu.vector_store %arg10[%c0_40, %c0_41, %c0_42], %40 {strides = array<i32>} : memref<4x8x1xf32, #tpu.memory_space<vmem>>, vector<4x8x1xf32>,
      %cst_43 = arith.constant 0.000000e+00 : f32
      %42 = vector.broadcast %cst_43 : f32 to vector<4x8x8xf32>
      %c0_44 = arith.constant 0 : index
      %c0_45 = arith.constant 0 : index
      %c0_46 = arith.constant 0 : index
      %43 = vector.load %arg11[%c0_44, %c0_45, %c0_46] : memref<4x8x8xf32, #tpu.memory_space<vmem>>, vector<4x8x8xf32>
      tpu.vector_store %arg11[%c0_44, %c0_45, %c0_46], %42 {strides = array<i32>} : memref<4x8x8xf32, #tpu.memory_space<vmem>>, vector<4x8x8xf32>,
    } else {
    }
    %c0 = arith.constant 0 : index
    %c0_1 = arith.constant 0 : index
    %c0_2 = arith.constant 0 : index
    %c0_3 = arith.constant 0 : index
    %3 = vector.load %arg3[%c0, %c0_1, %c0_2, %c0_3] : memref<1x1x8x32xf32, #tpu.memory_space<vmem>>, vector<1x1x8x32xf32>
    %4 = vector.shape_cast %3 : vector<1x1x8x32xf32> to vector<8x32xf32>
    %5 = vector.shape_cast %4 : vector<8x32xf32> to vector<8x4x8xf32>
    %c0_4 = arith.constant 0 : index
    %c0_5 = arith.constant 0 : index
    %c0_6 = arith.constant 0 : index
    %c0_7 = arith.constant 0 : index
    %6 = vector.load %arg4[%c0_4, %c0_5, %c0_6, %c0_7] : memref<1x1x8x32xf32, #tpu.memory_space<vmem>>, vector<1x1x8x32xf32>
    %7 = vector.shape_cast %6 : vector<1x1x8x32xf32> to vector<8x32xf32>
    %8 = vector.shape_cast %7 : vector<8x32xf32> to vector<8x4x8xf32>
    %c0_8 = arith.constant 0 : index
    %c0_9 = arith.constant 0 : index
    %c0_10 = arith.constant 0 : index
    %c0_11 = arith.constant 0 : index
    %9 = vector.load %arg5[%c0_8, %c0_9, %c0_10, %c0_11] : memref<1x1x8x32xf32, #tpu.memory_space<vmem>>, vector<1x1x8x32xf32>
    %10 = vector.shape_cast %9 : vector<1x1x8x32xf32> to vector<8x32xf32>
    %11 = vector.shape_cast %10 : vector<8x32xf32> to vector<8x4x8xf32>
    "tpu.trace_start"() <{level = 10 : i32, message = "qhd,khd->hqk"}> : () -> ()
    %cst = arith.constant dense<0.000000e+00> : vector<4x8x8xf32>
    %12 = tpu.matmul %5, %8, %cst {dimension_numbers = #tpu.dot_dimension_numbers<[2], [2], [0], [0], [0, 1, 0, 0, 1, 0], [1], [1]>} : vector<8x4x8xf32>, vector<8x4x8xf32>, vector<4x8x8xf32> -> vector<4x8x8xf32>
    "tpu.trace_stop"() : () -> ()
    %c0_12 = arith.constant 0 : index
    %c0_13 = arith.constant 0 : index
    %c0_14 = arith.constant 0 : index
    %13 = vector.load %arg9[%c0_12, %c0_13, %c0_14] : memref<4x8x1xf32, #tpu.memory_space<vmem>>, vector<4x8x1xf32>
    %cst_15 = arith.constant dense<0xFF800000> : vector<4x8xf32>
    %14 = vector.multi_reduction <maximumf>, %12, %cst_15 [2] : vector<4x8x8xf32> to vector<4x8xf32>
    %15 = vector.shape_cast %14 : vector<4x8xf32> to vector<4x8x1xf32>
    %16 = arith.maximumf %13, %15 : vector<4x8x1xf32>
    %17 = arith.subf %13, %16 : vector<4x8x1xf32>
    %18 = math.exp %17 : vector<4x8x1xf32>
    %19 = vector.broadcast %16 : vector<4x8x1xf32> to vector<4x8x8xf32>
    %20 = arith.subf %12, %19 : vector<4x8x8xf32>
    %21 = math.exp %20 : vector<4x8x8xf32>
    %c0_16 = arith.constant 0 : index
    %c0_17 = arith.constant 0 : index
    %c0_18 = arith.constant 0 : index
    %22 = vector.load %arg10[%c0_16, %c0_17, %c0_18] : memref<4x8x1xf32, #tpu.memory_space<vmem>>, vector<4x8x1xf32>
    %23 = arith.mulf %18, %22 : vector<4x8x1xf32>
    %cst_19 = arith.constant dense<0.000000e+00> : vector<4x8xf32>
    %24 = vector.multi_reduction <add>, %21, %cst_19 [2] : vector<4x8x8xf32> to vector<4x8xf32>
    %25 = vector.shape_cast %24 : vector<4x8xf32> to vector<4x8x1xf32>
    %26 = arith.addf %23, %25 : vector<4x8x1xf32>
    %c0_20 = arith.constant 0 : index
    %c0_21 = arith.constant 0 : index
    %c0_22 = arith.constant 0 : index
    %27 = vector.load %arg10[%c0_20, %c0_21, %c0_22] : memref<4x8x1xf32, #tpu.memory_space<vmem>>, vector<4x8x1xf32>
    tpu.vector_store %arg10[%c0_20, %c0_21, %c0_22], %26 {strides = array<i32>} : memref<4x8x1xf32, #tpu.memory_space<vmem>>, vector<4x8x1xf32>,
    "tpu.trace_start"() <{level = 10 : i32, message = "hqk,khd->hqd"}> : () -> ()
    %cst_23 = arith.constant dense<0.000000e+00> : vector<4x8x8xf32>
    %28 = tpu.matmul %21, %11, %cst_23 {dimension_numbers = #tpu.dot_dimension_numbers<[2], [0], [1], [2], [0, 0, 0, 1, 1, 2], [0], [1]>} : vector<4x8x8xf32>, vector<8x4x8xf32>, vector<4x8x8xf32> -> vector<4x8x8xf32>
    "tpu.trace_stop"() : () -> ()
    %c0_24 = arith.constant 0 : index
    %c0_25 = arith.constant 0 : index
    %c0_26 = arith.constant 0 : index
    %29 = vector.load %arg11[%c0_24, %c0_25, %c0_26] : memref<4x8x8xf32, #tpu.memory_space<vmem>>, vector<4x8x8xf32>
    %30 = vector.broadcast %18 : vector<4x8x1xf32> to vector<4x8x8xf32>
    %31 = arith.mulf %30, %29 : vector<4x8x8xf32>
    %32 = arith.addf %31, %28 : vector<4x8x8xf32>
    %c0_27 = arith.constant 0 : index
    %c0_28 = arith.constant 0 : index
    %c0_29 = arith.constant 0 : index
    %33 = vector.load %arg11[%c0_27, %c0_28, %c0_29] : memref<4x8x8xf32, #tpu.memory_space<vmem>>, vector<4x8x8xf32>
    tpu.vector_store %arg11[%c0_27, %c0_28, %c0_29], %32 {strides = array<i32>} : memref<4x8x8xf32, #tpu.memory_space<vmem>>, vector<4x8x8xf32>,
    %c0_30 = arith.constant 0 : index
    %c0_31 = arith.constant 0 : index
    %c0_32 = arith.constant 0 : index
    %34 = vector.load %arg9[%c0_30, %c0_31, %c0_32] : memref<4x8x1xf32, #tpu.memory_space<vmem>>, vector<4x8x1xf32>
    tpu.vector_store %arg9[%c0_30, %c0_31, %c0_32], %16 {strides = array<i32>} : memref<4x8x1xf32, #tpu.memory_space<vmem>>, vector<4x8x1xf32>,
    %c0_i32_33 = arith.constant 0 : i32
    %35 = arith.cmpi eq, %arg2, %c0_i32_33 : i32
    %36 = arith.extui %35 : i1 to i32
    %c0_i32_34 = arith.constant 0 : i32
    %37 = arith.cmpi ne, %36, %c0_i32_34 : i32
    scf.if %37 {
      %c0_35 = arith.constant 0 : index
      %c0_36 = arith.constant 0 : index
      %c0_37 = arith.constant 0 : index
      %38 = vector.load %arg10[%c0_35, %c0_36, %c0_37] : memref<4x8x1xf32, #tpu.memory_space<vmem>>, vector<4x8x1xf32>
      %39 = tpu.reciprocal %38 : vector<4x8x1xf32> -> vector<4x8x1xf32>
      %c0_38 = arith.constant 0 : index
      %c0_39 = arith.constant 0 : index
      %c0_40 = arith.constant 0 : index
      %40 = vector.load %arg11[%c0_38, %c0_39, %c0_40] : memref<4x8x8xf32, #tpu.memory_space<vmem>>, vector<4x8x8xf32>
      %41 = vector.broadcast %39 : vector<4x8x1xf32> to vector<4x8x8xf32>
      %42 = arith.mulf %40, %41 : vector<4x8x8xf32>
      %cst_41 = arith.constant 0.000000e+00 : f32
      %43 = vector.broadcast %cst_41 : f32 to vector<8x32xf32>
      %44 = vector.extract_strided_slice %42 {offsets = [0, 0, 0], sizes = [1, 8, 8], strides = [1, 1, 1]} : vector<4x8x8xf32> to vector<1x8x8xf32>
      %45 = vector.shape_cast %44 : vector<1x8x8xf32> to vector<8x8xf32>
      %c0_42 = arith.constant 0 : index
      %c0_43 = arith.constant 0 : index
      %c0_44 = arith.constant 0 : index
      %46 = vector.load %arg6[%c0_42, %c0_43, %c0_44] : memref<4x8x32xf32, #tpu.memory_space<vmem>>, vector<1x8x32xf32>
      %47 = vector.shape_cast %46 : vector<1x8x32xf32> to vector<8x32xf32>
      %cst_45 = arith.constant dense<0.000000e+00> : vector<8x32xf32>
      %48 = tpu.matmul %45, %47, %cst_45 {dimension_numbers = #tpu.dot_dimension_numbers<[1], [0], [0], [1], [0, 0, 1, 1], [], []>} : vector<8x8xf32>, vector<8x32xf32>, vector<8x32xf32> -> vector<8x32xf32>
      %49 = arith.addf %43, %48 : vector<8x32xf32>
      %50 = vector.extract_strided_slice %42 {offsets = [1, 0, 0], sizes = [1, 8, 8], strides = [1, 1, 1]} : vector<4x8x8xf32> to vector<1x8x8xf32>
      %51 = vector.shape_cast %50 : vector<1x8x8xf32> to vector<8x8xf32>
      %c1 = arith.constant 1 : index
      %c0_46 = arith.constant 0 : index
      %c0_47 = arith.constant 0 : index
      %52 = vector.load %arg6[%c1, %c0_46, %c0_47] : memref<4x8x32xf32, #tpu.memory_space<vmem>>, vector<1x8x32xf32>
      %53 = vector.shape_cast %52 : vector<1x8x32xf32> to vector<8x32xf32>
      %cst_48 = arith.constant dense<0.000000e+00> : vector<8x32xf32>
      %54 = tpu.matmul %51, %53, %cst_48 {dimension_numbers = #tpu.dot_dimension_numbers<[1], [0], [0], [1], [0, 0, 1, 1], [], []>} : vector<8x8xf32>, vector<8x32xf32>, vector<8x32xf32> -> vector<8x32xf32>
      %55 = arith.addf %49, %54 : vector<8x32xf32>
      %56 = vector.extract_strided_slice %42 {offsets = [2, 0, 0], sizes = [1, 8, 8], strides = [1, 1, 1]} : vector<4x8x8xf32> to vector<1x8x8xf32>
      %57 = vector.shape_cast %56 : vector<1x8x8xf32> to vector<8x8xf32>
      %c2 = arith.constant 2 : index
      %c0_49 = arith.constant 0 : index
      %c0_50 = arith.constant 0 : index
      %58 = vector.load %arg6[%c2, %c0_49, %c0_50] : memref<4x8x32xf32, #tpu.memory_space<vmem>>, vector<1x8x32xf32>
      %59 = vector.shape_cast %58 : vector<1x8x32xf32> to vector<8x32xf32>
      %cst_51 = arith.constant dense<0.000000e+00> : vector<8x32xf32>
      %60 = tpu.matmul %57, %59, %cst_51 {dimension_numbers = #tpu.dot_dimension_numbers<[1], [0], [0], [1], [0, 0, 1, 1], [], []>} : vector<8x8xf32>, vector<8x32xf32>, vector<8x32xf32> -> vector<8x32xf32>
      %61 = arith.addf %55, %60 : vector<8x32xf32>
      %62 = vector.extract_strided_slice %42 {offsets = [3, 0, 0], sizes = [1, 8, 8], strides = [1, 1, 1]} : vector<4x8x8xf32> to vector<1x8x8xf32>
      %63 = vector.shape_cast %62 : vector<1x8x8xf32> to vector<8x8xf32>
      %c3 = arith.constant 3 : index
      %c0_52 = arith.constant 0 : index
      %c0_53 = arith.constant 0 : index
      %64 = vector.load %arg6[%c3, %c0_52, %c0_53] : memref<4x8x32xf32, #tpu.memory_space<vmem>>, vector<1x8x32xf32>
      %65 = vector.shape_cast %64 : vector<1x8x32xf32> to vector<8x32xf32>
      %cst_54 = arith.constant dense<0.000000e+00> : vector<8x32xf32>
      %66 = tpu.matmul %63, %65, %cst_54 {dimension_numbers = #tpu.dot_dimension_numbers<[1], [0], [0], [1], [0, 0, 1, 1], [], []>} : vector<8x8xf32>, vector<8x32xf32>, vector<8x32xf32> -> vector<8x32xf32>
      %67 = arith.addf %61, %66 : vector<8x32xf32>
      %c0_55 = arith.constant 0 : index
      %c0_56 = arith.constant 0 : index
      %68 = vector.load %arg7[%c0_55, %c0_56] : memref<1x32xf32, #tpu.memory_space<vmem>>, vector<1x32xf32>
      %69 = vector.broadcast %68 : vector<1x32xf32> to vector<8x32xf32>
      %70 = arith.addf %67, %69 : vector<8x32xf32>
      %c0_57 = arith.constant 0 : index
      %c0_58 = arith.constant 0 : index
      %c0_59 = arith.constant 0 : index
      %71 = vector.load %arg8[%c0_57, %c0_58, %c0_59] : memref<1x8x32xf32, #tpu.memory_space<vmem>>, vector<1x8x32xf32>
      %72 = vector.shape_cast %71 : vector<1x8x32xf32> to vector<8x32xf32>
      %73 = vector.shape_cast %70 : vector<8x32xf32> to vector<1x8x32xf32>
      tpu.vector_store %arg8[%c0_57, %c0_58, %c0_59], %73 {strides = array<i32>} : memref<1x8x32xf32, #tpu.memory_space<vmem>>, vector<1x8x32xf32>,
    } else {
    }
    return
  }
  func.func @transform_0(%arg0: i32, %arg1: i32, %arg2: i32) -> (i32, i32, i32, i32) {
    %c0_i32 = arith.constant 0 : i32
    %c0_i32_0 = arith.constant 0 : i32
    %c0_i32_1 = arith.constant 0 : i32
    return %c0_i32, %arg0, %arg1, %c0_i32_0 : i32, i32, i32, i32
  }
  func.func @transform_1(%arg0: i32, %arg1: i32, %arg2: i32) -> (i32, i32, i32, i32) {
    %c1_i32 = arith.constant 1 : i32
    %c0_i32 = arith.constant 0 : i32
    %c0_i32_0 = arith.constant 0 : i32
    return %c1_i32, %arg0, %arg2, %c0_i32 : i32, i32, i32, i32
  }
  func.func @transform_2(%arg0: i32, %arg1: i32, %arg2: i32) -> (i32, i32, i32, i32) {
    %c2_i32 = arith.constant 2 : i32
    %c0_i32 = arith.constant 0 : i32
    %c0_i32_0 = arith.constant 0 : i32
    return %c2_i32, %arg0, %arg2, %c0_i32 : i32, i32, i32, i32
  }
  func.func @transform_3(%arg0: i32, %arg1: i32, %arg2: i32) -> (i32, i32, i32) {
    %c0_i32 = arith.constant 0 : i32
    %c0_i32_0 = arith.constant 0 : i32
    %c0_i32_1 = arith.constant 0 : i32
    %c0_i32_2 = arith.constant 0 : i32
    return %c0_i32, %c0_i32_0, %c0_i32_1 : i32, i32, i32
  }
  func.func @transform_4(%arg0: i32, %arg1: i32, %arg2: i32) -> (i32, i32) {
    %c0_i32 = arith.constant 0 : i32
    %c0_i32_0 = arith.constant 0 : i32
    %c0_i32_1 = arith.constant 0 : i32
    return %c0_i32, %c0_i32_0 : i32, i32
  }
  func.func @transform_5(%arg0: i32, %arg1: i32, %arg2: i32) -> (i32, i32, i32) {
    %c0_i32 = arith.constant 0 : i32
    %c0_i32_0 = arith.constant 0 : i32
    return %arg0, %arg1, %c0_i32 : i32, i32, i32
  }
}

</mosaic_0001>

<llo_original>
// kernel: multi_head_attention.2
$region0: #{multi_head_attention.2}
  #allocation0 [shape = 'u32[]', space=smem, size = 0x4, offset = 0x4, fixed_abs, tag = 'smem constant byte address 0x4 - core index']
  #allocation1 [shape = 'u32[144,128]{1,0:T(1,128)}', space=vmem, size = 0x12000, scoped, tag = 'internal scratch']
  %s0 = inlined_call_operand.vmem [shape: f32[16,32], index: 0, kind: input, shape index: {}]
  %s1 = inlined_call_operand.vmem [shape: f32[16,32], index: 1, kind: input, shape index: {}]
  %s2 = inlined_call_operand.vmem [shape: f32[16,32], index: 2, kind: input, shape index: {}]
  %s3 = inlined_call_operand.vmem [shape: f32[3,32,32], index: 3, kind: input, shape index: {}]
  %s4 = inlined_call_operand.vmem [shape: f32[3,1,32], index: 4, kind: input, shape index: {}]
  %s5 = inlined_call_operand.vmem [shape: f32[3,16,32], index: 5, kind: output, shape index: {}]
  %s6 = sld [smem:[#allocation0]]
  $region30: #{multi_head_attention.2} parent=0
    _
  %s8 = ssub.s32 1, %s6
  %s9 = scalar_select 0, %s8, %s6
  // Predicated region
  $region2: #{multi_head_attention.2} parent=0 // pred_check
    _
  $region3: #{multi_head_attention.2} parent=0 // pred_check_branch
    %11 = sbr.rel (0) target = $region5
  $region4: #{multi_head_attention.2} parent=0 // pred_region
    _
  $region5: #{multi_head_attention.2} parent=0 // pred_fallthru
    _
  // Predicated region
  $region6: #{multi_head_attention.2} parent=0 // pred_check
    _
  $region7: #{multi_head_attention.2} parent=0 // pred_check_branch
    %13 = sbr.rel (0) target = $region9
  $region8: #{multi_head_attention.2} parent=0 // pred_region
    _
  $region9: #{multi_head_attention.2} parent=0 // pred_fallthru
    _
  // Predicated region
  $region10: #{multi_head_attention.2} parent=0 // pred_check
    _
  $region11: #{multi_head_attention.2} parent=0 // pred_check_branch
    %15 = sbr.rel (0) target = $region13
  $region12: #{multi_head_attention.2} parent=0 // pred_region
    _
  $region13: #{multi_head_attention.2} parent=0 // pred_fallthru
    _
  // Predicated region
  $region14: #{multi_head_attention.2} parent=0 // pred_check
    _
  $region15: #{multi_head_attention.2} parent=0 // pred_check_branch
    %17 = sbr.rel (0) target = $region17
  $region16: #{multi_head_attention.2} parent=0 // pred_region
    _
  $region17: #{multi_head_attention.2} parent=0 // pred_fallthru
    _
  // Predicated region
  $region18: #{multi_head_attention.2} parent=0 // pred_check
    _
  $region19: #{multi_head_attention.2} parent=0 // pred_check_branch
    %19 = sbr.rel (0) target = $region21
  $region20: #{multi_head_attention.2} parent=0 // pred_region
    _
  $region21: #{multi_head_attention.2} parent=0 // pred_fallthru
    _
  %v20 = vld [vmem:[%s0] sm:$0xff]
  %v21 = vld [vmem:[%s0 + $0x8] sm:$0xff]
  %v22 = vld [vmem:[%s3] sm:$0xff]
  %v23 = vld [vmem:[%s3 + $0x8] sm:$0xff]
  %v24 = vld [vmem:[%s3 + $0x10] sm:$0xff]
  %v25 = vld [vmem:[%s3 + $0x18] sm:$0xff]
  %v26 = vld [vmem:[%s4] sm:$0x1]
  %v28 = vlaneseq
  %v29 = vshrl.u32 %v28, 7
  %v30 = vsub.s32 0, %v29
  %v31 = vrot.slane %v26, %v30
  %vm33 = vcmask 261120
  %v35 = vsel %vm33, %v20, 0
  %v38 = vsel %vm33, %v21, 0
  %40 = vmatprep.subr.mxu0 0.0
  %41 = vmatpush1.msra.mxu0 0.0
  %42 = vmatprep.subr.mxu0 0.0
  %43 = vmatpush1.msra.mxu0 0.0
  %44 = vmatprep.subr.mxu0 0.0
  %45 = vmatpush1.msra.mxu0 0.0
  %46 = vmatprep.subr.mxu0 0.0
  %47 = vmatpush1.msra.mxu0 0.0
  %48 = vmatprep.subr.mxu0 0.0
  %49 = vmatpush1.msra.mxu0 0.0
  %50 = vmatprep.subr.mxu0 0.0
  %51 = vmatpush1.msra.mxu0 0.0
  %52 = vmatprep.subr.mxu0 0.0
  %53 = vmatpush1.msra.mxu0 0.0
  %54 = vmatprep.subr.mxu0 0.0
  %55 = vmatpush1.msra.mxu0 0.0
  %56 = vmatprep.subr.mxu0 0.0
  %57 = vmatpush1.msra.mxu0 0.0
  %58 = vmatprep.subr.mxu0 0.0
  %59 = vmatpush1.msra.mxu0 0.0
  %60 = vmatprep.subr.mxu0 0.0
  %61 = vmatpush1.msra.mxu0 0.0
  %62 = vmatprep.subr.mxu0 0.0
  %63 = vmatpush1.msra.mxu0 0.0
  %64 = vmatprep.subr.mxu0 0.0
  %65 = vmatpush1.msra.mxu0 %v25
  %66 = vmatprep.subr.mxu0 0.0
  %67 = vmatpush1.msra.mxu0 %v24
  %68 = vmatprep.subr.mxu0 0.0
  %69 = vmatpush1.msra.mxu0 %v23
  %70 = vmatprep.subr.mxu0 0.0
  %71 = vmatpush1.msra.mxu0 %v22
  %72 = vmatprep.subr.mxu0 0.0
  %73 = vmatpush2.msra.mxu0 0.0
  %74 = vmatprep.subr.mxu0 0.0
  %75 = vmatpush2.msra.mxu0 0.0
  %76 = vmatprep.subr.mxu0 0.0
  %77 = vmatpush2.msra.mxu0 0.0
  %78 = vmatprep.subr.mxu0 0.0
  %79 = vmatpush2.msra.mxu0 0.0
  %80 = vmatprep.subr.mxu0 0.0
  %81 = vmatpush2.msra.mxu0 0.0
  %82 = vmatprep.subr.mxu0 0.0
  %83 = vmatpush2.msra.mxu0 0.0
  %84 = vmatprep.subr.mxu0 0.0
  %85 = vmatpush2.msra.mxu0 0.0
  %86 = vmatprep.subr.mxu0 0.0
  %87 = vmatpush2.msra.mxu0 0.0
  %88 = vmatprep.subr.mxu0 0.0
  %89 = vmatpush2.msra.mxu0 0.0
  %90 = vmatprep.subr.mxu0 0.0
  %91 = vmatpush2.msra.mxu0 0.0
  %92 = vmatprep.subr.mxu0 0.0
  %93 = vmatpush2.msra.mxu0 0.0
  %94 = vmatprep.subr.mxu0 0.0
  %95 = vmatpush2.msra.mxu0 0.0
  %96 = vmatprep.subr.mxu0 0.0
  %97 = vmatpush2.msra.mxu0 0.0
  %98 = vmatprep.subr.mxu0 0.0
  %99 = vmatpush2.msra.mxu0 0.0
  %100 = vmatprep.subr.mxu0 0.0
  %101 = vmatpush2.msra.mxu0 0.0
  %102 = vmatprep.subr.mxu0 0.0
  %103 = vmatpush2.msra.mxu0 0.0
  %104 = vmatprep.mubr.f32.mxu0 0.0
  %105 = vmatmul.mubr.f32.gmra.mxu0 %v35
  %v106 = vpop.f32.mrf.mxu0
  %v107 = vadd.f32 %v31, %v106
  %v108 = vpop.f32.mrf.mxu0
  %109 = vmatprep.mubr.f32.mxu0 0.0
  %110 = vmatmul.mubr.f32.gmra.mxu0 %v38
  %v111 = vpop.f32.mrf.mxu0
  %v112 = vadd.f32 %v31, %v111
  %v113 = vpop.f32.mrf.mxu0
  %114 = vdwg.mxu0
  %115 = vst.msk [vmem:[%s5] sm:$0xff] %vm33, %v107
  %116 = vst.msk [vmem:[%s5 + $0x8] sm:$0xff] %vm33, %v112
  %v117 = vld [vmem:[%s1] sm:$0xff]
  %v118 = vld [vmem:[%s1 + $0x8] sm:$0xff]
  %s119 = scalar_lea.vmem %s3, 32
  %v120 = vld [vmem:[%s119] sm:$0xff]
  %v121 = vld [vmem:[%s119 + $0x8] sm:$0xff]
  %v122 = vld [vmem:[%s119 + $0x10] sm:$0xff]
  %v123 = vld [vmem:[%s119 + $0x18] sm:$0xff]
  %s124 = scalar_lea.vmem %s4, 1
  %v125 = vld [vmem:[%s124] sm:$0x1]
  %v127 = vlaneseq
  %v128 = vshrl.u32 %v127, 7
  %v129 = vsub.s32 0, %v128
  %v130 = vrot.slane %v125, %v129
  %v133 = vsel %vm33, %v117, 0
  %v136 = vsel %vm33, %v118, 0
  %138 = vmatprep.subr.mxu0 0.0
  %139 = vmatpush1.msra.mxu0 0.0
  %140 = vmatprep.subr.mxu0 0.0
  %141 = vmatpush1.msra.mxu0 0.0
  %142 = vmatprep.subr.mxu0 0.0
  %143 = vmatpush1.msra.mxu0 0.0
  %144 = vmatprep.subr.mxu0 0.0
  %145 = vmatpush1.msra.mxu0 0.0
  %146 = vmatprep.subr.mxu0 0.0
  %147 = vmatpush1.msra.mxu0 0.0
  %148 = vmatprep.subr.mxu0 0.0
  %149 = vmatpush1.msra.mxu0 0.0
  %150 = vmatprep.subr.mxu0 0.0
  %151 = vmatpush1.msra.mxu0 0.0
  %152 = vmatprep.subr.mxu0 0.0
  %153 = vmatpush1.msra.mxu0 0.0
  %154 = vmatprep.subr.mxu0 0.0
  %155 = vmatpush1.msra.mxu0 0.0
  %156 = vmatprep.subr.mxu0 0.0
  %157 = vmatpush1.msra.mxu0 0.0
  %158 = vmatprep.subr.mxu0 0.0
  %159 = vmatpush1.msra.mxu0 0.0
  %160 = vmatprep.subr.mxu0 0.0
  %161 = vmatpush1.msra.mxu0 0.0
  %162 = vmatprep.subr.mxu0 0.0
  %163 = vmatpush1.msra.mxu0 %v123
  %164 = vmatprep.subr.mxu0 0.0
  %165 = vmatpush1.msra.mxu0 %v122
  %166 = vmatprep.subr.mxu0 0.0
  %167 = vmatpush1.msra.mxu0 %v121
  %168 = vmatprep.subr.mxu0 0.0
  %169 = vmatpush1.msra.mxu0 %v120
  %170 = vmatprep.subr.mxu0 0.0
  %171 = vmatpush2.msra.mxu0 0.0
  %172 = vmatprep.subr.mxu0 0.0
  %173 = vmatpush2.msra.mxu0 0.0
  %174 = vmatprep.subr.mxu0 0.0
  %175 = vmatpush2.msra.mxu0 0.0
  %176 = vmatprep.subr.mxu0 0.0
  %177 = vmatpush2.msra.mxu0 0.0
  %178 = vmatprep.subr.mxu0 0.0
  %179 = vmatpush2.msra.mxu0 0.0
  %180 = vmatprep.subr.mxu0 0.0
  %181 = vmatpush2.msra.mxu0 0.0
  %182 = vmatprep.subr.mxu0 0.0
  %183 = vmatpush2.msra.mxu0 0.0
  %184 = vmatprep.subr.mxu0 0.0
  %185 = vmatpush2.msra.mxu0 0.0
  %186 = vmatprep.subr.mxu0 0.0
  %187 = vmatpush2.msra.mxu0 0.0
  %188 = vmatprep.subr.mxu0 0.0
  %189 = vmatpush2.msra.mxu0 0.0
  %190 = vmatprep.subr.mxu0 0.0
  %191 = vmatpush2.msra.mxu0 0.0
  %192 = vmatprep.subr.mxu0 0.0
  %193 = vmatpush2.msra.mxu0 0.0
  %194 = vmatprep.subr.mxu0 0.0
  %195 = vmatpush2.msra.mxu0 0.0
  %196 = vmatprep.subr.mxu0 0.0
  %197 = vmatpush2.msra.mxu0 0.0
  %198 = vmatprep.subr.mxu0 0.0
  %199 = vmatpush2.msra.mxu0 0.0
  %200 = vmatprep.subr.mxu0 0.0
  %201 = vmatpush2.msra.mxu0 0.0
  %202 = vmatprep.mubr.f32.mxu0 0.0
  %203 = vmatmul.mubr.f32.gmra.mxu0 %v133
  %v204 = vpop.f32.mrf.mxu0
  %v205 = vadd.f32 %v130, %v204
  %v206 = vpop.f32.mrf.mxu0
  %207 = vmatprep.mubr.f32.mxu0 0.0
  %208 = vmatmul.mubr.f32.gmra.mxu0 %v136
  %v209 = vpop.f32.mrf.mxu0
  %v210 = vadd.f32 %v130, %v209
  %v211 = vpop.f32.mrf.mxu0
  %212 = vdwg.mxu0
  %s213 = scalar_lea.vmem %s5, 16
  %214 = vst.msk [vmem:[%s213] sm:$0xff] %vm33, %v205
  %215 = vst.msk [vmem:[%s213 + $0x8] sm:$0xff] %vm33, %v210
  %v216 = vld [vmem:[%s2] sm:$0xff]
  %v217 = vld [vmem:[%s2 + $0x8] sm:$0xff]
  %s218 = scalar_lea.vmem %s3, 64
  %v219 = vld [vmem:[%s218] sm:$0xff]
  %v220 = vld [vmem:[%s218 + $0x8] sm:$0xff]
  %v221 = vld [vmem:[%s218 + $0x10] sm:$0xff]
  %v222 = vld [vmem:[%s218 + $0x18] sm:$0xff]
  %s223 = scalar_lea.vmem %s4, 2
  %v224 = vld [vmem:[%s223] sm:$0x1]
  %v226 = vlaneseq
  %v227 = vshrl.u32 %v226, 7
  %v228 = vsub.s32 0, %v227
  %v229 = vrot.slane %v224, %v228
  %v232 = vsel %vm33, %v216, 0
  %v235 = vsel %vm33, %v217, 0
  %237 = vmatprep.subr.mxu0 0.0
  %238 = vmatpush1.msra.mxu0 0.0
  %239 = vmatprep.subr.mxu0 0.0
  %240 = vmatpush1.msra.mxu0 0.0
  %241 = vmatprep.subr.mxu0 0.0
  %242 = vmatpush1.msra.mxu0 0.0
  %243 = vmatprep.subr.mxu0 0.0
  %244 = vmatpush1.msra.mxu0 0.0
  %245 = vmatprep.subr.mxu0 0.0
  %246 = vmatpush1.msra.mxu0 0.0
  %247 = vmatprep.subr.mxu0 0.0
  %248 = vmatpush1.msra.mxu0 0.0
  %249 = vmatprep.subr.mxu0 0.0
  %250 = vmatpush1.msra.mxu0 0.0
  %251 = vmatprep.subr.mxu0 0.0
  %252 = vmatpush1.msra.mxu0 0.0
  %253 = vmatprep.subr.mxu0 0.0
  %254 = vmatpush1.msra.mxu0 0.0
  %255 = vmatprep.subr.mxu0 0.0
  %256 = vmatpush1.msra.mxu0 0.0
  %257 = vmatprep.subr.mxu0 0.0
  %258 = vmatpush1.msra.mxu0 0.0
  %259 = vmatprep.subr.mxu0 0.0
  %260 = vmatpush1.msra.mxu0 0.0
  %261 = vmatprep.subr.mxu0 0.0
  %262 = vmatpush1.msra.mxu0 %v222
  %263 = vmatprep.subr.mxu0 0.0
  %264 = vmatpush1.msra.mxu0 %v221
  %265 = vmatprep.subr.mxu0 0.0
  %266 = vmatpush1.msra.mxu0 %v220
  %267 = vmatprep.subr.mxu0 0.0
  %268 = vmatpush1.msra.mxu0 %v219
  %269 = vmatprep.subr.mxu0 0.0
  %270 = vmatpush2.msra.mxu0 0.0
  %271 = vmatprep.subr.mxu0 0.0
  %272 = vmatpush2.msra.mxu0 0.0
  %273 = vmatprep.subr.mxu0 0.0
  %274 = vmatpush2.msra.mxu0 0.0
  %275 = vmatprep.subr.mxu0 0.0
  %276 = vmatpush2.msra.mxu0 0.0
  %277 = vmatprep.subr.mxu0 0.0
  %278 = vmatpush2.msra.mxu0 0.0
  %279 = vmatprep.subr.mxu0 0.0
  %280 = vmatpush2.msra.mxu0 0.0
  %281 = vmatprep.subr.mxu0 0.0
  %282 = vmatpush2.msra.mxu0 0.0
  %283 = vmatprep.subr.mxu0 0.0
  %284 = vmatpush2.msra.mxu0 0.0
  %285 = vmatprep.subr.mxu0 0.0
  %286 = vmatpush2.msra.mxu0 0.0
  %287 = vmatprep.subr.mxu0 0.0
  %288 = vmatpush2.msra.mxu0 0.0
  %289 = vmatprep.subr.mxu0 0.0
  %290 = vmatpush2.msra.mxu0 0.0
  %291 = vmatprep.subr.mxu0 0.0
  %292 = vmatpush2.msra.mxu0 0.0
  %293 = vmatprep.subr.mxu0 0.0
  %294 = vmatpush2.msra.mxu0 0.0
  %295 = vmatprep.subr.mxu0 0.0
  %296 = vmatpush2.msra.mxu0 0.0
  %297 = vmatprep.subr.mxu0 0.0
  %298 = vmatpush2.msra.mxu0 0.0
  %299 = vmatprep.subr.mxu0 0.0
  %300 = vmatpush2.msra.mxu0 0.0
  %301 = vmatprep.mubr.f32.mxu0 0.0
  %302 = vmatmul.mubr.f32.gmra.mxu0 %v232
  %v303 = vpop.f32.mrf.mxu0
  %v304 = vadd.f32 %v229, %v303
  %v305 = vpop.f32.mrf.mxu0
  %306 = vmatprep.mubr.f32.mxu0 0.0
  %307 = vmatmul.mubr.f32.gmra.mxu0 %v235
  %v308 = vpop.f32.mrf.mxu0
  %v309 = vadd.f32 %v229, %v308
  %v310 = vpop.f32.mrf.mxu0
  %311 = vdwg.mxu0
  %s312 = scalar_lea.vmem %s5, 32
  %313 = vst.msk [vmem:[%s312] sm:$0xff] %vm33, %v304
  %314 = vst.msk [vmem:[%s312 + $0x8] sm:$0xff] %vm33, %v309
  // Predicated region
  $region22: #{multi_head_attention.2} parent=0 // pred_check
    _
  $region23: #{multi_head_attention.2} parent=0 // pred_check_branch
    %316 = sbr.rel (0) target = $region25
  $region24: #{multi_head_attention.2} parent=0 // pred_region
    _
  $region25: #{multi_head_attention.2} parent=0 // pred_fallthru
    _
  // Predicated region
  $region26: #{multi_head_attention.2} parent=0 // pred_check
    _
  $region27: #{multi_head_attention.2} parent=0 // pred_check_branch
    %318 = sbr.rel (0) target = $region29
  $region28: #{multi_head_attention.2} parent=0 // pred_region
    _
  $region29: #{multi_head_attention.2} parent=0 // pred_fallthru
    _

// kernel: multi_head_attention.3
$region0: #{multi_head_attention.3}
  #allocation0 [shape = 'u32[]', space=smem, size = 0x4, offset = 0x4, fixed_abs, tag = 'smem constant byte address 0x4 - core index']
  #allocation1 [shape = 'u32[144,128]{1,0:T(1,128)}', space=vmem, size = 0x12000, scoped, tag = 'internal scratch']
  #allocation2 [shape = 'f32[4,8,1]{2,1,0:T(8,128)}', space=vmem, size = 0x4000, scoped, tag = 'scratch operand']
  #allocation3 [shape = 'f32[4,8,1]{2,1,0:T(8,128)}', space=vmem, size = 0x4000, scoped, tag = 'scratch operand']
  #allocation4 [shape = 'f32[4,8,8]{2,1,0:T(8,128)}', space=vmem, size = 0x4000, scoped, tag = 'scratch operand']
  %s0 = inlined_call_operand.vmem [shape: f32[3,2,8,32], index: 0, kind: input, shape index: {}, may-alias: {0,1,2}]
  %s1 = inlined_call_operand.vmem [shape: f32[3,2,8,32], index: 1, kind: input, shape index: {}, may-alias: {0,1,2}]
  %s2 = inlined_call_operand.vmem [shape: f32[3,2,8,32], index: 2, kind: input, shape index: {}, may-alias: {0,1,2}]
  %s3 = inlined_call_operand.vmem [shape: f32[4,8,32], index: 3, kind: input, shape index: {}]
  %s4 = inlined_call_operand.vmem [shape: f32[1,32], index: 4, kind: input, shape index: {}]
  %s5 = inlined_call_operand.hbm [shape: f32[2,8,32], index: 5, kind: output, shape index: {}]
  %s6 = sld [smem:[#allocation0]]
  $region61: #{multi_head_attention.3} parent=0
    _
  %s8 = ssub.s32 1, %s6
  %s9 = scalar_select 0, %s8, %s6
  $region1: #{multi_head_attention.3} parent=0
    #allocation5 [shape = 'u8[8192]{0}', space=vmem, size = 0x2000, scoped, tag = 'output window, operand 0']
    #allocation6 [shape = 's32[2]{0}', space=sflag, size = 0x8, scoped, tag = 'scoped memory for multi_head_attention.3']
    %10 = vsyncpa [#allocation6], 0
    %s11 = scalar_lea.sflag [#allocation6], 1
    %12 = vsyncpa %s11, 0
    loop: start=0, step=1, limit=4
    $region2: #{multi_head_attention.3} parent=1 // loop_pre_header
      _
    $region3: #{multi_head_attention.3} parent=1 // loop_header
      %s14 = sphi 0, %s18
      %p15 = scmp.ge.s32.totalorder %s14, 4
      %s21 = sphi 0, %s40
      %s22 = sphi 0, %s36
      %s23 = sphi 0, %s32
      %s24 = sphi 0, %s21
      %s25 = sphi 0, %s22
      %s26 = sphi 0, %s23
      %s27 = sphi 0, %s24
      %s28 = sphi 0, %s25
      %s29 = sphi 0, %s26
      %s45 = sphi 0, %s47
      %s48 = sphi 0, %s45
      %s49 = sphi 0, %s48
      %s65 = sphi 0, %s49
      %s73 = sphi 0, %s75
      %s76 = sphi 0, %s73
      %s77 = sphi 0, %s76
      %s93 = sphi 0, %s77
      %s101 = sphi 0, %s103
      %s104 = sphi 0, %s101
      %s105 = sphi 0, %s104
      %s121 = sphi 0, %s105
      %s125 = sphi 0, %s125
      %s127 = sphi 0, %s125
      %s128 = sphi 0, %s127
      %s142 = sphi 0, %s128
      %s146 = sphi 0, %s146
      %s148 = sphi 0, %s146
      %s149 = sphi 0, %s148
      %s163 = sphi 0, %s149
      %s171 = sphi 0, %s173
      %s174 = sphi 0, %s171
      %s175 = sphi 0, %s174
      %s191 = sphi 0, %s175
    $region4: #{multi_head_attention.3} parent=1 // loop_header_branch
      %17 = sbr.rel (%p15) target = $region8
    $region5: #{multi_head_attention.3} parent=1 // loop_body
      %s19 = ssub.s32 %s14, 1
      %s20 = ssub.s32 %s14, 2
      %s30 = sadd.s32 1, %s23
      %p31 = scmp.ge.s32.totalorder %s30, 1
      %s32 = scalar_select %p31, 0, %s30
      %s33 = sadd.s32 1, %s22
      %s34 = scalar_select %p31, %s33, %s22
      %p35 = scmp.ge.s32.totalorder %s34, 1
      %s36 = scalar_select %p35, 0, %s34
      %s37 = sadd.s32 1, %s21
      %s38 = scalar_select %p35, %s37, %s21
      %p39 = scmp.ge.s32.totalorder %s38, 2
      %s40 = scalar_select %p39, 0, %s38
      %s41 = ssub.s32 %s21, %s40
      %s42 = ssub.s32 %s22, %s36
      %s43 = sor.u32 %s41, %s42
      %p44 = scmp.eq.s32.totalorder %s43, 0
      %s46 = sadd.s32 %s45, 1
      %s47 = scalar_select %p44, %s45, %s46
      %p50 = pneg %p44
      %p51 = scmp.eq.s32.totalorder %s14, 1
      %p52 = por %p50, %p51
      %p53 = scmp.ne.s32.totalorder %s45, %s48
      %p54 = scmp.eq.s32.totalorder %s14, 0
      %p55 = por %p53, %p54
      %p56 = scmp.ne.s32.totalorder %s45, %s48
      %p57 = scmp.eq.s32.totalorder %s19, 1
      %p58 = por %p56, %p57
      %p59 = scmp.ne.s32.totalorder %s48, %s49
      %p60 = scmp.eq.s32.totalorder %s19, 0
      %p61 = por %p59, %p60
      %p62 = scmp.ne.s32.totalorder %s48, %s49
      %p63 = scmp.eq.s32.totalorder %s20, 1
      %p64 = por %p62, %p63
      %p66 = scmp.ne.s32.totalorder %s49, %s65
      %p67 = scmp.eq.s32.totalorder %s20, 0
      %p68 = por %p66, %p67
      %s69 = ssub.s32 %s21, %s40
      %s70 = ssub.s32 %s23, %s32
      %s71 = sor.u32 %s69, %s70
      %p72 = scmp.eq.s32.totalorder %s71, 0
      %s74 = sadd.s32 %s73, 1
      %s75 = scalar_select %p72, %s73, %s74
      %p78 = pneg %p72
      %p79 = scmp.eq.s32.totalorder %s14, 1
      %p80 = por %p78, %p79
      %p81 = scmp.ne.s32.totalorder %s73, %s76
      %p82 = scmp.eq.s32.totalorder %s14, 0
      %p83 = por %p81, %p82
      %p84 = scmp.ne.s32.totalorder %s73, %s76
      %p85 = scmp.eq.s32.totalorder %s19, 1
      %p86 = por %p84, %p85
      %p87 = scmp.ne.s32.totalorder %s76, %s77
      %p88 = scmp.eq.s32.totalorder %s19, 0
      %p89 = por %p87, %p88
      %p90 = scmp.ne.s32.totalorder %s76, %s77
      %p91 = scmp.eq.s32.totalorder %s20, 1
      %p92 = por %p90, %p91
      %p94 = scmp.ne.s32.totalorder %s77, %s93
      %p95 = scmp.eq.s32.totalorder %s20, 0
      %p96 = por %p94, %p95
      %s97 = ssub.s32 %s21, %s40
      %s98 = ssub.s32 %s23, %s32
      %s99 = sor.u32 %s97, %s98
      %p100 = scmp.eq.s32.totalorder %s99, 0
      %s102 = sadd.s32 %s101, 1
      %s103 = scalar_select %p100, %s101, %s102
      %p106 = pneg %p100
      %p107 = scmp.eq.s32.totalorder %s14, 1
      %p108 = por %p106, %p107
      %p109 = scmp.ne.s32.totalorder %s101, %s104
      %p110 = scmp.eq.s32.totalorder %s14, 0
      %p111 = por %p109, %p110
      %p112 = scmp.ne.s32.totalorder %s101, %s104
      %p113 = scmp.eq.s32.totalorder %s19, 1
      %p114 = por %p112, %p113
      %p115 = scmp.ne.s32.totalorder %s104, %s105
      %p116 = scmp.eq.s32.totalorder %s19, 0
      %p117 = por %p115, %p116
      %p118 = scmp.ne.s32.totalorder %s104, %s105
      %p119 = scmp.eq.s32.totalorder %s20, 1
      %p120 = por %p118, %p119
      %p122 = scmp.ne.s32.totalorder %s105, %s121
      %p123 = scmp.eq.s32.totalorder %s20, 0
      %p124 = por %p122, %p123
      %s126 = sadd.s32 %s125, 1
      %p129 = scmp.eq.s32.totalorder %s14, 1
      %p130 = scmp.ne.s32.totalorder %s125, %s127
      %p131 = scmp.eq.s32.totalorder %s14, 0
      %p132 = por %p130, %p131
      %p133 = scmp.ne.s32.totalorder %s125, %s127
      %p134 = scmp.eq.s32.totalorder %s19, 1
      %p135 = por %p133, %p134
      %p136 = scmp.ne.s32.totalorder %s127, %s128
      %p137 = scmp.eq.s32.totalorder %s19, 0
      %p138 = por %p136, %p137
      %p139 = scmp.ne.s32.totalorder %s127, %s128
      %p140 = scmp.eq.s32.totalorder %s20, 1
      %p141 = por %p139, %p140
      %p143 = scmp.ne.s32.totalorder %s128, %s142
      %p144 = scmp.eq.s32.totalorder %s20, 0
      %p145 = por %p143, %p144
      %s147 = sadd.s32 %s146, 1
      %p150 = scmp.eq.s32.totalorder %s14, 1
      %p151 = scmp.ne.s32.totalorder %s146, %s148
      %p152 = scmp.eq.s32.totalorder %s14, 0
      %p153 = por %p151, %p152
      %p154 = scmp.ne.s32.totalorder %s146, %s148
      %p155 = scmp.eq.s32.totalorder %s19, 1
      %p156 = por %p154, %p155
      %p157 = scmp.ne.s32.totalorder %s148, %s149
      %p158 = scmp.eq.s32.totalorder %s19, 0
      %p159 = por %p157, %p158
      %p160 = scmp.ne.s32.totalorder %s148, %s149
      %p161 = scmp.eq.s32.totalorder %s20, 1
      %p162 = por %p160, %p161
      %p164 = scmp.ne.s32.totalorder %s149, %s163
      %p165 = scmp.eq.s32.totalorder %s20, 0
      %p166 = por %p164, %p165
      %s167 = ssub.s32 %s21, %s40
      %s168 = ssub.s32 %s22, %s36
      %s169 = sor.u32 %s167, %s168
      %p170 = scmp.eq.s32.totalorder %s169, 0
      %s172 = sadd.s32 %s171, 1
      %s173 = scalar_select %p170, %s171, %s172
      %p176 = pneg %p170
      %p177 = scmp.eq.s32.totalorder %s14, 1
      %p178 = por %p176, %p177
      %p179 = scmp.ne.s32.totalorder %s171, %s174
      %p180 = scmp.eq.s32.totalorder %s14, 0
      %p181 = por %p179, %p180
      %p182 = scmp.ne.s32.totalorder %s171, %s174
      %p183 = scmp.eq.s32.totalorder %s19, 1
      %p184 = por %p182, %p183
      %p185 = scmp.ne.s32.totalorder %s174, %s175
      %p186 = scmp.eq.s32.totalorder %s19, 0
      %p187 = por %p185, %p186
      %p188 = scmp.ne.s32.totalorder %s174, %s175
      %p189 = scmp.eq.s32.totalorder %s20, 1
      %p190 = por %p188, %p189
      %p192 = scmp.ne.s32.totalorder %s175, %s191
      %p193 = scmp.eq.s32.totalorder %s20, 0
      %p194 = por %p192, %p193
      %p195 = scmp.le.s32.totalorder 1, %s14
      %p196 = scmp.lt.s32.totalorder %s14, 3
      %p197 = pnand %p195, %p196
      %p198 = pneg %p197
      // Predicated region
      $region9: #{multi_head_attention.3} parent=5 // pred_check
        _
      $region10: #{multi_head_attention.3} parent=5 // pred_check_branch
        %200 = sbr.rel (%p197) target = $region12
      $region11: #{multi_head_attention.3} parent=5 // pred_region
        %s201 = ssub.s32 %s14, 1
        // Predicated region
        $region13: #{multi_head_attention.3} parent=11 // pred_check
          %p202 = pneg %p138
        $region14: #{multi_head_attention.3} parent=11 // pred_check_branch
          %204 = sbr.rel (%p202) target = $region16
        $region15: #{multi_head_attention.3} parent=11 // pred_region
          _
        $region16: #{multi_head_attention.3} parent=11 // pred_fallthru
          _
        // Predicated region
        $region17: #{multi_head_attention.3} parent=11 // pred_check
          %p205 = pneg %p159
        $region18: #{multi_head_attention.3} parent=11 // pred_check_branch
          %207 = sbr.rel (%p205) target = $region20
        $region19: #{multi_head_attention.3} parent=11 // pred_region
          _
        $region20: #{multi_head_attention.3} parent=11 // pred_fallthru
          _
      $region12: #{multi_head_attention.3} parent=5 // pred_fallthru
        _
      %p208 = scmp.lt.s32.totalorder %s14, 2
      // Predicated region
      $region21: #{multi_head_attention.3} parent=5 // pred_check
        %p209 = pneg %p208
      $region22: #{multi_head_attention.3} parent=5 // pred_check_branch
        %211 = sbr.rel (%p209) target = $region24
      $region23: #{multi_head_attention.3} parent=5 // pred_region
        // Predicated region
        $region25: #{multi_head_attention.3} parent=23 // pred_check
          %p212 = pneg %p55
        $region26: #{multi_head_attention.3} parent=23 // pred_check_branch
          %214 = sbr.rel (%p212) target = $region28
        $region27: #{multi_head_attention.3} parent=23 // pred_region
          %p215 = scmp.lt.s32.totalorder %s21, 1
          %s216 = scalar_select %p215, %s21, 1
          %p217 = scmp.lt.s32.totalorder %s22, 0
          %s218 = scalar_select %p217, %s22, 0
          %s219 = sadd.s32 %s218, %s216
          %s220 = smul.addr %s219, 8
          %s221 = scalar_lea.vmem %s0, %s220
        $region28: #{multi_head_attention.3} parent=23 // pred_fallthru
          _
        // Predicated region
        $region29: #{multi_head_attention.3} parent=23 // pred_check
          %p222 = pneg %p83
        $region30: #{multi_head_attention.3} parent=23 // pred_check_branch
          %224 = sbr.rel (%p222) target = $region32
        $region31: #{multi_head_attention.3} parent=23 // pred_region
          %p225 = scmp.lt.s32.totalorder %s21, 1
          %s226 = scalar_select %p225, %s21, 1
          %p227 = scmp.lt.s32.totalorder %s23, 0
          %s228 = scalar_select %p227, %s23, 0
          %s229 = sadd.s32 %s228, %s226
          %s230 = sadd.s32 %s229, 2
          %s231 = smul.addr %s230, 8
          %s232 = scalar_lea.vmem %s1, %s231
        $region32: #{multi_head_attention.3} parent=23 // pred_fallthru
          _
        // Predicated region
        $region33: #{multi_head_attention.3} parent=23 // pred_check
          %p233 = pneg %p111
        $region34: #{multi_head_attention.3} parent=23 // pred_check_branch
          %235 = sbr.rel (%p233) target = $region36
        $region35: #{multi_head_attention.3} parent=23 // pred_region
          %p236 = scmp.lt.s32.totalorder %s21, 1
          %s237 = scalar_select %p236, %s21, 1
          %p238 = scmp.lt.s32.totalorder %s23, 0
          %s239 = scalar_select %p238, %s23, 0
          %s240 = sadd.s32 %s239, %s237
          %s241 = sadd.s32 %s240, 4
          %s242 = smul.addr %s241, 8
          %s243 = scalar_lea.vmem %s2, %s242
        $region36: #{multi_head_attention.3} parent=23 // pred_fallthru
          _
      $region24: #{multi_head_attention.3} parent=5 // pred_fallthru
        _
      %p244 = scmp.le.s32.totalorder 1, %s14
      %p245 = scmp.lt.s32.totalorder %s14, 3
      %p246 = pnand %p244, %p245
      %p247 = pneg %p246
      // Predicated region
      $region37: #{multi_head_attention.3} parent=5 // pred_check
        _
      $region38: #{multi_head_attention.3} parent=5 // pred_check_branch
        %249 = sbr.rel (%p246) target = $region40
      $region39: #{multi_head_attention.3} parent=5 // pred_region
        %s250 = ssub.s32 %s14, 1
        %p251 = scmp.lt.s32.totalorder %s24, 1
        %s252 = scalar_select %p251, %s24, 1
        %p253 = scmp.lt.s32.totalorder %s25, 0
        %s254 = scalar_select %p253, %s25, 0
        %s255 = sadd.s32 %s254, %s252
        %s256 = smul.addr %s255, 8
        %s257 = scalar_lea.vmem %s0, %s256
        %p258 = pneg %p61
        %p259 = pneg %p58
        %p260 = scmp.lt.s32.totalorder %s24, 1
        %s261 = scalar_select %p260, %s24, 1
        %p262 = scmp.lt.s32.totalorder %s26, 0
        %s263 = scalar_select %p262, %s26, 0
        %s264 = sadd.s32 %s263, %s261
        %s265 = sadd.s32 %s264, 2
        %s266 = smul.addr %s265, 8
        %s267 = scalar_lea.vmem %s1, %s266
        %p268 = pneg %p89
        %p269 = pneg %p86
        %p270 = scmp.lt.s32.totalorder %s24, 1
        %s271 = scalar_select %p270, %s24, 1
        %p272 = scmp.lt.s32.totalorder %s26, 0
        %s273 = scalar_select %p272, %s26, 0
        %s274 = sadd.s32 %s273, %s271
        %s275 = sadd.s32 %s274, 4
        %s276 = smul.addr %s275, 8
        %s277 = scalar_lea.vmem %s2, %s276
        %p278 = pneg %p117
        %p279 = pneg %p114
        %p280 = pneg %p138
        %p281 = pneg %p135
        %p282 = pneg %p159
        %p283 = pneg %p156
        %p284 = pneg %p187
        %p285 = pneg %p184
        %s286 = sand.u32 %s174, 1
        %s287 = scalar_lea.sflag [#allocation6], %s286
        %s288 = sand.u32 %s174, 1
        %s289 = smul.addr %s288, 8
        %s290 = scalar_lea.vmem [#allocation5], %s289
        %p291 = scmp.lt.s32.totalorder %s24, 1
        %s292 = scalar_select %p291, %s24, 1
        %p293 = scmp.lt.s32.totalorder %s25, 0
        %s294 = scalar_select %p293, %s25, 0
        %s295 = sadd.s32 %s294, %s292
        %s296 = smul.addr %s295, 8
        %s297 = scalar_lea.vmem %s0, %s296
        %p298 = scmp.lt.s32.totalorder %s24, 1
        %s299 = scalar_select %p298, %s24, 1
        %p300 = scmp.lt.s32.totalorder %s26, 0
        %s301 = scalar_select %p300, %s26, 0
        %s302 = sadd.s32 %s301, %s299
        %s303 = sadd.s32 %s302, 2
        %s304 = smul.addr %s303, 8
        %s305 = scalar_lea.vmem %s1, %s304
        %p306 = scmp.lt.s32.totalorder %s24, 1
        %s307 = scalar_select %p306, %s24, 1
        %p308 = scmp.lt.s32.totalorder %s26, 0
        %s309 = scalar_select %p308, %s26, 0
        %s310 = sadd.s32 %s309, %s307
        %s311 = sadd.s32 %s310, 4
        %s312 = smul.addr %s311, 8
        %s313 = scalar_lea.vmem %s2, %s312
        %p314 = scmp.eq.s32.totalorder %s26, 0
        // Predicated region
        $region41: #{multi_head_attention.3} parent=39 // pred_check
          %p315 = pneg %p314
        $region42: #{multi_head_attention.3} parent=39 // pred_check_branch
          %317 = sbr.rel (%p315) target = $region44
        $region43: #{multi_head_attention.3} parent=39 // pred_region
          %vm318 = vcmask 7168
          %319 = vst.msk [vmem:[#allocation2] sm:$0xff] %vm318, -inf
          %320 = vst.msk [vmem:[#allocation2 + $0x8] sm:$0xff] %vm318, -inf
          %321 = vst.msk [vmem:[#allocation2 + $0x10] sm:$0xff] %vm318, -inf
          %322 = vst.msk [vmem:[#allocation2 + $0x18] sm:$0xff] %vm318, -inf
          %323 = vst.msk [vmem:[#allocation3] sm:$0xff] %vm318, 0.0
          %324 = vst.msk [vmem:[#allocation3 + $0x8] sm:$0xff] %vm318, 0.0
          %325 = vst.msk [vmem:[#allocation3 + $0x10] sm:$0xff] %vm318, 0.0
          %326 = vst.msk [vmem:[#allocation3 + $0x18] sm:$0xff] %vm318, 0.0
          %vm327 = vcmask 64512
          %328 = vst.msk [vmem:[#allocation4] sm:$0xff] %vm327, 0.0
          %329 = vst.msk [vmem:[#allocation4 + $0x8] sm:$0xff] %vm327, 0.0
          %330 = vst.msk [vmem:[#allocation4 + $0x10] sm:$0xff] %vm327, 0.0
          %331 = vst.msk [vmem:[#allocation4 + $0x18] sm:$0xff] %vm327, 0.0
        $region44: #{multi_head_attention.3} parent=39 // pred_fallthru
          _
        %v332 = vld [vmem:[%s297] sm:$0xff]
        %334 = vrot.lane.b32.xlu0 %v332, 120
        %v335 = vpop.permute.xlu0 %334
        %337 = vrot.lane.b32.xlu0 %v332, 112
        %v338 = vpop.permute.xlu0 %337
        %340 = vrot.lane.b32.xlu0 %v332, 104
        %v341 = vpop.permute.xlu0 %340
        %v343 = vcombine.low %v332, %v338
        %v344 = vcombine.high %v332, %v338
        %v346 = vunpack.c.l.s4 1983009808
        %v347 = vunpack.c.0.s8 %v346
        %v348 = vlaneseq
        %v349 = vshrl.u32 %v348, 7
        %v350 = vsub.s32 %v347, %v349
        %v351 = vrot.slane %v343, %v350
        %v353 = vunpack.c.l.s4 1983009808
        %v354 = vunpack.c.0.s8 %v353
        %v355 = vlaneseq
        %v356 = vshrl.u32 %v355, 7
        %v357 = vsub.s32 %v354, %v356
        %v358 = vrot.slane %v344, %v357
        %v359 = vcombine.low %v335, %v341
        %v360 = vcombine.high %v335, %v341
        %v362 = vunpack.c.l.s4 1983009808
        %v363 = vunpack.c.0.s8 %v362
        %v364 = vlaneseq
        %v365 = vshrl.u32 %v364, 7
        %v366 = vsub.s32 %v363, %v365
        %v367 = vrot.slane %v359, %v366
        %v369 = vunpack.c.l.s4 1983009808
        %v370 = vunpack.c.0.s8 %v369
        %v371 = vlaneseq
        %v372 = vshrl.u32 %v371, 7
        %v373 = vsub.s32 %v370, %v372
        %v374 = vrot.slane %v360, %v373
        %v375 = vcombine.low %v351, %v367
        %v376 = vcombine.high %v351, %v367
        %v378 = vunpack.c.l.s4 1934713408
        %v379 = vunpack.c.0.s8 %v378
        %v380 = vlaneseq
        %v381 = vshrl.u32 %v380, 7
        %v382 = vsub.s32 %v379, %v381
        %v383 = vrot.slane %v375, %v382
        %v385 = vunpack.c.l.s4 1934713408
        %v386 = vunpack.c.0.s8 %v385
        %v387 = vlaneseq
        %v388 = vshrl.u32 %v387, 7
        %v389 = vsub.s32 %v386, %v388
        %v390 = vrot.slane %v376, %v389
        %v391 = vcombine.low %v358, %v374
        %v392 = vcombine.high %v358, %v374
        %v394 = vunpack.c.l.s4 1934713408
        %v395 = vunpack.c.0.s8 %v394
        %v396 = vlaneseq
        %v397 = vshrl.u32 %v396, 7
        %v398 = vsub.s32 %v395, %v397
        %v399 = vrot.slane %v391, %v398
        %v401 = vunpack.c.l.s4 1934713408
        %v402 = vunpack.c.0.s8 %v401
        %v403 = vlaneseq
        %v404 = vshrl.u32 %v403, 7
        %v405 = vsub.s32 %v402, %v404
        %v406 = vrot.slane %v392, %v405
        %v407 = vcombine.high %v383, 0.0
        %v408 = vcombine.high %v390, 0.0
        %v409 = vcombine.high %v399, 0.0
        %v410 = vcombine.high %v406, 0.0
        %v411 = vld [vmem:[%s305] sm:$0xff]
        %413 = vrot.lane.b32.xlu0 %v411, 120
        %v414 = vpop.permute.xlu0 %413
        %416 = vrot.lane.b32.xlu0 %v411, 112
        %v417 = vpop.permute.xlu0 %416
        %419 = vrot.lane.b32.xlu0 %v411, 104
        %v420 = vpop.permute.xlu0 %419
        %v422 = vcombine.low %v411, %v417
        %v423 = vcombine.high %v411, %v417
        %v425 = vunpack.c.l.s4 1983009808
        %v426 = vunpack.c.0.s8 %v425
        %v427 = vlaneseq
        %v428 = vshrl.u32 %v427, 7
        %v429 = vsub.s32 %v426, %v428
        %v430 = vrot.slane %v422, %v429
        %v432 = vunpack.c.l.s4 1983009808
        %v433 = vunpack.c.0.s8 %v432
        %v434 = vlaneseq
        %v435 = vshrl.u32 %v434, 7
        %v436 = vsub.s32 %v433, %v435
        %v437 = vrot.slane %v423, %v436
        %v438 = vcombine.low %v414, %v420
        %v439 = vcombine.high %v414, %v420
        %v441 = vunpack.c.l.s4 1983009808
        %v442 = vunpack.c.0.s8 %v441
        %v443 = vlaneseq
        %v444 = vshrl.u32 %v443, 7
        %v445 = vsub.s32 %v442, %v444
        %v446 = vrot.slane %v438, %v445
        %v448 = vunpack.c.l.s4 1983009808
        %v449 = vunpack.c.0.s8 %v448
        %v450 = vlaneseq
        %v451 = vshrl.u32 %v450, 7
        %v452 = vsub.s32 %v449, %v451
        %v453 = vrot.slane %v439, %v452
        %v454 = vcombine.low %v430, %v446
        %v455 = vcombine.high %v430, %v446
        %v457 = vunpack.c.l.s4 1934713408
        %v458 = vunpack.c.0.s8 %v457
        %v459 = vlaneseq
        %v460 = vshrl.u32 %v459, 7
        %v461 = vsub.s32 %v458, %v460
        %v462 = vrot.slane %v454, %v461
        %v464 = vunpack.c.l.s4 1934713408
        %v465 = vunpack.c.0.s8 %v464
        %v466 = vlaneseq
        %v467 = vshrl.u32 %v466, 7
        %v468 = vsub.s32 %v465, %v467
        %v469 = vrot.slane %v455, %v468
        %v470 = vcombine.low %v437, %v453
        %v471 = vcombine.high %v437, %v453
        %v473 = vunpack.c.l.s4 1934713408
        %v474 = vunpack.c.0.s8 %v473
        %v475 = vlaneseq
        %v476 = vshrl.u32 %v475, 7
        %v477 = vsub.s32 %v474, %v476
        %v478 = vrot.slane %v470, %v477
        %v480 = vunpack.c.l.s4 1934713408
        %v481 = vunpack.c.0.s8 %v480
        %v482 = vlaneseq
        %v483 = vshrl.u32 %v482, 7
        %v484 = vsub.s32 %v481, %v483
        %v485 = vrot.slane %v471, %v484
        %v486 = vcombine.high %v462, 0.0
        %v487 = vcombine.high %v469, 0.0
        %v488 = vcombine.high %v478, 0.0
        %v489 = vcombine.high %v485, 0.0
        %v490 = vld [vmem:[%s313] sm:$0xff]
        %492 = vrot.lane.b32.xlu0 %v490, 120
        %v493 = vpop.permute.xlu0 %492
        %495 = vrot.lane.b32.xlu0 %v490, 112
        %v496 = vpop.permute.xlu0 %495
        %498 = vrot.lane.b32.xlu0 %v490, 104
        %v499 = vpop.permute.xlu0 %498
        %v501 = vcombine.low %v490, %v496
        %v502 = vcombine.high %v490, %v496
        %v504 = vunpack.c.l.s4 1983009808
        %v505 = vunpack.c.0.s8 %v504
        %v506 = vlaneseq
        %v507 = vshrl.u32 %v506, 7
        %v508 = vsub.s32 %v505, %v507
        %v509 = vrot.slane %v501, %v508
        %v511 = vunpack.c.l.s4 1983009808
        %v512 = vunpack.c.0.s8 %v511
        %v513 = vlaneseq
        %v514 = vshrl.u32 %v513, 7
        %v515 = vsub.s32 %v512, %v514
        %v516 = vrot.slane %v502, %v515
        %v517 = vcombine.low %v493, %v499
        %v518 = vcombine.high %v493, %v499
        %v520 = vunpack.c.l.s4 1983009808
        %v521 = vunpack.c.0.s8 %v520
        %v522 = vlaneseq
        %v523 = vshrl.u32 %v522, 7
        %v524 = vsub.s32 %v521, %v523
        %v525 = vrot.slane %v517, %v524
        %v527 = vunpack.c.l.s4 1983009808
        %v528 = vunpack.c.0.s8 %v527
        %v529 = vlaneseq
        %v530 = vshrl.u32 %v529, 7
        %v531 = vsub.s32 %v528, %v530
        %v532 = vrot.slane %v518, %v531
        %v533 = vcombine.low %v509, %v525
        %v534 = vcombine.high %v509, %v525
        %v536 = vunpack.c.l.s4 1934713408
        %v537 = vunpack.c.0.s8 %v536
        %v538 = vlaneseq
        %v539 = vshrl.u32 %v538, 7
        %v540 = vsub.s32 %v537, %v539
        %v541 = vrot.slane %v533, %v540
        %v543 = vunpack.c.l.s4 1934713408
        %v544 = vunpack.c.0.s8 %v543
        %v545 = vlaneseq
        %v546 = vshrl.u32 %v545, 7
        %v547 = vsub.s32 %v544, %v546
        %v548 = vrot.slane %v534, %v547
        %v549 = vcombine.low %v516, %v532
        %v550 = vcombine.high %v516, %v532
        %v552 = vunpack.c.l.s4 1934713408
        %v553 = vunpack.c.0.s8 %v552
        %v554 = vlaneseq
        %v555 = vshrl.u32 %v554, 7
        %v556 = vsub.s32 %v553, %v555
        %v557 = vrot.slane %v549, %v556
        %v559 = vunpack.c.l.s4 1934713408
        %v560 = vunpack.c.0.s8 %v559
        %v561 = vlaneseq
        %v562 = vshrl.u32 %v561, 7
        %v563 = vsub.s32 %v560, %v562
        %v564 = vrot.slane %v550, %v563
        %v565 = vcombine.high %v541, 0.0
        %v566 = vcombine.high %v548, 0.0
        %v567 = vcombine.high %v557, 0.0
        %v568 = vcombine.high %v564, 0.0
        %v569 = vcombine.low %v383, %v390
        %v571 = vunpack.c.l.s4 1983009808
        %v572 = vunpack.c.0.s8 %v571
        %v573 = vlaneseq
        %v574 = vshrl.u32 %v573, 7
        %v575 = vsub.s32 %v572, %v574
        %v576 = vrot.slane %v569, %v575
        %v577 = vcombine.low %v407, %v408
        %v579 = vunpack.c.l.s4 1983009808
        %v580 = vunpack.c.0.s8 %v579
        %v581 = vlaneseq
        %v582 = vshrl.u32 %v581, 7
        %v583 = vsub.s32 %v580, %v582
        %v584 = vrot.slane %v577, %v583
        %v585 = vcombine.low %v399, %v406
        %v587 = vunpack.c.l.s4 1983009808
        %v588 = vunpack.c.0.s8 %v587
        %v589 = vlaneseq
        %v590 = vshrl.u32 %v589, 7
        %v591 = vsub.s32 %v588, %v590
        %v592 = vrot.slane %v585, %v591
        %v593 = vcombine.low %v409, %v410
        %v595 = vunpack.c.l.s4 1983009808
        %v596 = vunpack.c.0.s8 %v595
        %v597 = vlaneseq
        %v598 = vshrl.u32 %v597, 7
        %v599 = vsub.s32 %v596, %v598
        %v600 = vrot.slane %v593, %v599
        %v601 = vcombine.low %v576, %v584
        %v602 = vcombine.high %v576, %v584
        %v604 = vunpack.c.l.s4 1934713408
        %v605 = vunpack.c.0.s8 %v604
        %v606 = vlaneseq
        %v607 = vshrl.u32 %v606, 7
        %v608 = vsub.s32 %v605, %v607
        %v609 = vrot.slane %v601, %v608
        %v611 = vunpack.c.l.s4 1934713408
        %v612 = vunpack.c.0.s8 %v611
        %v613 = vlaneseq
        %v614 = vshrl.u32 %v613, 7
        %v615 = vsub.s32 %v612, %v614
        %v616 = vrot.slane %v602, %v615
        %v617 = vcombine.low %v592, %v600
        %v618 = vcombine.high %v592, %v600
        %v620 = vunpack.c.l.s4 1934713408
        %v621 = vunpack.c.0.s8 %v620
        %v622 = vlaneseq
        %v623 = vshrl.u32 %v622, 7
        %v624 = vsub.s32 %v621, %v623
        %v625 = vrot.slane %v617, %v624
        %v627 = vunpack.c.l.s4 1934713408
        %v628 = vunpack.c.0.s8 %v627
        %v629 = vlaneseq
        %v630 = vshrl.u32 %v629, 7
        %v631 = vsub.s32 %v628, %v630
        %v632 = vrot.slane %v618, %v631
        %v633 = vcombine.low %v609, %v625
        %v634 = vcombine.high %v609, %v625
        %v635 = vcombine.low %v616, %v632
        %v636 = vcombine.high %v616, %v632
        %637 = vxpose.xlu0.b32.start [1/16] %v462, 128
        %638 = vxpose.xlu0.b32.cont [2/16] 0.0, 128
        %639 = vxpose.xlu0.b32.cont [3/16] 0.0, 128
        %640 = vxpose.xlu0.b32.cont [4/16] 0.0, 128
        %641 = vxpose.xlu0.b32.cont [5/16] 0.0, 128
        %642 = vxpose.xlu0.b32.cont [6/16] 0.0, 128
        %643 = vxpose.xlu0.b32.cont [7/16] 0.0, 128
        %644 = vxpose.xlu0.b32.cont [8/16] 0.0, 128
        %645 = vxpose.xlu0.b32.cont [9/16] 0.0, 128
        %646 = vxpose.xlu0.b32.cont [10/16] 0.0, 128
        %647 = vxpose.xlu0.b32.cont [11/16] 0.0, 128
        %648 = vxpose.xlu0.b32.cont [12/16] 0.0, 128
        %649 = vxpose.xlu0.b32.cont [13/16] 0.0, 128
        %650 = vxpose.xlu0.b32.cont [14/16] 0.0, 128
        %651 = vxpose.xlu0.b32.cont [15/16] 0.0, 128
        %652 = vxpose.xlu0.b32.end [16/16] 0.0, 128
        %v653 = vpop.trf.xlu0
        %v654 = vpop.trf.xlu0
        %v655 = vpop.trf.xlu0
        %v656 = vpop.trf.xlu0
        %v657 = vpop.trf.xlu0
        %v658 = vpop.trf.xlu0
        %v659 = vpop.trf.xlu0
        %v660 = vpop.trf.xlu0
        %v661 = vpop.trf.xlu0
        %v662 = vpop.trf.xlu0
        %v663 = vpop.trf.xlu0
        %v664 = vpop.trf.xlu0
        %v665 = vpop.trf.xlu0
        %v666 = vpop.trf.xlu0
        %v667 = vpop.trf.xlu0
        %v668 = vpop.trf.xlu0
        %669 = vxpose.xlu0.b32.start [1/16] %v486, 128
        %670 = vxpose.xlu0.b32.cont [2/16] 0.0, 128
        %671 = vxpose.xlu0.b32.cont [3/16] 0.0, 128
        %672 = vxpose.xlu0.b32.cont [4/16] 0.0, 128
        %673 = vxpose.xlu0.b32.cont [5/16] 0.0, 128
        %674 = vxpose.xlu0.b32.cont [6/16] 0.0, 128
        %675 = vxpose.xlu0.b32.cont [7/16] 0.0, 128
        %676 = vxpose.xlu0.b32.cont [8/16] 0.0, 128
        %677 = vxpose.xlu0.b32.cont [9/16] 0.0, 128
        %678 = vxpose.xlu0.b32.cont [10/16] 0.0, 128
        %679 = vxpose.xlu0.b32.cont [11/16] 0.0, 128
        %680 = vxpose.xlu0.b32.cont [12/16] 0.0, 128
        %681 = vxpose.xlu0.b32.cont [13/16] 0.0, 128
        %682 = vxpose.xlu0.b32.cont [14/16] 0.0, 128
        %683 = vxpose.xlu0.b32.cont [15/16] 0.0, 128
        %684 = vxpose.xlu0.b32.end [16/16] 0.0, 128
        %v685 = vpop.trf.xlu0
        %v686 = vpop.trf.xlu0
        %v687 = vpop.trf.xlu0
        %v688 = vpop.trf.xlu0
        %v689 = vpop.trf.xlu0
        %v690 = vpop.trf.xlu0
        %v691 = vpop.trf.xlu0
        %v692 = vpop.trf.xlu0
        %v693 = vpop.trf.xlu0
        %v694 = vpop.trf.xlu0
        %v695 = vpop.trf.xlu0
        %v696 = vpop.trf.xlu0
        %v697 = vpop.trf.xlu0
        %v698 = vpop.trf.xlu0
        %v699 = vpop.trf.xlu0
        %v700 = vpop.trf.xlu0
        %701 = vxpose.xlu0.b32.start [1/16] %v469, 128
        %702 = vxpose.xlu0.b32.cont [2/16] 0.0, 128
        %703 = vxpose.xlu0.b32.cont [3/16] 0.0, 128
        %704 = vxpose.xlu0.b32.cont [4/16] 0.0, 128
        %705 = vxpose.xlu0.b32.cont [5/16] 0.0, 128
        %706 = vxpose.xlu0.b32.cont [6/16] 0.0, 128
        %707 = vxpose.xlu0.b32.cont [7/16] 0.0, 128
        %708 = vxpose.xlu0.b32.cont [8/16] 0.0, 128
        %709 = vxpose.xlu0.b32.cont [9/16] 0.0, 128
        %710 = vxpose.xlu0.b32.cont [10/16] 0.0, 128
        %711 = vxpose.xlu0.b32.cont [11/16] 0.0, 128
        %712 = vxpose.xlu0.b32.cont [12/16] 0.0, 128
        %713 = vxpose.xlu0.b32.cont [13/16] 0.0, 128
        %714 = vxpose.xlu0.b32.cont [14/16] 0.0, 128
        %715 = vxpose.xlu0.b32.cont [15/16] 0.0, 128
        %716 = vxpose.xlu0.b32.end [16/16] 0.0, 128
        %v717 = vpop.trf.xlu0
        %v718 = vpop.trf.xlu0
        %v719 = vpop.trf.xlu0
        %v720 = vpop.trf.xlu0
        %v721 = vpop.trf.xlu0
        %v722 = vpop.trf.xlu0
        %v723 = vpop.trf.xlu0
        %v724 = vpop.trf.xlu0
        %v725 = vpop.trf.xlu0
        %v726 = vpop.trf.xlu0
        %v727 = vpop.trf.xlu0
        %v728 = vpop.trf.xlu0
        %v729 = vpop.trf.xlu0
        %v730 = vpop.trf.xlu0
        %v731 = vpop.trf.xlu0
        %v732 = vpop.trf.xlu0
        %733 = vxpose.xlu0.b32.start [1/16] %v487, 128
        %734 = vxpose.xlu0.b32.cont [2/16] 0.0, 128
        %735 = vxpose.xlu0.b32.cont [3/16] 0.0, 128
        %736 = vxpose.xlu0.b32.cont [4/16] 0.0, 128
        %737 = vxpose.xlu0.b32.cont [5/16] 0.0, 128
        %738 = vxpose.xlu0.b32.cont [6/16] 0.0, 128
        %739 = vxpose.xlu0.b32.cont [7/16] 0.0, 128
        %740 = vxpose.xlu0.b32.cont [8/16] 0.0, 128
        %741 = vxpose.xlu0.b32.cont [9/16] 0.0, 128
        %742 = vxpose.xlu0.b32.cont [10/16] 0.0, 128
        %743 = vxpose.xlu0.b32.cont [11/16] 0.0, 128
        %744 = vxpose.xlu0.b32.cont [12/16] 0.0, 128
        %745 = vxpose.xlu0.b32.cont [13/16] 0.0, 128
        %746 = vxpose.xlu0.b32.cont [14/16] 0.0, 128
        %747 = vxpose.xlu0.b32.cont [15/16] 0.0, 128
        %748 = vxpose.xlu0.b32.end [16/16] 0.0, 128
        %v749 = vpop.trf.xlu0
        %v750 = vpop.trf.xlu0
        %v751 = vpop.trf.xlu0
        %v752 = vpop.trf.xlu0
        %v753 = vpop.trf.xlu0
        %v754 = vpop.trf.xlu0
        %v755 = vpop.trf.xlu0
        %v756 = vpop.trf.xlu0
        %v757 = vpop.trf.xlu0
        %v758 = vpop.trf.xlu0
        %v759 = vpop.trf.xlu0
        %v760 = vpop.trf.xlu0
        %v761 = vpop.trf.xlu0
        %v762 = vpop.trf.xlu0
        %v763 = vpop.trf.xlu0
        %v764 = vpop.trf.xlu0
        %765 = vxpose.xlu0.b32.start [1/16] %v478, 128
        %766 = vxpose.xlu0.b32.cont [2/16] 0.0, 128
        %767 = vxpose.xlu0.b32.cont [3/16] 0.0, 128
        %768 = vxpose.xlu0.b32.cont [4/16] 0.0, 128
        %769 = vxpose.xlu0.b32.cont [5/16] 0.0, 128
        %770 = vxpose.xlu0.b32.cont [6/16] 0.0, 128
        %771 = vxpose.xlu0.b32.cont [7/16] 0.0, 128
        %772 = vxpose.xlu0.b32.cont [8/16] 0.0, 128
        %773 = vxpose.xlu0.b32.cont [9/16] 0.0, 128
        %774 = vxpose.xlu0.b32.cont [10/16] 0.0, 128
        %775 = vxpose.xlu0.b32.cont [11/16] 0.0, 128
        %776 = vxpose.xlu0.b32.cont [12/16] 0.0, 128
        %777 = vxpose.xlu0.b32.cont [13/16] 0.0, 128
        %778 = vxpose.xlu0.b32.cont [14/16] 0.0, 128
        %779 = vxpose.xlu0.b32.cont [15/16] 0.0, 128
        %780 = vxpose.xlu0.b32.end [16/16] 0.0, 128
        %v781 = vpop.trf.xlu0
        %v782 = vpop.trf.xlu0
        %v783 = vpop.trf.xlu0
        %v784 = vpop.trf.xlu0
        %v785 = vpop.trf.xlu0
        %v786 = vpop.trf.xlu0
        %v787 = vpop.trf.xlu0
        %v788 = vpop.trf.xlu0
        %v789 = vpop.trf.xlu0
        %v790 = vpop.trf.xlu0
        %v791 = vpop.trf.xlu0
        %v792 = vpop.trf.xlu0
        %v793 = vpop.trf.xlu0
        %v794 = vpop.trf.xlu0
        %v795 = vpop.trf.xlu0
        %v796 = vpop.trf.xlu0
        %797 = vxpose.xlu0.b32.start [1/16] %v488, 128
        %798 = vxpose.xlu0.b32.cont [2/16] 0.0, 128
        %799 = vxpose.xlu0.b32.cont [3/16] 0.0, 128
        %800 = vxpose.xlu0.b32.cont [4/16] 0.0, 128
        %801 = vxpose.xlu0.b32.cont [5/16] 0.0, 128
        %802 = vxpose.xlu0.b32.cont [6/16] 0.0, 128
        %803 = vxpose.xlu0.b32.cont [7/16] 0.0, 128
        %804 = vxpose.xlu0.b32.cont [8/16] 0.0, 128
        %805 = vxpose.xlu0.b32.cont [9/16] 0.0, 128
        %806 = vxpose.xlu0.b32.cont [10/16] 0.0, 128
        %807 = vxpose.xlu0.b32.cont [11/16] 0.0, 128
        %808 = vxpose.xlu0.b32.cont [12/16] 0.0, 128
        %809 = vxpose.xlu0.b32.cont [13/16] 0.0, 128
        %810 = vxpose.xlu0.b32.cont [14/16] 0.0, 128
        %811 = vxpose.xlu0.b32.cont [15/16] 0.0, 128
        %812 = vxpose.xlu0.b32.end [16/16] 0.0, 128
        %v813 = vpop.trf.xlu0
        %v814 = vpop.trf.xlu0
        %v815 = vpop.trf.xlu0
        %v816 = vpop.trf.xlu0
        %v817 = vpop.trf.xlu0
        %v818 = vpop.trf.xlu0
        %v819 = vpop.trf.xlu0
        %v820 = vpop.trf.xlu0
        %v821 = vpop.trf.xlu0
        %v822 = vpop.trf.xlu0
        %v823 = vpop.trf.xlu0
        %v824 = vpop.trf.xlu0
        %v825 = vpop.trf.xlu0
        %v826 = vpop.trf.xlu0
        %v827 = vpop.trf.xlu0
        %v828 = vpop.trf.xlu0
        %829 = vxpose.xlu0.b32.start [1/16] %v485, 128
        %830 = vxpose.xlu0.b32.cont [2/16] 0.0, 128
        %831 = vxpose.xlu0.b32.cont [3/16] 0.0, 128
        %832 = vxpose.xlu0.b32.cont [4/16] 0.0, 128
        %833 = vxpose.xlu0.b32.cont [5/16] 0.0, 128
        %834 = vxpose.xlu0.b32.cont [6/16] 0.0, 128
        %835 = vxpose.xlu0.b32.cont [7/16] 0.0, 128
        %836 = vxpose.xlu0.b32.cont [8/16] 0.0, 128
        %837 = vxpose.xlu0.b32.cont [9/16] 0.0, 128
        %838 = vxpose.xlu0.b32.cont [10/16] 0.0, 128
        %839 = vxpose.xlu0.b32.cont [11/16] 0.0, 128
        %840 = vxpose.xlu0.b32.cont [12/16] 0.0, 128
        %841 = vxpose.xlu0.b32.cont [13/16] 0.0, 128
        %842 = vxpose.xlu0.b32.cont [14/16] 0.0, 128
        %843 = vxpose.xlu0.b32.cont [15/16] 0.0, 128
        %844 = vxpose.xlu0.b32.end [16/16] 0.0, 128
        %v845 = vpop.trf.xlu0
        %v846 = vpop.trf.xlu0
        %v847 = vpop.trf.xlu0
        %v848 = vpop.trf.xlu0
        %v849 = vpop.trf.xlu0
        %v850 = vpop.trf.xlu0
        %v851 = vpop.trf.xlu0
        %v852 = vpop.trf.xlu0
        %v853 = vpop.trf.xlu0
        %v854 = vpop.trf.xlu0
        %v855 = vpop.trf.xlu0
        %v856 = vpop.trf.xlu0
        %v857 = vpop.trf.xlu0
        %v858 = vpop.trf.xlu0
        %v859 = vpop.trf.xlu0
        %v860 = vpop.trf.xlu0
        %861 = vxpose.xlu0.b32.start [1/16] %v489, 128
        %862 = vxpose.xlu0.b32.cont [2/16] 0.0, 128
        %863 = vxpose.xlu0.b32.cont [3/16] 0.0, 128
        %864 = vxpose.xlu0.b32.cont [4/16] 0.0, 128
        %865 = vxpose.xlu0.b32.cont [5/16] 0.0, 128
        %866 = vxpose.xlu0.b32.cont [6/16] 0.0, 128
        %867 = vxpose.xlu0.b32.cont [7/16] 0.0, 128
        %868 = vxpose.xlu0.b32.cont [8/16] 0.0, 128
        %869 = vxpose.xlu0.b32.cont [9/16] 0.0, 128
        %870 = vxpose.xlu0.b32.cont [10/16] 0.0, 128
        %871 = vxpose.xlu0.b32.cont [11/16] 0.0, 128
        %872 = vxpose.xlu0.b32.cont [12/16] 0.0, 128
        %873 = vxpose.xlu0.b32.cont [13/16] 0.0, 128
        %874 = vxpose.xlu0.b32.cont [14/16] 0.0, 128
        %875 = vxpose.xlu0.b32.cont [15/16] 0.0, 128
        %876 = vxpose.xlu0.b32.end [16/16] 0.0, 128
        %v877 = vpop.trf.xlu0
        %v878 = vpop.trf.xlu0
        %v879 = vpop.trf.xlu0
        %v880 = vpop.trf.xlu0
        %v881 = vpop.trf.xlu0
        %v882 = vpop.trf.xlu0
        %v883 = vpop.trf.xlu0
        %v884 = vpop.trf.xlu0
        %v885 = vpop.trf.xlu0
        %v886 = vpop.trf.xlu0
        %v887 = vpop.trf.xlu0
        %v888 = vpop.trf.xlu0
        %v889 = vpop.trf.xlu0
        %v890 = vpop.trf.xlu0
        %v891 = vpop.trf.xlu0
        %v892 = vpop.trf.xlu0
        %v893 = vcombine.low %v653, %v717
        %v894 = vcombine.high %v653, %v717
        %v896 = vunpack.c.l.s4 1983009808
        %v897 = vunpack.c.0.s8 %v896
        %v898 = vlaneseq
        %v899 = vshrl.u32 %v898, 7
        %v900 = vsub.s32 %v897, %v899
        %v901 = vrot.slane %v893, %v900
        %v903 = vunpack.c.l.s4 1983009808
        %v904 = vunpack.c.0.s8 %v903
        %v905 = vlaneseq
        %v906 = vshrl.u32 %v905, 7
        %v907 = vsub.s32 %v904, %v906
        %v908 = vrot.slane %v894, %v907
        %v909 = vcombine.low %v685, %v749
        %v910 = vcombine.high %v685, %v749
        %v912 = vunpack.c.l.s4 1983009808
        %v913 = vunpack.c.0.s8 %v912
        %v914 = vlaneseq
        %v915 = vshrl.u32 %v914, 7
        %v916 = vsub.s32 %v913, %v915
        %v917 = vrot.slane %v909, %v916
        %v919 = vunpack.c.l.s4 1983009808
        %v920 = vunpack.c.0.s8 %v919
        %v921 = vlaneseq
        %v922 = vshrl.u32 %v921, 7
        %v923 = vsub.s32 %v920, %v922
        %v924 = vrot.slane %v910, %v923
        %v925 = vcombine.low %v781, %v845
        %v926 = vcombine.high %v781, %v845
        %v928 = vunpack.c.l.s4 1983009808
        %v929 = vunpack.c.0.s8 %v928
        %v930 = vlaneseq
        %v931 = vshrl.u32 %v930, 7
        %v932 = vsub.s32 %v929, %v931
        %v933 = vrot.slane %v925, %v932
        %v935 = vunpack.c.l.s4 1983009808
        %v936 = vunpack.c.0.s8 %v935
        %v937 = vlaneseq
        %v938 = vshrl.u32 %v937, 7
        %v939 = vsub.s32 %v936, %v938
        %v940 = vrot.slane %v926, %v939
        %v941 = vcombine.low %v813, %v877
        %v942 = vcombine.high %v813, %v877
        %v944 = vunpack.c.l.s4 1983009808
        %v945 = vunpack.c.0.s8 %v944
        %v946 = vlaneseq
        %v947 = vshrl.u32 %v946, 7
        %v948 = vsub.s32 %v945, %v947
        %v949 = vrot.slane %v941, %v948
        %v951 = vunpack.c.l.s4 1983009808
        %v952 = vunpack.c.0.s8 %v951
        %v953 = vlaneseq
        %v954 = vshrl.u32 %v953, 7
        %v955 = vsub.s32 %v952, %v954
        %v956 = vrot.slane %v942, %v955
        %v957 = vcombine.low %v901, %v917
        %v958 = vcombine.high %v901, %v917
        %v960 = vunpack.c.l.s4 1934713408
        %v961 = vunpack.c.0.s8 %v960
        %v962 = vlaneseq
        %v963 = vshrl.u32 %v962, 7
        %v964 = vsub.s32 %v961, %v963
        %v965 = vrot.slane %v957, %v964
        %v967 = vunpack.c.l.s4 1934713408
        %v968 = vunpack.c.0.s8 %v967
        %v969 = vlaneseq
        %v970 = vshrl.u32 %v969, 7
        %v971 = vsub.s32 %v968, %v970
        %v972 = vrot.slane %v958, %v971
        %v973 = vcombine.low %v908, %v924
        %v974 = vcombine.high %v908, %v924
        %v976 = vunpack.c.l.s4 1934713408
        %v977 = vunpack.c.0.s8 %v976
        %v978 = vlaneseq
        %v979 = vshrl.u32 %v978, 7
        %v980 = vsub.s32 %v977, %v979
        %v981 = vrot.slane %v973, %v980
        %v983 = vunpack.c.l.s4 1934713408
        %v984 = vunpack.c.0.s8 %v983
        %v985 = vlaneseq
        %v986 = vshrl.u32 %v985, 7
        %v987 = vsub.s32 %v984, %v986
        %v988 = vrot.slane %v974, %v987
        %v989 = vcombine.low %v933, %v949
        %v990 = vcombine.high %v933, %v949
        %v992 = vunpack.c.l.s4 1934713408
        %v993 = vunpack.c.0.s8 %v992
        %v994 = vlaneseq
        %v995 = vshrl.u32 %v994, 7
        %v996 = vsub.s32 %v993, %v995
        %v997 = vrot.slane %v989, %v996
        %v999 = vunpack.c.l.s4 1934713408
        %v1000 = vunpack.c.0.s8 %v999
        %v1001 = vlaneseq
        %v1002 = vshrl.u32 %v1001, 7
        %v1003 = vsub.s32 %v1000, %v1002
        %v1004 = vrot.slane %v990, %v1003
        %v1005 = vcombine.low %v940, %v956
        %v1006 = vcombine.high %v940, %v956
        %v1008 = vunpack.c.l.s4 1934713408
        %v1009 = vunpack.c.0.s8 %v1008
        %v1010 = vlaneseq
        %v1011 = vshrl.u32 %v1010, 7
        %v1012 = vsub.s32 %v1009, %v1011
        %v1013 = vrot.slane %v1005, %v1012
        %v1015 = vunpack.c.l.s4 1934713408
        %v1016 = vunpack.c.0.s8 %v1015
        %v1017 = vlaneseq
        %v1018 = vshrl.u32 %v1017, 7
        %v1019 = vsub.s32 %v1016, %v1018
        %v1020 = vrot.slane %v1006, %v1019
        %v1021 = vcombine.low %v965, %v997
        %v1022 = vcombine.high %v965, %v997
        %v1023 = vcombine.low %v972, %v1004
        %v1024 = vcombine.high %v972, %v1004
        %v1025 = vcombine.low %v981, %v1013
        %v1026 = vcombine.high %v981, %v1013
        %v1027 = vcombine.low %v988, %v1020
        %v1028 = vcombine.high %v988, %v1020
        %1029 = vxpose.xlu0.b32.start [1/16] %v1021, 128
        %1030 = vxpose.xlu0.b32.cont [2/16] 0.0, 128
        %1031 = vxpose.xlu0.b32.cont [3/16] 0.0, 128
        %1032 = vxpose.xlu0.b32.cont [4/16] 0.0, 128
        %1033 = vxpose.xlu0.b32.cont [5/16] 0.0, 128
        %1034 = vxpose.xlu0.b32.cont [6/16] 0.0, 128
        %1035 = vxpose.xlu0.b32.cont [7/16] 0.0, 128
        %1036 = vxpose.xlu0.b32.cont [8/16] 0.0, 128
        %1037 = vxpose.xlu0.b32.cont [9/16] 0.0, 128
        %1038 = vxpose.xlu0.b32.cont [10/16] 0.0, 128
        %1039 = vxpose.xlu0.b32.cont [11/16] 0.0, 128
        %1040 = vxpose.xlu0.b32.cont [12/16] 0.0, 128
        %1041 = vxpose.xlu0.b32.cont [13/16] 0.0, 128
        %1042 = vxpose.xlu0.b32.cont [14/16] 0.0, 128
        %1043 = vxpose.xlu0.b32.cont [15/16] 0.0, 128
        %1044 = vxpose.xlu0.b32.end [16/16] 0.0, 128
        %v1045 = vpop.trf.xlu0
        %v1046 = vpop.trf.xlu0
        %v1047 = vpop.trf.xlu0
        %v1048 = vpop.trf.xlu0
        %v1049 = vpop.trf.xlu0
        %v1050 = vpop.trf.xlu0
        %v1051 = vpop.trf.xlu0
        %v1052 = vpop.trf.xlu0
        %v1053 = vpop.trf.xlu0
        %v1054 = vpop.trf.xlu0
        %v1055 = vpop.trf.xlu0
        %v1056 = vpop.trf.xlu0
        %v1057 = vpop.trf.xlu0
        %v1058 = vpop.trf.xlu0
        %v1059 = vpop.trf.xlu0
        %v1060 = vpop.trf.xlu0
        %1061 = vxpose.xlu0.b32.start [1/16] %v1022, 128
        %1062 = vxpose.xlu0.b32.cont [2/16] 0.0, 128
        %1063 = vxpose.xlu0.b32.cont [3/16] 0.0, 128
        %1064 = vxpose.xlu0.b32.cont [4/16] 0.0, 128
        %1065 = vxpose.xlu0.b32.cont [5/16] 0.0, 128
        %1066 = vxpose.xlu0.b32.cont [6/16] 0.0, 128
        %1067 = vxpose.xlu0.b32.cont [7/16] 0.0, 128
        %1068 = vxpose.xlu0.b32.cont [8/16] 0.0, 128
        %1069 = vxpose.xlu0.b32.cont [9/16] 0.0, 128
        %1070 = vxpose.xlu0.b32.cont [10/16] 0.0, 128
        %1071 = vxpose.xlu0.b32.cont [11/16] 0.0, 128
        %1072 = vxpose.xlu0.b32.cont [12/16] 0.0, 128
        %1073 = vxpose.xlu0.b32.cont [13/16] 0.0, 128
        %1074 = vxpose.xlu0.b32.cont [14/16] 0.0, 128
        %1075 = vxpose.xlu0.b32.cont [15/16] 0.0, 128
        %1076 = vxpose.xlu0.b32.end [16/16] 0.0, 128
        %v1077 = vpop.trf.xlu0
        %v1078 = vpop.trf.xlu0
        %v1079 = vpop.trf.xlu0
        %v1080 = vpop.trf.xlu0
        %v1081 = vpop.trf.xlu0
        %v1082 = vpop.trf.xlu0
        %v1083 = vpop.trf.xlu0
        %v1084 = vpop.trf.xlu0
        %v1085 = vpop.trf.xlu0
        %v1086 = vpop.trf.xlu0
        %v1087 = vpop.trf.xlu0
        %v1088 = vpop.trf.xlu0
        %v1089 = vpop.trf.xlu0
        %v1090 = vpop.trf.xlu0
        %v1091 = vpop.trf.xlu0
        %v1092 = vpop.trf.xlu0
        %1093 = vxpose.xlu0.b32.start [1/16] %v1023, 128
        %1094 = vxpose.xlu0.b32.cont [2/16] 0.0, 128
        %1095 = vxpose.xlu0.b32.cont [3/16] 0.0, 128
        %1096 = vxpose.xlu0.b32.cont [4/16] 0.0, 128
        %1097 = vxpose.xlu0.b32.cont [5/16] 0.0, 128
        %1098 = vxpose.xlu0.b32.cont [6/16] 0.0, 128
        %1099 = vxpose.xlu0.b32.cont [7/16] 0.0, 128
        %1100 = vxpose.xlu0.b32.cont [8/16] 0.0, 128
        %1101 = vxpose.xlu0.b32.cont [9/16] 0.0, 128
        %1102 = vxpose.xlu0.b32.cont [10/16] 0.0, 128
        %1103 = vxpose.xlu0.b32.cont [11/16] 0.0, 128
        %1104 = vxpose.xlu0.b32.cont [12/16] 0.0, 128
        %1105 = vxpose.xlu0.b32.cont [13/16] 0.0, 128
        %1106 = vxpose.xlu0.b32.cont [14/16] 0.0, 128
        %1107 = vxpose.xlu0.b32.cont [15/16] 0.0, 128
        %1108 = vxpose.xlu0.b32.end [16/16] 0.0, 128
        %v1109 = vpop.trf.xlu0
        %v1110 = vpop.trf.xlu0
        %v1111 = vpop.trf.xlu0
        %v1112 = vpop.trf.xlu0
        %v1113 = vpop.trf.xlu0
        %v1114 = vpop.trf.xlu0
        %v1115 = vpop.trf.xlu0
        %v1116 = vpop.trf.xlu0
        %v1117 = vpop.trf.xlu0
        %v1118 = vpop.trf.xlu0
        %v1119 = vpop.trf.xlu0
        %v1120 = vpop.trf.xlu0
        %v1121 = vpop.trf.xlu0
        %v1122 = vpop.trf.xlu0
        %v1123 = vpop.trf.xlu0
        %v1124 = vpop.trf.xlu0
        %1125 = vxpose.xlu0.b32.start [1/16] %v1024, 128
        %1126 = vxpose.xlu0.b32.cont [2/16] 0.0, 128
        %1127 = vxpose.xlu0.b32.cont [3/16] 0.0, 128
        %1128 = vxpose.xlu0.b32.cont [4/16] 0.0, 128
        %1129 = vxpose.xlu0.b32.cont [5/16] 0.0, 128
        %1130 = vxpose.xlu0.b32.cont [6/16] 0.0, 128
        %1131 = vxpose.xlu0.b32.cont [7/16] 0.0, 128
        %1132 = vxpose.xlu0.b32.cont [8/16] 0.0, 128
        %1133 = vxpose.xlu0.b32.cont [9/16] 0.0, 128
        %1134 = vxpose.xlu0.b32.cont [10/16] 0.0, 128
        %1135 = vxpose.xlu0.b32.cont [11/16] 0.0, 128
        %1136 = vxpose.xlu0.b32.cont [12/16] 0.0, 128
        %1137 = vxpose.xlu0.b32.cont [13/16] 0.0, 128
        %1138 = vxpose.xlu0.b32.cont [14/16] 0.0, 128
        %1139 = vxpose.xlu0.b32.cont [15/16] 0.0, 128
        %1140 = vxpose.xlu0.b32.end [16/16] 0.0, 128
        %v1141 = vpop.trf.xlu0
        %v1142 = vpop.trf.xlu0
        %v1143 = vpop.trf.xlu0
        %v1144 = vpop.trf.xlu0
        %v1145 = vpop.trf.xlu0
        %v1146 = vpop.trf.xlu0
        %v1147 = vpop.trf.xlu0
        %v1148 = vpop.trf.xlu0
        %v1149 = vpop.trf.xlu0
        %v1150 = vpop.trf.xlu0
        %v1151 = vpop.trf.xlu0
        %v1152 = vpop.trf.xlu0
        %v1153 = vpop.trf.xlu0
        %v1154 = vpop.trf.xlu0
        %v1155 = vpop.trf.xlu0
        %v1156 = vpop.trf.xlu0
        %1157 = vxpose.xlu0.b32.start [1/16] %v1025, 128
        %1158 = vxpose.xlu0.b32.cont [2/16] 0.0, 128
        %1159 = vxpose.xlu0.b32.cont [3/16] 0.0, 128
        %1160 = vxpose.xlu0.b32.cont [4/16] 0.0, 128
        %1161 = vxpose.xlu0.b32.cont [5/16] 0.0, 128
        %1162 = vxpose.xlu0.b32.cont [6/16] 0.0, 128
        %1163 = vxpose.xlu0.b32.cont [7/16] 0.0, 128
        %1164 = vxpose.xlu0.b32.cont [8/16] 0.0, 128
        %1165 = vxpose.xlu0.b32.cont [9/16] 0.0, 128
        %1166 = vxpose.xlu0.b32.cont [10/16] 0.0, 128
        %1167 = vxpose.xlu0.b32.cont [11/16] 0.0, 128
        %1168 = vxpose.xlu0.b32.cont [12/16] 0.0, 128
        %1169 = vxpose.xlu0.b32.cont [13/16] 0.0, 128
        %1170 = vxpose.xlu0.b32.cont [14/16] 0.0, 128
        %1171 = vxpose.xlu0.b32.cont [15/16] 0.0, 128
        %1172 = vxpose.xlu0.b32.end [16/16] 0.0, 128
        %v1173 = vpop.trf.xlu0
        %v1174 = vpop.trf.xlu0
        %v1175 = vpop.trf.xlu0
        %v1176 = vpop.trf.xlu0
        %v1177 = vpop.trf.xlu0
        %v1178 = vpop.trf.xlu0
        %v1179 = vpop.trf.xlu0
        %v1180 = vpop.trf.xlu0
        %v1181 = vpop.trf.xlu0
        %v1182 = vpop.trf.xlu0
        %v1183 = vpop.trf.xlu0
        %v1184 = vpop.trf.xlu0
        %v1185 = vpop.trf.xlu0
        %v1186 = vpop.trf.xlu0
        %v1187 = vpop.trf.xlu0
        %v1188 = vpop.trf.xlu0
        %1189 = vxpose.xlu0.b32.start [1/16] %v1026, 128
        %1190 = vxpose.xlu0.b32.cont [2/16] 0.0, 128
        %1191 = vxpose.xlu0.b32.cont [3/16] 0.0, 128
        %1192 = vxpose.xlu0.b32.cont [4/16] 0.0, 128
        %1193 = vxpose.xlu0.b32.cont [5/16] 0.0, 128
        %1194 = vxpose.xlu0.b32.cont [6/16] 0.0, 128
        %1195 = vxpose.xlu0.b32.cont [7/16] 0.0, 128
        %1196 = vxpose.xlu0.b32.cont [8/16] 0.0, 128
        %1197 = vxpose.xlu0.b32.cont [9/16] 0.0, 128
        %1198 = vxpose.xlu0.b32.cont [10/16] 0.0, 128
        %1199 = vxpose.xlu0.b32.cont [11/16] 0.0, 128
        %1200 = vxpose.xlu0.b32.cont [12/16] 0.0, 128
        %1201 = vxpose.xlu0.b32.cont [13/16] 0.0, 128
        %1202 = vxpose.xlu0.b32.cont [14/16] 0.0, 128
        %1203 = vxpose.xlu0.b32.cont [15/16] 0.0, 128
        %1204 = vxpose.xlu0.b32.end [16/16] 0.0, 128
        %v1205 = vpop.trf.xlu0
        %v1206 = vpop.trf.xlu0
        %v1207 = vpop.trf.xlu0
        %v1208 = vpop.trf.xlu0
        %v1209 = vpop.trf.xlu0
        %v1210 = vpop.trf.xlu0
        %v1211 = vpop.trf.xlu0
        %v1212 = vpop.trf.xlu0
        %v1213 = vpop.trf.xlu0
        %v1214 = vpop.trf.xlu0
        %v1215 = vpop.trf.xlu0
        %v1216 = vpop.trf.xlu0
        %v1217 = vpop.trf.xlu0
        %v1218 = vpop.trf.xlu0
        %v1219 = vpop.trf.xlu0
        %v1220 = vpop.trf.xlu0
        %1221 = vxpose.xlu0.b32.start [1/16] %v1027, 128
        %1222 = vxpose.xlu0.b32.cont [2/16] 0.0, 128
        %1223 = vxpose.xlu0.b32.cont [3/16] 0.0, 128
        %1224 = vxpose.xlu0.b32.cont [4/16] 0.0, 128
        %1225 = vxpose.xlu0.b32.cont [5/16] 0.0, 128
        %1226 = vxpose.xlu0.b32.cont [6/16] 0.0, 128
        %1227 = vxpose.xlu0.b32.cont [7/16] 0.0, 128
        %1228 = vxpose.xlu0.b32.cont [8/16] 0.0, 128
        %1229 = vxpose.xlu0.b32.cont [9/16] 0.0, 128
        %1230 = vxpose.xlu0.b32.cont [10/16] 0.0, 128
        %1231 = vxpose.xlu0.b32.cont [11/16] 0.0, 128
        %1232 = vxpose.xlu0.b32.cont [12/16] 0.0, 128
        %1233 = vxpose.xlu0.b32.cont [13/16] 0.0, 128
        %1234 = vxpose.xlu0.b32.cont [14/16] 0.0, 128
        %1235 = vxpose.xlu0.b32.cont [15/16] 0.0, 128
        %1236 = vxpose.xlu0.b32.end [16/16] 0.0, 128
        %v1237 = vpop.trf.xlu0
        %v1238 = vpop.trf.xlu0
        %v1239 = vpop.trf.xlu0
        %v1240 = vpop.trf.xlu0
        %v1241 = vpop.trf.xlu0
        %v1242 = vpop.trf.xlu0
        %v1243 = vpop.trf.xlu0
        %v1244 = vpop.trf.xlu0
        %v1245 = vpop.trf.xlu0
        %v1246 = vpop.trf.xlu0
        %v1247 = vpop.trf.xlu0
        %v1248 = vpop.trf.xlu0
        %v1249 = vpop.trf.xlu0
        %v1250 = vpop.trf.xlu0
        %v1251 = vpop.trf.xlu0
        %v1252 = vpop.trf.xlu0
        %1253 = vxpose.xlu0.b32.start [1/16] %v1028, 128
        %1254 = vxpose.xlu0.b32.cont [2/16] 0.0, 128
        %1255 = vxpose.xlu0.b32.cont [3/16] 0.0, 128
        %1256 = vxpose.xlu0.b32.cont [4/16] 0.0, 128
        %1257 = vxpose.xlu0.b32.cont [5/16] 0.0, 128
        %1258 = vxpose.xlu0.b32.cont [6/16] 0.0, 128
        %1259 = vxpose.xlu0.b32.cont [7/16] 0.0, 128
        %1260 = vxpose.xlu0.b32.cont [8/16] 0.0, 128
        %1261 = vxpose.xlu0.b32.cont [9/16] 0.0, 128
        %1262 = vxpose.xlu0.b32.cont [10/16] 0.0, 128
        %1263 = vxpose.xlu0.b32.cont [11/16] 0.0, 128
        %1264 = vxpose.xlu0.b32.cont [12/16] 0.0, 128
        %1265 = vxpose.xlu0.b32.cont [13/16] 0.0, 128
        %1266 = vxpose.xlu0.b32.cont [14/16] 0.0, 128
        %1267 = vxpose.xlu0.b32.cont [15/16] 0.0, 128
        %1268 = vxpose.xlu0.b32.end [16/16] 0.0, 128
        %v1269 = vpop.trf.xlu0
        %v1270 = vpop.trf.xlu0
        %v1271 = vpop.trf.xlu0
        %v1272 = vpop.trf.xlu0
        %v1273 = vpop.trf.xlu0
        %v1274 = vpop.trf.xlu0
        %v1275 = vpop.trf.xlu0
        %v1276 = vpop.trf.xlu0
        %v1277 = vpop.trf.xlu0
        %v1278 = vpop.trf.xlu0
        %v1279 = vpop.trf.xlu0
        %v1280 = vpop.trf.xlu0
        %v1281 = vpop.trf.xlu0
        %v1282 = vpop.trf.xlu0
        %v1283 = vpop.trf.xlu0
        %v1284 = vpop.trf.xlu0
        %v1285 = vcombine.low %v1045, %v1109
        %v1287 = vunpack.c.l.s4 1983009808
        %v1288 = vunpack.c.0.s8 %v1287
        %v1289 = vlaneseq
        %v1290 = vshrl.u32 %v1289, 7
        %v1291 = vsub.s32 %v1288, %v1290
        %v1292 = vrot.slane %v1285, %v1291
        %v1293 = vcombine.low %v1077, %v1141
        %v1295 = vunpack.c.l.s4 1983009808
        %v1296 = vunpack.c.0.s8 %v1295
        %v1297 = vlaneseq
        %v1298 = vshrl.u32 %v1297, 7
        %v1299 = vsub.s32 %v1296, %v1298
        %v1300 = vrot.slane %v1293, %v1299
        %v1301 = vcombine.low %v1173, %v1237
        %v1303 = vunpack.c.l.s4 1983009808
        %v1304 = vunpack.c.0.s8 %v1303
        %v1305 = vlaneseq
        %v1306 = vshrl.u32 %v1305, 7
        %v1307 = vsub.s32 %v1304, %v1306
        %v1308 = vrot.slane %v1301, %v1307
        %v1309 = vcombine.low %v1205, %v1269
        %v1311 = vunpack.c.l.s4 1983009808
        %v1312 = vunpack.c.0.s8 %v1311
        %v1313 = vlaneseq
        %v1314 = vshrl.u32 %v1313, 7
        %v1315 = vsub.s32 %v1312, %v1314
        %v1316 = vrot.slane %v1309, %v1315
        %v1317 = vcombine.low %v1292, %v1300
        %v1318 = vcombine.high %v1292, %v1300
        %v1320 = vunpack.c.l.s4 1934713408
        %v1321 = vunpack.c.0.s8 %v1320
        %v1322 = vlaneseq
        %v1323 = vshrl.u32 %v1322, 7
        %v1324 = vsub.s32 %v1321, %v1323
        %v1325 = vrot.slane %v1317, %v1324
        %v1327 = vunpack.c.l.s4 1934713408
        %v1328 = vunpack.c.0.s8 %v1327
        %v1329 = vlaneseq
        %v1330 = vshrl.u32 %v1329, 7
        %v1331 = vsub.s32 %v1328, %v1330
        %v1332 = vrot.slane %v1318, %v1331
        %v1333 = vcombine.low %v1308, %v1316
        %v1334 = vcombine.high %v1308, %v1316
        %v1336 = vunpack.c.l.s4 1934713408
        %v1337 = vunpack.c.0.s8 %v1336
        %v1338 = vlaneseq
        %v1339 = vshrl.u32 %v1338, 7
        %v1340 = vsub.s32 %v1337, %v1339
        %v1341 = vrot.slane %v1333, %v1340
        %v1343 = vunpack.c.l.s4 1934713408
        %v1344 = vunpack.c.0.s8 %v1343
        %v1345 = vlaneseq
        %v1346 = vshrl.u32 %v1345, 7
        %v1347 = vsub.s32 %v1344, %v1346
        %v1348 = vrot.slane %v1334, %v1347
        %v1349 = vcombine.low %v1325, %v1341
        %v1350 = vcombine.high %v1325, %v1341
        %v1351 = vcombine.low %v1332, %v1348
        %v1352 = vcombine.high %v1332, %v1348
        %vm1353 = vcmask 64512
        %v1355 = vsel %vm1353, %v633, 0
        %1357 = vmatprep.subr.mxu0 0.0
        %1358 = vmatpush1.msra.mxu0 0.0
        %1359 = vmatprep.subr.mxu0 0.0
        %1360 = vmatpush1.msra.mxu0 0.0
        %1361 = vmatprep.subr.mxu0 0.0
        %1362 = vmatpush1.msra.mxu0 0.0
        %1363 = vmatprep.subr.mxu0 0.0
        %1364 = vmatpush1.msra.mxu0 0.0
        %1365 = vmatprep.subr.mxu0 0.0
        %1366 = vmatpush1.msra.mxu0 0.0
        %1367 = vmatprep.subr.mxu0 0.0
        %1368 = vmatpush1.msra.mxu0 0.0
        %1369 = vmatprep.subr.mxu0 0.0
        %1370 = vmatpush1.msra.mxu0 0.0
        %1371 = vmatprep.subr.mxu0 0.0
        %1372 = vmatpush1.msra.mxu0 0.0
        %1373 = vmatprep.subr.mxu0 0.0
        %1374 = vmatpush1.msra.mxu0 0.0
        %1375 = vmatprep.subr.mxu0 0.0
        %1376 = vmatpush1.msra.mxu0 0.0
        %1377 = vmatprep.subr.mxu0 0.0
        %1378 = vmatpush1.msra.mxu0 0.0
        %1379 = vmatprep.subr.mxu0 0.0
        %1380 = vmatpush1.msra.mxu0 0.0
        %1381 = vmatprep.subr.mxu0 0.0
        %1382 = vmatpush1.msra.mxu0 0.0
        %1383 = vmatprep.subr.mxu0 0.0
        %1384 = vmatpush1.msra.mxu0 0.0
        %1385 = vmatprep.subr.mxu0 0.0
        %1386 = vmatpush1.msra.mxu0 0.0
        %1387 = vmatprep.subr.mxu0 0.0
        %1388 = vmatpush1.msra.mxu0 %v1349
        %1389 = vmatprep.subr.mxu0 0.0
        %1390 = vmatpush2.msra.mxu0 0.0
        %1391 = vmatprep.subr.mxu0 0.0
        %1392 = vmatpush2.msra.mxu0 0.0
        %1393 = vmatprep.subr.mxu0 0.0
        %1394 = vmatpush2.msra.mxu0 0.0
        %1395 = vmatprep.subr.mxu0 0.0
        %1396 = vmatpush2.msra.mxu0 0.0
        %1397 = vmatprep.subr.mxu0 0.0
        %1398 = vmatpush2.msra.mxu0 0.0
        %1399 = vmatprep.subr.mxu0 0.0
        %1400 = vmatpush2.msra.mxu0 0.0
        %1401 = vmatprep.subr.mxu0 0.0
        %1402 = vmatpush2.msra.mxu0 0.0
        %1403 = vmatprep.subr.mxu0 0.0
        %1404 = vmatpush2.msra.mxu0 0.0
        %1405 = vmatprep.subr.mxu0 0.0
        %1406 = vmatpush2.msra.mxu0 0.0
        %1407 = vmatprep.subr.mxu0 0.0
        %1408 = vmatpush2.msra.mxu0 0.0
        %1409 = vmatprep.subr.mxu0 0.0
        %1410 = vmatpush2.msra.mxu0 0.0
        %1411 = vmatprep.subr.mxu0 0.0
        %1412 = vmatpush2.msra.mxu0 0.0
        %1413 = vmatprep.subr.mxu0 0.0
        %1414 = vmatpush2.msra.mxu0 0.0
        %1415 = vmatprep.subr.mxu0 0.0
        %1416 = vmatpush2.msra.mxu0 0.0
        %1417 = vmatprep.subr.mxu0 0.0
        %1418 = vmatpush2.msra.mxu0 0.0
        %1419 = vmatprep.subr.mxu0 0.0
        %1420 = vmatpush2.msra.mxu0 0.0
        %1421 = vmatprep.mubr.f32.mxu0 0.0
        %1422 = vmatmul.mubr.f32.gmra.mxu0 %v1355
        %v1423 = vpop.f32.mrf.mxu0
        %v1424 = vadd.f32 0.0, %v1423
        %v1425 = vpop.f32.mrf.mxu0
        %1426 = vdwg.mxu0
        %v1428 = vsel %vm1353, %v634, 0
        %1430 = vmatprep.subr.mxu0 0.0
        %1431 = vmatpush1.msra.mxu0 0.0
        %1432 = vmatprep.subr.mxu0 0.0
        %1433 = vmatpush1.msra.mxu0 0.0
        %1434 = vmatprep.subr.mxu0 0.0
        %1435 = vmatpush1.msra.mxu0 0.0
        %1436 = vmatprep.subr.mxu0 0.0
        %1437 = vmatpush1.msra.mxu0 0.0
        %1438 = vmatprep.subr.mxu0 0.0
        %1439 = vmatpush1.msra.mxu0 0.0
        %1440 = vmatprep.subr.mxu0 0.0
        %1441 = vmatpush1.msra.mxu0 0.0
        %1442 = vmatprep.subr.mxu0 0.0
        %1443 = vmatpush1.msra.mxu0 0.0
        %1444 = vmatprep.subr.mxu0 0.0
        %1445 = vmatpush1.msra.mxu0 0.0
        %1446 = vmatprep.subr.mxu0 0.0
        %1447 = vmatpush1.msra.mxu0 0.0
        %1448 = vmatprep.subr.mxu0 0.0
        %1449 = vmatpush1.msra.mxu0 0.0
        %1450 = vmatprep.subr.mxu0 0.0
        %1451 = vmatpush1.msra.mxu0 0.0
        %1452 = vmatprep.subr.mxu0 0.0
        %1453 = vmatpush1.msra.mxu0 0.0
        %1454 = vmatprep.subr.mxu0 0.0
        %1455 = vmatpush1.msra.mxu0 0.0
        %1456 = vmatprep.subr.mxu0 0.0
        %1457 = vmatpush1.msra.mxu0 0.0
        %1458 = vmatprep.subr.mxu0 0.0
        %1459 = vmatpush1.msra.mxu0 0.0
        %1460 = vmatprep.subr.mxu0 0.0
        %1461 = vmatpush1.msra.mxu0 %v1350
        %1462 = vmatprep.subr.mxu0 0.0
        %1463 = vmatpush2.msra.mxu0 0.0
        %1464 = vmatprep.subr.mxu0 0.0
        %1465 = vmatpush2.msra.mxu0 0.0
        %1466 = vmatprep.subr.mxu0 0.0
        %1467 = vmatpush2.msra.mxu0 0.0
        %1468 = vmatprep.subr.mxu0 0.0
        %1469 = vmatpush2.msra.mxu0 0.0
        %1470 = vmatprep.subr.mxu0 0.0
        %1471 = vmatpush2.msra.mxu0 0.0
        %1472 = vmatprep.subr.mxu0 0.0
        %1473 = vmatpush2.msra.mxu0 0.0
        %1474 = vmatprep.subr.mxu0 0.0
        %1475 = vmatpush2.msra.mxu0 0.0
        %1476 = vmatprep.subr.mxu0 0.0
        %1477 = vmatpush2.msra.mxu0 0.0
        %1478 = vmatprep.subr.mxu0 0.0
        %1479 = vmatpush2.msra.mxu0 0.0
        %1480 = vmatprep.subr.mxu0 0.0
        %1481 = vmatpush2.msra.mxu0 0.0
        %1482 = vmatprep.subr.mxu0 0.0
        %1483 = vmatpush2.msra.mxu0 0.0
        %1484 = vmatprep.subr.mxu0 0.0
        %1485 = vmatpush2.msra.mxu0 0.0
        %1486 = vmatprep.subr.mxu0 0.0
        %1487 = vmatpush2.msra.mxu0 0.0
        %1488 = vmatprep.subr.mxu0 0.0
        %1489 = vmatpush2.msra.mxu0 0.0
        %1490 = vmatprep.subr.mxu0 0.0
        %1491 = vmatpush2.msra.mxu0 0.0
        %1492 = vmatprep.subr.mxu0 0.0
        %1493 = vmatpush2.msra.mxu0 0.0
        %1494 = vmatprep.mubr.f32.mxu0 0.0
        %1495 = vmatmul.mubr.f32.gmra.mxu0 %v1428
        %v1496 = vpop.f32.mrf.mxu0
        %v1497 = vadd.f32 0.0, %v1496
        %v1498 = vpop.f32.mrf.mxu0
        %1499 = vdwg.mxu0
        %v1501 = vsel %vm1353, %v635, 0
        %1503 = vmatprep.subr.mxu0 0.0
        %1504 = vmatpush1.msra.mxu0 0.0
        %1505 = vmatprep.subr.mxu0 0.0
        %1506 = vmatpush1.msra.mxu0 0.0
        %1507 = vmatprep.subr.mxu0 0.0
        %1508 = vmatpush1.msra.mxu0 0.0
        %1509 = vmatprep.subr.mxu0 0.0
        %1510 = vmatpush1.msra.mxu0 0.0
        %1511 = vmatprep.subr.mxu0 0.0
        %1512 = vmatpush1.msra.mxu0 0.0
        %1513 = vmatprep.subr.mxu0 0.0
        %1514 = vmatpush1.msra.mxu0 0.0
        %1515 = vmatprep.subr.mxu0 0.0
        %1516 = vmatpush1.msra.mxu0 0.0
        %1517 = vmatprep.subr.mxu0 0.0
        %1518 = vmatpush1.msra.mxu0 0.0
        %1519 = vmatprep.subr.mxu0 0.0
        %1520 = vmatpush1.msra.mxu0 0.0
        %1521 = vmatprep.subr.mxu0 0.0
        %1522 = vmatpush1.msra.mxu0 0.0
        %1523 = vmatprep.subr.mxu0 0.0
        %1524 = vmatpush1.msra.mxu0 0.0
        %1525 = vmatprep.subr.mxu0 0.0
        %1526 = vmatpush1.msra.mxu0 0.0
        %1527 = vmatprep.subr.mxu0 0.0
        %1528 = vmatpush1.msra.mxu0 0.0
        %1529 = vmatprep.subr.mxu0 0.0
        %1530 = vmatpush1.msra.mxu0 0.0
        %1531 = vmatprep.subr.mxu0 0.0
        %1532 = vmatpush1.msra.mxu0 0.0
        %1533 = vmatprep.subr.mxu0 0.0
        %1534 = vmatpush1.msra.mxu0 %v1351
        %1535 = vmatprep.subr.mxu0 0.0
        %1536 = vmatpush2.msra.mxu0 0.0
        %1537 = vmatprep.subr.mxu0 0.0
        %1538 = vmatpush2.msra.mxu0 0.0
        %1539 = vmatprep.subr.mxu0 0.0
        %1540 = vmatpush2.msra.mxu0 0.0
        %1541 = vmatprep.subr.mxu0 0.0
        %1542 = vmatpush2.msra.mxu0 0.0
        %1543 = vmatprep.subr.mxu0 0.0
        %1544 = vmatpush2.msra.mxu0 0.0
        %1545 = vmatprep.subr.mxu0 0.0
        %1546 = vmatpush2.msra.mxu0 0.0
        %1547 = vmatprep.subr.mxu0 0.0
        %1548 = vmatpush2.msra.mxu0 0.0
        %1549 = vmatprep.subr.mxu0 0.0
        %1550 = vmatpush2.msra.mxu0 0.0
        %1551 = vmatprep.subr.mxu0 0.0
        %1552 = vmatpush2.msra.mxu0 0.0
        %1553 = vmatprep.subr.mxu0 0.0
        %1554 = vmatpush2.msra.mxu0 0.0
        %1555 = vmatprep.subr.mxu0 0.0
        %1556 = vmatpush2.msra.mxu0 0.0
        %1557 = vmatprep.subr.mxu0 0.0
        %1558 = vmatpush2.msra.mxu0 0.0
        %1559 = vmatprep.subr.mxu0 0.0
        %1560 = vmatpush2.msra.mxu0 0.0
        %1561 = vmatprep.subr.mxu0 0.0
        %1562 = vmatpush2.msra.mxu0 0.0
        %1563 = vmatprep.subr.mxu0 0.0
        %1564 = vmatpush2.msra.mxu0 0.0
        %1565 = vmatprep.subr.mxu0 0.0
        %1566 = vmatpush2.msra.mxu0 0.0
        %1567 = vmatprep.mubr.f32.mxu0 0.0
        %1568 = vmatmul.mubr.f32.gmra.mxu0 %v1501
        %v1569 = vpop.f32.mrf.mxu0
        %v1570 = vadd.f32 0.0, %v1569
        %v1571 = vpop.f32.mrf.mxu0
        %1572 = vdwg.mxu0
        %v1574 = vsel %vm1353, %v636, 0
        %1576 = vmatprep.subr.mxu0 0.0
        %1577 = vmatpush1.msra.mxu0 0.0
        %1578 = vmatprep.subr.mxu0 0.0
        %1579 = vmatpush1.msra.mxu0 0.0
        %1580 = vmatprep.subr.mxu0 0.0
        %1581 = vmatpush1.msra.mxu0 0.0
        %1582 = vmatprep.subr.mxu0 0.0
        %1583 = vmatpush1.msra.mxu0 0.0
        %1584 = vmatprep.subr.mxu0 0.0
        %1585 = vmatpush1.msra.mxu0 0.0
        %1586 = vmatprep.subr.mxu0 0.0
        %1587 = vmatpush1.msra.mxu0 0.0
        %1588 = vmatprep.subr.mxu0 0.0
        %1589 = vmatpush1.msra.mxu0 0.0
        %1590 = vmatprep.subr.mxu0 0.0
        %1591 = vmatpush1.msra.mxu0 0.0
        %1592 = vmatprep.subr.mxu0 0.0
        %1593 = vmatpush1.msra.mxu0 0.0
        %1594 = vmatprep.subr.mxu0 0.0
        %1595 = vmatpush1.msra.mxu0 0.0
        %1596 = vmatprep.subr.mxu0 0.0
        %1597 = vmatpush1.msra.mxu0 0.0
        %1598 = vmatprep.subr.mxu0 0.0
        %1599 = vmatpush1.msra.mxu0 0.0
        %1600 = vmatprep.subr.mxu0 0.0
        %1601 = vmatpush1.msra.mxu0 0.0
        %1602 = vmatprep.subr.mxu0 0.0
        %1603 = vmatpush1.msra.mxu0 0.0
        %1604 = vmatprep.subr.mxu0 0.0
        %1605 = vmatpush1.msra.mxu0 0.0
        %1606 = vmatprep.subr.mxu0 0.0
        %1607 = vmatpush1.msra.mxu0 %v1352
        %1608 = vmatprep.subr.mxu0 0.0
        %1609 = vmatpush2.msra.mxu0 0.0
        %1610 = vmatprep.subr.mxu0 0.0
        %1611 = vmatpush2.msra.mxu0 0.0
        %1612 = vmatprep.subr.mxu0 0.0
        %1613 = vmatpush2.msra.mxu0 0.0
        %1614 = vmatprep.subr.mxu0 0.0
        %1615 = vmatpush2.msra.mxu0 0.0
        %1616 = vmatprep.subr.mxu0 0.0
        %1617 = vmatpush2.msra.mxu0 0.0
        %1618 = vmatprep.subr.mxu0 0.0
        %1619 = vmatpush2.msra.mxu0 0.0
        %1620 = vmatprep.subr.mxu0 0.0
        %1621 = vmatpush2.msra.mxu0 0.0
        %1622 = vmatprep.subr.mxu0 0.0
        %1623 = vmatpush2.msra.mxu0 0.0
        %1624 = vmatprep.subr.mxu0 0.0
        %1625 = vmatpush2.msra.mxu0 0.0
        %1626 = vmatprep.subr.mxu0 0.0
        %1627 = vmatpush2.msra.mxu0 0.0
        %1628 = vmatprep.subr.mxu0 0.0
        %1629 = vmatpush2.msra.mxu0 0.0
        %1630 = vmatprep.subr.mxu0 0.0
        %1631 = vmatpush2.msra.mxu0 0.0
        %1632 = vmatprep.subr.mxu0 0.0
        %1633 = vmatpush2.msra.mxu0 0.0
        %1634 = vmatprep.subr.mxu0 0.0
        %1635 = vmatpush2.msra.mxu0 0.0
        %1636 = vmatprep.subr.mxu0 0.0
        %1637 = vmatpush2.msra.mxu0 0.0
        %1638 = vmatprep.subr.mxu0 0.0
        %1639 = vmatpush2.msra.mxu0 0.0
        %1640 = vmatprep.mubr.f32.mxu0 0.0
        %1641 = vmatmul.mubr.f32.gmra.mxu0 %v1574
        %v1642 = vpop.f32.mrf.mxu0
        %v1643 = vadd.f32 0.0, %v1642
        %v1644 = vpop.f32.mrf.mxu0
        %1645 = vdwg.mxu0
        %v1646 = vld [vmem:[#allocation2] sm:$0xff]
        %v1647 = vld [vmem:[#allocation2 + $0x8] sm:$0xff]
        %v1648 = vld [vmem:[#allocation2 + $0x10] sm:$0xff]
        %v1649 = vld [vmem:[#allocation2 + $0x18] sm:$0xff]
        %v1650 = vsel %vm1353, %v1424, -inf
        %1651 = vmax.xlane.f32.xlu0 %v1650
        %v1652 = vpop.xlane.xlu0 %1651
        %v1653 = vsel %vm1353, %v1497, -inf
        %1654 = vmax.xlane.f32.xlu0 %v1653
        %v1655 = vpop.xlane.xlu0 %1654
        %v1656 = vsel %vm1353, %v1570, -inf
        %1657 = vmax.xlane.f32.xlu0 %v1656
        %v1658 = vpop.xlane.xlu0 %1657
        %v1659 = vsel %vm1353, %v1643, -inf
        %1660 = vmax.xlane.f32.xlu0 %v1659
        %v1661 = vpop.xlane.xlu0 %1660
        %v1662 = vmax.f32 %v1646, %v1652
        %v1663 = vmax.f32 %v1647, %v1655
        %v1664 = vmax.f32 %v1648, %v1658
        %v1665 = vmax.f32 %v1649, %v1661
        %v1666 = vsub.f32 %v1646, %v1662
        %v1667 = vsub.f32 %v1647, %v1663
        %v1668 = vsub.f32 %v1648, %v1664
        %v1669 = vsub.f32 %v1649, %v1665
        %v1670 = vmul.f32 %v1666, 1.442695
        %v1671 = vpow.pop %v1670
        %v1672 = vmul.f32 %v1667, 1.442695
        %v1673 = vpow.pop %v1672
        %v1674 = vmul.f32 %v1668, 1.442695
        %v1675 = vpow.pop %v1674
        %v1676 = vmul.f32 %v1669, 1.442695
        %v1677 = vpow.pop %v1676
        %1679 = vset.pattern.permute.xlu0 0
        %1680 = vperm.xlu0 %1679, %v1662
        %v1681 = vpop.permute.xlu0 %1680
        %1684 = vset.pattern.permute.xlu0 0
        %1685 = vperm.xlu0 %1684, %v1663
        %v1686 = vpop.permute.xlu0 %1685
        %1689 = vset.pattern.permute.xlu0 0
        %1690 = vperm.xlu0 %1689, %v1664
        %v1691 = vpop.permute.xlu0 %1690
        %1694 = vset.pattern.permute.xlu0 0
        %1695 = vperm.xlu0 %1694, %v1665
        %v1696 = vpop.permute.xlu0 %1695
        %v1698 = vsub.f32 %v1424, %v1681
        %v1699 = vsub.f32 %v1497, %v1686
        %v1700 = vsub.f32 %v1570, %v1691
        %v1701 = vsub.f32 %v1643, %v1696
        %v1702 = vmul.f32 %v1698, 1.442695
        %v1703 = vpow.pop %v1702
        %v1704 = vmul.f32 %v1699, 1.442695
        %v1705 = vpow.pop %v1704
        %v1706 = vmul.f32 %v1700, 1.442695
        %v1707 = vpow.pop %v1706
        %v1708 = vmul.f32 %v1701, 1.442695
        %v1709 = vpow.pop %v1708
        %v1710 = vld [vmem:[#allocation3] sm:$0xff]
        %v1711 = vld [vmem:[#allocation3 + $0x8] sm:$0xff]
        %v1712 = vld [vmem:[#allocation3 + $0x10] sm:$0xff]
        %v1713 = vld [vmem:[#allocation3 + $0x18] sm:$0xff]
        %v1714 = vmul.f32 %v1671, %v1710
        %v1715 = vmul.f32 %v1673, %v1711
        %v1716 = vmul.f32 %v1675, %v1712
        %v1717 = vmul.f32 %v1677, %v1713
        %v1718 = vsel %vm1353, %v1703, 0.0
        %1719 = vadd.xlane.f32.xlu0 %v1718
        %v1720 = vpop.xlane.xlu0 %1719
        %v1721 = vsel %vm1353, %v1705, 0.0
        %1722 = vadd.xlane.f32.xlu0 %v1721
        %v1723 = vpop.xlane.xlu0 %1722
        %v1724 = vsel %vm1353, %v1707, 0.0
        %1725 = vadd.xlane.f32.xlu0 %v1724
        %v1726 = vpop.xlane.xlu0 %1725
        %v1727 = vsel %vm1353, %v1709, 0.0
        %1728 = vadd.xlane.f32.xlu0 %v1727
        %v1729 = vpop.xlane.xlu0 %1728
        %v1730 = vadd.f32 %v1714, %v1720
        %v1731 = vadd.f32 %v1715, %v1723
        %v1732 = vadd.f32 %v1716, %v1726
        %v1733 = vadd.f32 %v1717, %v1729
        %vm1734 = vcmask 7168
        %1735 = vst.msk [vmem:[#allocation3] sm:$0xff] %vm1734, %v1730
        %1736 = vst.msk [vmem:[#allocation3 + $0x8] sm:$0xff] %vm1734, %v1731
        %1737 = vst.msk [vmem:[#allocation3 + $0x10] sm:$0xff] %vm1734, %v1732
        %1738 = vst.msk [vmem:[#allocation3 + $0x18] sm:$0xff] %vm1734, %v1733
        %v1739 = vcombine.low %v541, %v548
        %v1741 = vunpack.c.l.s4 1983009808
        %v1742 = vunpack.c.0.s8 %v1741
        %v1743 = vlaneseq
        %v1744 = vshrl.u32 %v1743, 7
        %v1745 = vsub.s32 %v1742, %v1744
        %v1746 = vrot.slane %v1739, %v1745
        %v1747 = vcombine.low %v565, %v566
        %v1749 = vunpack.c.l.s4 1983009808
        %v1750 = vunpack.c.0.s8 %v1749
        %v1751 = vlaneseq
        %v1752 = vshrl.u32 %v1751, 7
        %v1753 = vsub.s32 %v1750, %v1752
        %v1754 = vrot.slane %v1747, %v1753
        %v1755 = vcombine.low %v557, %v564
        %v1757 = vunpack.c.l.s4 1983009808
        %v1758 = vunpack.c.0.s8 %v1757
        %v1759 = vlaneseq
        %v1760 = vshrl.u32 %v1759, 7
        %v1761 = vsub.s32 %v1758, %v1760
        %v1762 = vrot.slane %v1755, %v1761
        %v1763 = vcombine.low %v567, %v568
        %v1765 = vunpack.c.l.s4 1983009808
        %v1766 = vunpack.c.0.s8 %v1765
        %v1767 = vlaneseq
        %v1768 = vshrl.u32 %v1767, 7
        %v1769 = vsub.s32 %v1766, %v1768
        %v1770 = vrot.slane %v1763, %v1769
        %v1771 = vcombine.low %v1746, %v1754
        %v1772 = vcombine.high %v1746, %v1754
        %v1774 = vunpack.c.l.s4 1934713408
        %v1775 = vunpack.c.0.s8 %v1774
        %v1776 = vlaneseq
        %v1777 = vshrl.u32 %v1776, 7
        %v1778 = vsub.s32 %v1775, %v1777
        %v1779 = vrot.slane %v1771, %v1778
        %v1781 = vunpack.c.l.s4 1934713408
        %v1782 = vunpack.c.0.s8 %v1781
        %v1783 = vlaneseq
        %v1784 = vshrl.u32 %v1783, 7
        %v1785 = vsub.s32 %v1782, %v1784
        %v1786 = vrot.slane %v1772, %v1785
        %v1787 = vcombine.low %v1762, %v1770
        %v1788 = vcombine.high %v1762, %v1770
        %v1790 = vunpack.c.l.s4 1934713408
        %v1791 = vunpack.c.0.s8 %v1790
        %v1792 = vlaneseq
        %v1793 = vshrl.u32 %v1792, 7
        %v1794 = vsub.s32 %v1791, %v1793
        %v1795 = vrot.slane %v1787, %v1794
        %v1797 = vunpack.c.l.s4 1934713408
        %v1798 = vunpack.c.0.s8 %v1797
        %v1799 = vlaneseq
        %v1800 = vshrl.u32 %v1799, 7
        %v1801 = vsub.s32 %v1798, %v1800
        %v1802 = vrot.slane %v1788, %v1801
        %v1803 = vcombine.low %v1779, %v1795
        %v1804 = vcombine.high %v1779, %v1795
        %v1805 = vcombine.low %v1786, %v1802
        %v1806 = vcombine.high %v1786, %v1802
        %v1808 = vsel %vm1353, %v1703, 0
        %1810 = vmatprep.subr.mxu0 0.0
        %1811 = vmatpush1.msra.mxu0 0.0
        %1812 = vmatprep.subr.mxu0 0.0
        %1813 = vmatpush1.msra.mxu0 0.0
        %1814 = vmatprep.subr.mxu0 0.0
        %1815 = vmatpush1.msra.mxu0 0.0
        %1816 = vmatprep.subr.mxu0 0.0
        %1817 = vmatpush1.msra.mxu0 0.0
        %1818 = vmatprep.subr.mxu0 0.0
        %1819 = vmatpush1.msra.mxu0 0.0
        %1820 = vmatprep.subr.mxu0 0.0
        %1821 = vmatpush1.msra.mxu0 0.0
        %1822 = vmatprep.subr.mxu0 0.0
        %1823 = vmatpush1.msra.mxu0 0.0
        %1824 = vmatprep.subr.mxu0 0.0
        %1825 = vmatpush1.msra.mxu0 0.0
        %1826 = vmatprep.subr.mxu0 0.0
        %1827 = vmatpush1.msra.mxu0 0.0
        %1828 = vmatprep.subr.mxu0 0.0
        %1829 = vmatpush1.msra.mxu0 0.0
        %1830 = vmatprep.subr.mxu0 0.0
        %1831 = vmatpush1.msra.mxu0 0.0
        %1832 = vmatprep.subr.mxu0 0.0
        %1833 = vmatpush1.msra.mxu0 0.0
        %1834 = vmatprep.subr.mxu0 0.0
        %1835 = vmatpush1.msra.mxu0 0.0
        %1836 = vmatprep.subr.mxu0 0.0
        %1837 = vmatpush1.msra.mxu0 0.0
        %1838 = vmatprep.subr.mxu0 0.0
        %1839 = vmatpush1.msra.mxu0 0.0
        %1840 = vmatprep.subr.mxu0 0.0
        %1841 = vmatpush1.msra.mxu0 %v1803
        %1842 = vmatprep.subr.mxu0 0.0
        %1843 = vmatpush2.msra.mxu0 0.0
        %1844 = vmatprep.subr.mxu0 0.0
        %1845 = vmatpush2.msra.mxu0 0.0
        %1846 = vmatprep.subr.mxu0 0.0
        %1847 = vmatpush2.msra.mxu0 0.0
        %1848 = vmatprep.subr.mxu0 0.0
        %1849 = vmatpush2.msra.mxu0 0.0
        %1850 = vmatprep.subr.mxu0 0.0
        %1851 = vmatpush2.msra.mxu0 0.0
        %1852 = vmatprep.subr.mxu0 0.0
        %1853 = vmatpush2.msra.mxu0 0.0
        %1854 = vmatprep.subr.mxu0 0.0
        %1855 = vmatpush2.msra.mxu0 0.0
        %1856 = vmatprep.subr.mxu0 0.0
        %1857 = vmatpush2.msra.mxu0 0.0
        %1858 = vmatprep.subr.mxu0 0.0
        %1859 = vmatpush2.msra.mxu0 0.0
        %1860 = vmatprep.subr.mxu0 0.0
        %1861 = vmatpush2.msra.mxu0 0.0
        %1862 = vmatprep.subr.mxu0 0.0
        %1863 = vmatpush2.msra.mxu0 0.0
        %1864 = vmatprep.subr.mxu0 0.0
        %1865 = vmatpush2.msra.mxu0 0.0
        %1866 = vmatprep.subr.mxu0 0.0
        %1867 = vmatpush2.msra.mxu0 0.0
        %1868 = vmatprep.subr.mxu0 0.0
        %1869 = vmatpush2.msra.mxu0 0.0
        %1870 = vmatprep.subr.mxu0 0.0
        %1871 = vmatpush2.msra.mxu0 0.0
        %1872 = vmatprep.subr.mxu0 0.0
        %1873 = vmatpush2.msra.mxu0 0.0
        %1874 = vmatprep.mubr.f32.mxu0 0.0
        %1875 = vmatmul.mubr.f32.gmra.mxu0 %v1808
        %v1876 = vpop.f32.mrf.mxu0
        %v1877 = vadd.f32 0.0, %v1876
        %v1878 = vpop.f32.mrf.mxu0
        %1879 = vdwg.mxu0
        %v1881 = vsel %vm1353, %v1705, 0
        %1883 = vmatprep.subr.mxu0 0.0
        %1884 = vmatpush1.msra.mxu0 0.0
        %1885 = vmatprep.subr.mxu0 0.0
        %1886 = vmatpush1.msra.mxu0 0.0
        %1887 = vmatprep.subr.mxu0 0.0
        %1888 = vmatpush1.msra.mxu0 0.0
        %1889 = vmatprep.subr.mxu0 0.0
        %1890 = vmatpush1.msra.mxu0 0.0
        %1891 = vmatprep.subr.mxu0 0.0
        %1892 = vmatpush1.msra.mxu0 0.0
        %1893 = vmatprep.subr.mxu0 0.0
        %1894 = vmatpush1.msra.mxu0 0.0
        %1895 = vmatprep.subr.mxu0 0.0
        %1896 = vmatpush1.msra.mxu0 0.0
        %1897 = vmatprep.subr.mxu0 0.0
        %1898 = vmatpush1.msra.mxu0 0.0
        %1899 = vmatprep.subr.mxu0 0.0
        %1900 = vmatpush1.msra.mxu0 0.0
        %1901 = vmatprep.subr.mxu0 0.0
        %1902 = vmatpush1.msra.mxu0 0.0
        %1903 = vmatprep.subr.mxu0 0.0
        %1904 = vmatpush1.msra.mxu0 0.0
        %1905 = vmatprep.subr.mxu0 0.0
        %1906 = vmatpush1.msra.mxu0 0.0
        %1907 = vmatprep.subr.mxu0 0.0
        %1908 = vmatpush1.msra.mxu0 0.0
        %1909 = vmatprep.subr.mxu0 0.0
        %1910 = vmatpush1.msra.mxu0 0.0
        %1911 = vmatprep.subr.mxu0 0.0
        %1912 = vmatpush1.msra.mxu0 0.0
        %1913 = vmatprep.subr.mxu0 0.0
        %1914 = vmatpush1.msra.mxu0 %v1804
        %1915 = vmatprep.subr.mxu0 0.0
        %1916 = vmatpush2.msra.mxu0 0.0
        %1917 = vmatprep.subr.mxu0 0.0
        %1918 = vmatpush2.msra.mxu0 0.0
        %1919 = vmatprep.subr.mxu0 0.0
        %1920 = vmatpush2.msra.mxu0 0.0
        %1921 = vmatprep.subr.mxu0 0.0
        %1922 = vmatpush2.msra.mxu0 0.0
        %1923 = vmatprep.subr.mxu0 0.0
        %1924 = vmatpush2.msra.mxu0 0.0
        %1925 = vmatprep.subr.mxu0 0.0
        %1926 = vmatpush2.msra.mxu0 0.0
        %1927 = vmatprep.subr.mxu0 0.0
        %1928 = vmatpush2.msra.mxu0 0.0
        %1929 = vmatprep.subr.mxu0 0.0
        %1930 = vmatpush2.msra.mxu0 0.0
        %1931 = vmatprep.subr.mxu0 0.0
        %1932 = vmatpush2.msra.mxu0 0.0
        %1933 = vmatprep.subr.mxu0 0.0
        %1934 = vmatpush2.msra.mxu0 0.0
        %1935 = vmatprep.subr.mxu0 0.0
        %1936 = vmatpush2.msra.mxu0 0.0
        %1937 = vmatprep.subr.mxu0 0.0
        %1938 = vmatpush2.msra.mxu0 0.0
        %1939 = vmatprep.subr.mxu0 0.0
        %1940 = vmatpush2.msra.mxu0 0.0
        %1941 = vmatprep.subr.mxu0 0.0
        %1942 = vmatpush2.msra.mxu0 0.0
        %1943 = vmatprep.subr.mxu0 0.0
        %1944 = vmatpush2.msra.mxu0 0.0
        %1945 = vmatprep.subr.mxu0 0.0
        %1946 = vmatpush2.msra.mxu0 0.0
        %1947 = vmatprep.mubr.f32.mxu0 0.0
        %1948 = vmatmul.mubr.f32.gmra.mxu0 %v1881
        %v1949 = vpop.f32.mrf.mxu0
        %v1950 = vadd.f32 0.0, %v1949
        %v1951 = vpop.f32.mrf.mxu0
        %1952 = vdwg.mxu0
        %v1954 = vsel %vm1353, %v1707, 0
        %1956 = vmatprep.subr.mxu0 0.0
        %1957 = vmatpush1.msra.mxu0 0.0
        %1958 = vmatprep.subr.mxu0 0.0
        %1959 = vmatpush1.msra.mxu0 0.0
        %1960 = vmatprep.subr.mxu0 0.0
        %1961 = vmatpush1.msra.mxu0 0.0
        %1962 = vmatprep.subr.mxu0 0.0
        %1963 = vmatpush1.msra.mxu0 0.0
        %1964 = vmatprep.subr.mxu0 0.0
        %1965 = vmatpush1.msra.mxu0 0.0
        %1966 = vmatprep.subr.mxu0 0.0
        %1967 = vmatpush1.msra.mxu0 0.0
        %1968 = vmatprep.subr.mxu0 0.0
        %1969 = vmatpush1.msra.mxu0 0.0
        %1970 = vmatprep.subr.mxu0 0.0
        %1971 = vmatpush1.msra.mxu0 0.0
        %1972 = vmatprep.subr.mxu0 0.0
        %1973 = vmatpush1.msra.mxu0 0.0
        %1974 = vmatprep.subr.mxu0 0.0
        %1975 = vmatpush1.msra.mxu0 0.0
        %1976 = vmatprep.subr.mxu0 0.0
        %1977 = vmatpush1.msra.mxu0 0.0
        %1978 = vmatprep.subr.mxu0 0.0
        %1979 = vmatpush1.msra.mxu0 0.0
        %1980 = vmatprep.subr.mxu0 0.0
        %1981 = vmatpush1.msra.mxu0 0.0
        %1982 = vmatprep.subr.mxu0 0.0
        %1983 = vmatpush1.msra.mxu0 0.0
        %1984 = vmatprep.subr.mxu0 0.0
        %1985 = vmatpush1.msra.mxu0 0.0
        %1986 = vmatprep.subr.mxu0 0.0
        %1987 = vmatpush1.msra.mxu0 %v1805
        %1988 = vmatprep.subr.mxu0 0.0
        %1989 = vmatpush2.msra.mxu0 0.0
        %1990 = vmatprep.subr.mxu0 0.0
        %1991 = vmatpush2.msra.mxu0 0.0
        %1992 = vmatprep.subr.mxu0 0.0
        %1993 = vmatpush2.msra.mxu0 0.0
        %1994 = vmatprep.subr.mxu0 0.0
        %1995 = vmatpush2.msra.mxu0 0.0
        %1996 = vmatprep.subr.mxu0 0.0
        %1997 = vmatpush2.msra.mxu0 0.0
        %1998 = vmatprep.subr.mxu0 0.0
        %1999 = vmatpush2.msra.mxu0 0.0
        %2000 = vmatprep.subr.mxu0 0.0
        %2001 = vmatpush2.msra.mxu0 0.0
        %2002 = vmatprep.subr.mxu0 0.0
        %2003 = vmatpush2.msra.mxu0 0.0
        %2004 = vmatprep.subr.mxu0 0.0
        %2005 = vmatpush2.msra.mxu0 0.0
        %2006 = vmatprep.subr.mxu0 0.0
        %2007 = vmatpush2.msra.mxu0 0.0
        %2008 = vmatprep.subr.mxu0 0.0
        %2009 = vmatpush2.msra.mxu0 0.0
        %2010 = vmatprep.subr.mxu0 0.0
        %2011 = vmatpush2.msra.mxu0 0.0
        %2012 = vmatprep.subr.mxu0 0.0
        %2013 = vmatpush2.msra.mxu0 0.0
        %2014 = vmatprep.subr.mxu0 0.0
        %2015 = vmatpush2.msra.mxu0 0.0
        %2016 = vmatprep.subr.mxu0 0.0
        %2017 = vmatpush2.msra.mxu0 0.0
        %2018 = vmatprep.subr.mxu0 0.0
        %2019 = vmatpush2.msra.mxu0 0.0
        %2020 = vmatprep.mubr.f32.mxu0 0.0
        %2021 = vmatmul.mubr.f32.gmra.mxu0 %v1954
        %v2022 = vpop.f32.mrf.mxu0
        %v2023 = vadd.f32 0.0, %v2022
        %v2024 = vpop.f32.mrf.mxu0
        %2025 = vdwg.mxu0
        %v2027 = vsel %vm1353, %v1709, 0
        %2029 = vmatprep.subr.mxu0 0.0
        %2030 = vmatpush1.msra.mxu0 0.0
        %2031 = vmatprep.subr.mxu0 0.0
        %2032 = vmatpush1.msra.mxu0 0.0
        %2033 = vmatprep.subr.mxu0 0.0
        %2034 = vmatpush1.msra.mxu0 0.0
        %2035 = vmatprep.subr.mxu0 0.0
        %2036 = vmatpush1.msra.mxu0 0.0
        %2037 = vmatprep.subr.mxu0 0.0
        %2038 = vmatpush1.msra.mxu0 0.0
        %2039 = vmatprep.subr.mxu0 0.0
        %2040 = vmatpush1.msra.mxu0 0.0
        %2041 = vmatprep.subr.mxu0 0.0
        %2042 = vmatpush1.msra.mxu0 0.0
        %2043 = vmatprep.subr.mxu0 0.0
        %2044 = vmatpush1.msra.mxu0 0.0
        %2045 = vmatprep.subr.mxu0 0.0
        %2046 = vmatpush1.msra.mxu0 0.0
        %2047 = vmatprep.subr.mxu0 0.0
        %2048 = vmatpush1.msra.mxu0 0.0
        %2049 = vmatprep.subr.mxu0 0.0
        %2050 = vmatpush1.msra.mxu0 0.0
        %2051 = vmatprep.subr.mxu0 0.0
        %2052 = vmatpush1.msra.mxu0 0.0
        %2053 = vmatprep.subr.mxu0 0.0
        %2054 = vmatpush1.msra.mxu0 0.0
        %2055 = vmatprep.subr.mxu0 0.0
        %2056 = vmatpush1.msra.mxu0 0.0
        %2057 = vmatprep.subr.mxu0 0.0
        %2058 = vmatpush1.msra.mxu0 0.0
        %2059 = vmatprep.subr.mxu0 0.0
        %2060 = vmatpush1.msra.mxu0 %v1806
        %2061 = vmatprep.subr.mxu0 0.0
        %2062 = vmatpush2.msra.mxu0 0.0
        %2063 = vmatprep.subr.mxu0 0.0
        %2064 = vmatpush2.msra.mxu0 0.0
        %2065 = vmatprep.subr.mxu0 0.0
        %2066 = vmatpush2.msra.mxu0 0.0
        %2067 = vmatprep.subr.mxu0 0.0
        %2068 = vmatpush2.msra.mxu0 0.0
        %2069 = vmatprep.subr.mxu0 0.0
        %2070 = vmatpush2.msra.mxu0 0.0
        %2071 = vmatprep.subr.mxu0 0.0
        %2072 = vmatpush2.msra.mxu0 0.0
        %2073 = vmatprep.subr.mxu0 0.0
        %2074 = vmatpush2.msra.mxu0 0.0
        %2075 = vmatprep.subr.mxu0 0.0
        %2076 = vmatpush2.msra.mxu0 0.0
        %2077 = vmatprep.subr.mxu0 0.0
        %2078 = vmatpush2.msra.mxu0 0.0
        %2079 = vmatprep.subr.mxu0 0.0
        %2080 = vmatpush2.msra.mxu0 0.0
        %2081 = vmatprep.subr.mxu0 0.0
        %2082 = vmatpush2.msra.mxu0 0.0
        %2083 = vmatprep.subr.mxu0 0.0
        %2084 = vmatpush2.msra.mxu0 0.0
        %2085 = vmatprep.subr.mxu0 0.0
        %2086 = vmatpush2.msra.mxu0 0.0
        %2087 = vmatprep.subr.mxu0 0.0
        %2088 = vmatpush2.msra.mxu0 0.0
        %2089 = vmatprep.subr.mxu0 0.0
        %2090 = vmatpush2.msra.mxu0 0.0
        %2091 = vmatprep.subr.mxu0 0.0
        %2092 = vmatpush2.msra.mxu0 0.0
        %2093 = vmatprep.mubr.f32.mxu0 0.0
        %2094 = vmatmul.mubr.f32.gmra.mxu0 %v2027
        %v2095 = vpop.f32.mrf.mxu0
        %v2096 = vadd.f32 0.0, %v2095
        %v2097 = vpop.f32.mrf.mxu0
        %2098 = vdwg.mxu0
        %v2099 = vld [vmem:[#allocation4] sm:$0xff]
        %v2100 = vld [vmem:[#allocation4 + $0x8] sm:$0xff]
        %v2101 = vld [vmem:[#allocation4 + $0x10] sm:$0xff]
        %v2102 = vld [vmem:[#allocation4 + $0x18] sm:$0xff]
        %2104 = vset.pattern.permute.xlu0 0
        %2105 = vperm.xlu0 %2104, %v1671
        %v2106 = vpop.permute.xlu0 %2105
        %2109 = vset.pattern.permute.xlu0 0
        %2110 = vperm.xlu0 %2109, %v1673
        %v2111 = vpop.permute.xlu0 %2110
        %2114 = vset.pattern.permute.xlu0 0
        %2115 = vperm.xlu0 %2114, %v1675
        %v2116 = vpop.permute.xlu0 %2115
        %2119 = vset.pattern.permute.xlu0 0
        %2120 = vperm.xlu0 %2119, %v1677
        %v2121 = vpop.permute.xlu0 %2120
        %v2123 = vmul.f32 %v2106, %v2099
        %v2124 = vmul.f32 %v2111, %v2100
        %v2125 = vmul.f32 %v2116, %v2101
        %v2126 = vmul.f32 %v2121, %v2102
        %v2127 = vadd.f32 %v2123, %v1877
        %v2128 = vadd.f32 %v2124, %v1950
        %v2129 = vadd.f32 %v2125, %v2023
        %v2130 = vadd.f32 %v2126, %v2096
        %2131 = vst.msk [vmem:[#allocation4] sm:$0xff] %vm1353, %v2127
        %2132 = vst.msk [vmem:[#allocation4 + $0x8] sm:$0xff] %vm1353, %v2128
        %2133 = vst.msk [vmem:[#allocation4 + $0x10] sm:$0xff] %vm1353, %v2129
        %2134 = vst.msk [vmem:[#allocation4 + $0x18] sm:$0xff] %vm1353, %v2130
        %2135 = vst.msk [vmem:[#allocation2] sm:$0xff] %vm1734, %v1662
        %2136 = vst.msk [vmem:[#allocation2 + $0x8] sm:$0xff] %vm1734, %v1663
        %2137 = vst.msk [vmem:[#allocation2 + $0x10] sm:$0xff] %vm1734, %v1664
        %2138 = vst.msk [vmem:[#allocation2 + $0x18] sm:$0xff] %vm1734, %v1665
        // Predicated region
        $region45: #{multi_head_attention.3} parent=39 // pred_check
          %p2139 = pneg %p314
        $region46: #{multi_head_attention.3} parent=39 // pred_check_branch
          %2141 = sbr.rel (%p2139) target = $region48
        $region47: #{multi_head_attention.3} parent=39 // pred_region
          %v2142 = vld [vmem:[#allocation3] sm:$0xff]
          %v2143 = vld [vmem:[#allocation3 + $0x8] sm:$0xff]
          %v2144 = vld [vmem:[#allocation3 + $0x10] sm:$0xff]
          %v2145 = vld [vmem:[#allocation3 + $0x18] sm:$0xff]
          %v2146 = vrcp.pop %v2142
          %v2147 = vrcp.pop %v2143
          %v2148 = vrcp.pop %v2144
          %v2149 = vrcp.pop %v2145
          %v2150 = vld [vmem:[#allocation4] sm:$0xff]
          %v2151 = vld [vmem:[#allocation4 + $0x8] sm:$0xff]
          %v2152 = vld [vmem:[#allocation4 + $0x10] sm:$0xff]
          %v2153 = vld [vmem:[#allocation4 + $0x18] sm:$0xff]
          %2155 = vset.pattern.permute.xlu0 0
          %2156 = vperm.xlu0 %2155, %v2146
          %v2157 = vpop.permute.xlu0 %2156
          %2160 = vset.pattern.permute.xlu0 0
          %2161 = vperm.xlu0 %2160, %v2147
          %v2162 = vpop.permute.xlu0 %2161
          %2165 = vset.pattern.permute.xlu0 0
          %2166 = vperm.xlu0 %2165, %v2148
          %v2167 = vpop.permute.xlu0 %2166
          %2170 = vset.pattern.permute.xlu0 0
          %2171 = vperm.xlu0 %2170, %v2149
          %v2172 = vpop.permute.xlu0 %2171
          %v2174 = vmul.f32 %v2150, %v2157
          %v2175 = vmul.f32 %v2151, %v2162
          %v2176 = vmul.f32 %v2152, %v2167
          %v2177 = vmul.f32 %v2153, %v2172
          %v2178 = vld [vmem:[%s3] sm:$0xff]
          %s2179 = scalar_lea.vmem %s3, 8
          %v2180 = vld [vmem:[%s2179] sm:$0xff]
          %v2182 = vsel %vm1353, %v2175, 0
          %2184 = vmatprep.subr.mxu0 0.0
          %2185 = vmatpush1.msra.mxu0 0.0
          %2186 = vmatprep.subr.mxu0 0.0
          %2187 = vmatpush1.msra.mxu0 0.0
          %2188 = vmatprep.subr.mxu0 0.0
          %2189 = vmatpush1.msra.mxu0 0.0
          %2190 = vmatprep.subr.mxu0 0.0
          %2191 = vmatpush1.msra.mxu0 0.0
          %2192 = vmatprep.subr.mxu0 0.0
          %2193 = vmatpush1.msra.mxu0 0.0
          %2194 = vmatprep.subr.mxu0 0.0
          %2195 = vmatpush1.msra.mxu0 0.0
          %2196 = vmatprep.subr.mxu0 0.0
          %2197 = vmatpush1.msra.mxu0 0.0
          %2198 = vmatprep.subr.mxu0 0.0
          %2199 = vmatpush1.msra.mxu0 0.0
          %2200 = vmatprep.subr.mxu0 0.0
          %2201 = vmatpush1.msra.mxu0 0.0
          %2202 = vmatprep.subr.mxu0 0.0
          %2203 = vmatpush1.msra.mxu0 0.0
          %2204 = vmatprep.subr.mxu0 0.0
          %2205 = vmatpush1.msra.mxu0 0.0
          %2206 = vmatprep.subr.mxu0 0.0
          %2207 = vmatpush1.msra.mxu0 0.0
          %2208 = vmatprep.subr.mxu0 0.0
          %2209 = vmatpush1.msra.mxu0 0.0
          %2210 = vmatprep.subr.mxu0 0.0
          %2211 = vmatpush1.msra.mxu0 0.0
          %2212 = vmatprep.subr.mxu0 0.0
          %2213 = vmatpush1.msra.mxu0 0.0
          %2214 = vmatprep.subr.mxu0 0.0
          %2215 = vmatpush1.msra.mxu0 %v2180
          %2216 = vmatprep.subr.mxu0 0.0
          %2217 = vmatpush2.msra.mxu0 0.0
          %2218 = vmatprep.subr.mxu0 0.0
          %2219 = vmatpush2.msra.mxu0 0.0
          %2220 = vmatprep.subr.mxu0 0.0
          %2221 = vmatpush2.msra.mxu0 0.0
          %2222 = vmatprep.subr.mxu0 0.0
          %2223 = vmatpush2.msra.mxu0 0.0
          %2224 = vmatprep.subr.mxu0 0.0
          %2225 = vmatpush2.msra.mxu0 0.0
          %2226 = vmatprep.subr.mxu0 0.0
          %2227 = vmatpush2.msra.mxu0 0.0
          %2228 = vmatprep.subr.mxu0 0.0
          %2229 = vmatpush2.msra.mxu0 0.0
          %2230 = vmatprep.subr.mxu0 0.0
          %2231 = vmatpush2.msra.mxu0 0.0
          %2232 = vmatprep.subr.mxu0 0.0
          %2233 = vmatpush2.msra.mxu0 0.0
          %2234 = vmatprep.subr.mxu0 0.0
          %2235 = vmatpush2.msra.mxu0 0.0
          %2236 = vmatprep.subr.mxu0 0.0
          %2237 = vmatpush2.msra.mxu0 0.0
          %2238 = vmatprep.subr.mxu0 0.0
          %2239 = vmatpush2.msra.mxu0 0.0
          %2240 = vmatprep.subr.mxu0 0.0
          %2241 = vmatpush2.msra.mxu0 0.0
          %2242 = vmatprep.subr.mxu0 0.0
          %2243 = vmatpush2.msra.mxu0 0.0
          %2244 = vmatprep.subr.mxu0 0.0
          %2245 = vmatpush2.msra.mxu0 0.0
          %2246 = vmatprep.subr.mxu0 0.0
          %2247 = vmatpush2.msra.mxu0 0.0
          %2248 = vmatprep.mubr.f32.mxu0 0.0
          %2249 = vmatmul.mubr.f32.gmra.mxu0 %v2182
          %v2250 = vpop.f32.mrf.mxu0
          %v2251 = vadd.f32 0.0, %v2250
          %v2252 = vpop.f32.mrf.mxu0
          %2253 = vdwg.mxu0
          %v2255 = vsel %vm1353, %v2174, 0
          %2257 = vmatprep.subr.mxu0 0.0
          %2258 = vmatpush1.msra.mxu0 0.0
          %2259 = vmatprep.subr.mxu0 0.0
          %2260 = vmatpush1.msra.mxu0 0.0
          %2261 = vmatprep.subr.mxu0 0.0
          %2262 = vmatpush1.msra.mxu0 0.0
          %2263 = vmatprep.subr.mxu0 0.0
          %2264 = vmatpush1.msra.mxu0 0.0
          %2265 = vmatprep.subr.mxu0 0.0
          %2266 = vmatpush1.msra.mxu0 0.0
          %2267 = vmatprep.subr.mxu0 0.0
          %2268 = vmatpush1.msra.mxu0 0.0
          %2269 = vmatprep.subr.mxu0 0.0
          %2270 = vmatpush1.msra.mxu0 0.0
          %2271 = vmatprep.subr.mxu0 0.0
          %2272 = vmatpush1.msra.mxu0 0.0
          %2273 = vmatprep.subr.mxu0 0.0
          %2274 = vmatpush1.msra.mxu0 0.0
          %2275 = vmatprep.subr.mxu0 0.0
          %2276 = vmatpush1.msra.mxu0 0.0
          %2277 = vmatprep.subr.mxu0 0.0
          %2278 = vmatpush1.msra.mxu0 0.0
          %2279 = vmatprep.subr.mxu0 0.0
          %2280 = vmatpush1.msra.mxu0 0.0
          %2281 = vmatprep.subr.mxu0 0.0
          %2282 = vmatpush1.msra.mxu0 0.0
          %2283 = vmatprep.subr.mxu0 0.0
          %2284 = vmatpush1.msra.mxu0 0.0
          %2285 = vmatprep.subr.mxu0 0.0
          %2286 = vmatpush1.msra.mxu0 0.0
          %2287 = vmatprep.subr.mxu0 0.0
          %2288 = vmatpush1.msra.mxu0 %v2178
          %2289 = vmatprep.subr.mxu0 0.0
          %2290 = vmatpush2.msra.mxu0 0.0
          %2291 = vmatprep.subr.mxu0 0.0
          %2292 = vmatpush2.msra.mxu0 0.0
          %2293 = vmatprep.subr.mxu0 0.0
          %2294 = vmatpush2.msra.mxu0 0.0
          %2295 = vmatprep.subr.mxu0 0.0
          %2296 = vmatpush2.msra.mxu0 0.0
          %2297 = vmatprep.subr.mxu0 0.0
          %2298 = vmatpush2.msra.mxu0 0.0
          %2299 = vmatprep.subr.mxu0 0.0
          %2300 = vmatpush2.msra.mxu0 0.0
          %2301 = vmatprep.subr.mxu0 0.0
          %2302 = vmatpush2.msra.mxu0 0.0
          %2303 = vmatprep.subr.mxu0 0.0
          %2304 = vmatpush2.msra.mxu0 0.0
          %2305 = vmatprep.subr.mxu0 0.0
          %2306 = vmatpush2.msra.mxu0 0.0
          %2307 = vmatprep.subr.mxu0 0.0
          %2308 = vmatpush2.msra.mxu0 0.0
          %2309 = vmatprep.subr.mxu0 0.0
          %2310 = vmatpush2.msra.mxu0 0.0
          %2311 = vmatprep.subr.mxu0 0.0
          %2312 = vmatpush2.msra.mxu0 0.0
          %2313 = vmatprep.subr.mxu0 0.0
          %2314 = vmatpush2.msra.mxu0 0.0
          %2315 = vmatprep.subr.mxu0 0.0
          %2316 = vmatpush2.msra.mxu0 0.0
          %2317 = vmatprep.subr.mxu0 0.0
          %2318 = vmatpush2.msra.mxu0 0.0
          %2319 = vmatprep.subr.mxu0 0.0
          %2320 = vmatpush2.msra.mxu0 0.0
          %2321 = vmatprep.mubr.f32.mxu0 0.0
          %2322 = vmatmul.mubr.f32.gmra.mxu0 %v2255
          %v2323 = vpop.f32.mrf.mxu0
          %v2324 = vadd.f32 %v2251, %v2323
          %v2325 = vpop.f32.mrf.mxu0
          %2326 = vdwg.mxu0
          %s2327 = scalar_lea.vmem %s3, 16
          %v2328 = vld [vmem:[%s2327] sm:$0xff]
          %v2330 = vsel %vm1353, %v2176, 0
          %2332 = vmatprep.subr.mxu0 0.0
          %2333 = vmatpush1.msra.mxu0 0.0
          %2334 = vmatprep.subr.mxu0 0.0
          %2335 = vmatpush1.msra.mxu0 0.0
          %2336 = vmatprep.subr.mxu0 0.0
          %2337 = vmatpush1.msra.mxu0 0.0
          %2338 = vmatprep.subr.mxu0 0.0
          %2339 = vmatpush1.msra.mxu0 0.0
          %2340 = vmatprep.subr.mxu0 0.0
          %2341 = vmatpush1.msra.mxu0 0.0
          %2342 = vmatprep.subr.mxu0 0.0
          %2343 = vmatpush1.msra.mxu0 0.0
          %2344 = vmatprep.subr.mxu0 0.0
          %2345 = vmatpush1.msra.mxu0 0.0
          %2346 = vmatprep.subr.mxu0 0.0
          %2347 = vmatpush1.msra.mxu0 0.0
          %2348 = vmatprep.subr.mxu0 0.0
          %2349 = vmatpush1.msra.mxu0 0.0
          %2350 = vmatprep.subr.mxu0 0.0
          %2351 = vmatpush1.msra.mxu0 0.0
          %2352 = vmatprep.subr.mxu0 0.0
          %2353 = vmatpush1.msra.mxu0 0.0
          %2354 = vmatprep.subr.mxu0 0.0
          %2355 = vmatpush1.msra.mxu0 0.0
          %2356 = vmatprep.subr.mxu0 0.0
          %2357 = vmatpush1.msra.mxu0 0.0
          %2358 = vmatprep.subr.mxu0 0.0
          %2359 = vmatpush1.msra.mxu0 0.0
          %2360 = vmatprep.subr.mxu0 0.0
          %2361 = vmatpush1.msra.mxu0 0.0
          %2362 = vmatprep.subr.mxu0 0.0
          %2363 = vmatpush1.msra.mxu0 %v2328
          %2364 = vmatprep.subr.mxu0 0.0
          %2365 = vmatpush2.msra.mxu0 0.0
          %2366 = vmatprep.subr.mxu0 0.0
          %2367 = vmatpush2.msra.mxu0 0.0
          %2368 = vmatprep.subr.mxu0 0.0
          %2369 = vmatpush2.msra.mxu0 0.0
          %2370 = vmatprep.subr.mxu0 0.0
          %2371 = vmatpush2.msra.mxu0 0.0
          %2372 = vmatprep.subr.mxu0 0.0
          %2373 = vmatpush2.msra.mxu0 0.0
          %2374 = vmatprep.subr.mxu0 0.0
          %2375 = vmatpush2.msra.mxu0 0.0
          %2376 = vmatprep.subr.mxu0 0.0
          %2377 = vmatpush2.msra.mxu0 0.0
          %2378 = vmatprep.subr.mxu0 0.0
          %2379 = vmatpush2.msra.mxu0 0.0
          %2380 = vmatprep.subr.mxu0 0.0
          %2381 = vmatpush2.msra.mxu0 0.0
          %2382 = vmatprep.subr.mxu0 0.0
          %2383 = vmatpush2.msra.mxu0 0.0
          %2384 = vmatprep.subr.mxu0 0.0
          %2385 = vmatpush2.msra.mxu0 0.0
          %2386 = vmatprep.subr.mxu0 0.0
          %2387 = vmatpush2.msra.mxu0 0.0
          %2388 = vmatprep.subr.mxu0 0.0
          %2389 = vmatpush2.msra.mxu0 0.0
          %2390 = vmatprep.subr.mxu0 0.0
          %2391 = vmatpush2.msra.mxu0 0.0
          %2392 = vmatprep.subr.mxu0 0.0
          %2393 = vmatpush2.msra.mxu0 0.0
          %2394 = vmatprep.subr.mxu0 0.0
          %2395 = vmatpush2.msra.mxu0 0.0
          %2396 = vmatprep.mubr.f32.mxu0 0.0
          %2397 = vmatmul.mubr.f32.gmra.mxu0 %v2330
          %v2398 = vpop.f32.mrf.mxu0
          %v2399 = vadd.f32 0.0, %v2398
          %v2400 = vpop.f32.mrf.mxu0
          %2401 = vdwg.mxu0
          %v2402 = vadd.f32 %v2324, %v2399
          %s2403 = scalar_lea.vmem %s3, 24
          %v2404 = vld [vmem:[%s2403] sm:$0xff]
          %v2406 = vsel %vm1353, %v2177, 0
          %2408 = vmatprep.subr.mxu0 0.0
          %2409 = vmatpush1.msra.mxu0 0.0
          %2410 = vmatprep.subr.mxu0 0.0
          %2411 = vmatpush1.msra.mxu0 0.0
          %2412 = vmatprep.subr.mxu0 0.0
          %2413 = vmatpush1.msra.mxu0 0.0
          %2414 = vmatprep.subr.mxu0 0.0
          %2415 = vmatpush1.msra.mxu0 0.0
          %2416 = vmatprep.subr.mxu0 0.0
          %2417 = vmatpush1.msra.mxu0 0.0
          %2418 = vmatprep.subr.mxu0 0.0
          %2419 = vmatpush1.msra.mxu0 0.0
          %2420 = vmatprep.subr.mxu0 0.0
          %2421 = vmatpush1.msra.mxu0 0.0
          %2422 = vmatprep.subr.mxu0 0.0
          %2423 = vmatpush1.msra.mxu0 0.0
          %2424 = vmatprep.subr.mxu0 0.0
          %2425 = vmatpush1.msra.mxu0 0.0
          %2426 = vmatprep.subr.mxu0 0.0
          %2427 = vmatpush1.msra.mxu0 0.0
          %2428 = vmatprep.subr.mxu0 0.0
          %2429 = vmatpush1.msra.mxu0 0.0
          %2430 = vmatprep.subr.mxu0 0.0
          %2431 = vmatpush1.msra.mxu0 0.0
          %2432 = vmatprep.subr.mxu0 0.0
          %2433 = vmatpush1.msra.mxu0 0.0
          %2434 = vmatprep.subr.mxu0 0.0
          %2435 = vmatpush1.msra.mxu0 0.0
          %2436 = vmatprep.subr.mxu0 0.0
          %2437 = vmatpush1.msra.mxu0 0.0
          %2438 = vmatprep.subr.mxu0 0.0
          %2439 = vmatpush1.msra.mxu0 %v2404
          %2440 = vmatprep.subr.mxu0 0.0
          %2441 = vmatpush2.msra.mxu0 0.0
          %2442 = vmatprep.subr.mxu0 0.0
          %2443 = vmatpush2.msra.mxu0 0.0
          %2444 = vmatprep.subr.mxu0 0.0
          %2445 = vmatpush2.msra.mxu0 0.0
          %2446 = vmatprep.subr.mxu0 0.0
          %2447 = vmatpush2.msra.mxu0 0.0
          %2448 = vmatprep.subr.mxu0 0.0
          %2449 = vmatpush2.msra.mxu0 0.0
          %2450 = vmatprep.subr.mxu0 0.0
          %2451 = vmatpush2.msra.mxu0 0.0
          %2452 = vmatprep.subr.mxu0 0.0
          %2453 = vmatpush2.msra.mxu0 0.0
          %2454 = vmatprep.subr.mxu0 0.0
          %2455 = vmatpush2.msra.mxu0 0.0
          %2456 = vmatprep.subr.mxu0 0.0
          %2457 = vmatpush2.msra.mxu0 0.0
          %2458 = vmatprep.subr.mxu0 0.0
          %2459 = vmatpush2.msra.mxu0 0.0
          %2460 = vmatprep.subr.mxu0 0.0
          %2461 = vmatpush2.msra.mxu0 0.0
          %2462 = vmatprep.subr.mxu0 0.0
          %2463 = vmatpush2.msra.mxu0 0.0
          %2464 = vmatprep.subr.mxu0 0.0
          %2465 = vmatpush2.msra.mxu0 0.0
          %2466 = vmatprep.subr.mxu0 0.0
          %2467 = vmatpush2.msra.mxu0 0.0
          %2468 = vmatprep.subr.mxu0 0.0
          %2469 = vmatpush2.msra.mxu0 0.0
          %2470 = vmatprep.subr.mxu0 0.0
          %2471 = vmatpush2.msra.mxu0 0.0
          %2472 = vmatprep.mubr.f32.mxu0 0.0
          %2473 = vmatmul.mubr.f32.gmra.mxu0 %v2406
          %v2474 = vpop.f32.mrf.mxu0
          %v2475 = vadd.f32 0.0, %v2474
          %v2476 = vpop.f32.mrf.mxu0
          %2477 = vdwg.mxu0
          %v2478 = vadd.f32 %v2402, %v2475
          %v2479 = vld [vmem:[%s4] sm:$0x1]
          %v2481 = vlaneseq
          %v2482 = vshrl.u32 %v2481, 7
          %v2483 = vsub.s32 0, %v2482
          %v2484 = vrot.slane %v2479, %v2483
          %v2486 = vadd.f32 %v2478, %v2484
          %vm2487 = vcmask 261120
          %2488 = vst.msk [vmem:[%s290] sm:$0xff] %vm2487, %v2486
        $region48: #{multi_head_attention.3} parent=39 // pred_fallthru
          _
        %s2489 = sand.u32 %s174, 1
        %s2490 = scalar_lea.sflag [#allocation6], %s2489
        %s2491 = sand.u32 %s174, 1
        %s2492 = smul.addr %s2491, 8
        %s2493 = scalar_lea.vmem [#allocation5], %s2492
        // Predicated region
        $region49: #{multi_head_attention.3} parent=39 // pred_check
          %p2494 = pneg %p184
        $region50: #{multi_head_attention.3} parent=39 // pred_check_branch
          %2496 = sbr.rel (%p2494) target = $region52
        $region51: #{multi_head_attention.3} parent=39 // pred_region
          %s2498 = ssub.s32 128, 128
          %2499 = vsyncadd %s2490, %s2498
          %s2500 = sadd.s32 %s25, %s24
          %s2501 = smul.addr %s2500, 128
          %s2502 = scalar_lea.hbm %s5, %s2501
          %s2504 = sshll.u32 %s2493, 4
          %s2505 = int_to_ptr.vmem [resolvable:$true] %s2504
          %2507 = dma.vmem_to_hbm [thread:$0]  %s2505, 128, %s2502, %s2490
        $region52: #{multi_head_attention.3} parent=39 // pred_fallthru
          _
      $region40: #{multi_head_attention.3} parent=5 // pred_fallthru
        _
      %p2508 = scmp.le.s32.totalorder 2, %s14
      // Predicated region
      $region53: #{multi_head_attention.3} parent=5 // pred_check
        %p2509 = pneg %p2508
      $region54: #{multi_head_attention.3} parent=5 // pred_check_branch
        %2511 = sbr.rel (%p2509) target = $region56
      $region55: #{multi_head_attention.3} parent=5 // pred_region
        %s2512 = ssub.s32 %s14, 2
        // Predicated region
        $region57: #{multi_head_attention.3} parent=55 // pred_check
          %p2513 = pneg %p190
        $region58: #{multi_head_attention.3} parent=55 // pred_check_branch
          %2515 = sbr.rel (%p2513) target = $region60
        $region59: #{multi_head_attention.3} parent=55 // pred_region
          %s2516 = sand.u32 %s175, 1
          %s2517 = scalar_lea.sflag [#allocation6], %s2516
          %s2518 = sand.u32 %s175, 1
          %s2519 = smul.addr %s2518, 8
          %s2520 = scalar_lea.vmem [#allocation5], %s2519
          %2521 = dma.done %s2517, 128
        $region60: #{multi_head_attention.3} parent=55 // pred_fallthru
          _
      $region56: #{multi_head_attention.3} parent=5 // pred_fallthru
        _
    $region6: #{multi_head_attention.3} parent=1 // loop_footer
      %s18 = sadd.s32 1, %s14
    $region7: #{multi_head_attention.3} parent=1 // loop_footer_branch
      %13 = sbr.rel target = $region3
    $region8: #{multi_head_attention.3} parent=1 // loop_exit
      _
    %2522 = vsyncpa [#allocation6], 1
    %s2523 = scalar_lea.sflag [#allocation6], 1
    %2524 = vsyncpa %s2523, 1

// kernel: multi_head_attention.2
$region0: #{multi_head_attention.2}
  #allocation0 [shape = 'u32[]', space=smem, size = 0x4, offset = 0x4, fixed_abs, tag = 'smem constant byte address 0x4 - core index']
  #allocation1 [shape = 'u32[144,128]{1,0:T(1,128)}', space=vmem, size = 0x12000, scoped, tag = 'internal scratch']
  %s0 = inlined_call_operand.vmem [shape: f32[16,32], index: 0, kind: input, shape index: {}]
  %s1 = inlined_call_operand.vmem [shape: f32[16,32], index: 1, kind: input, shape index: {}]
  %s2 = inlined_call_operand.vmem [shape: f32[16,32], index: 2, kind: input, shape index: {}]
  %s3 = inlined_call_operand.vmem [shape: f32[3,32,32], index: 3, kind: input, shape index: {}]
  %s4 = inlined_call_operand.vmem [shape: f32[3,1,32], index: 4, kind: input, shape index: {}]
  %s5 = inlined_call_operand.vmem [shape: f32[3,16,32], index: 5, kind: output, shape index: {}]
  %s6 = sld [smem:[#allocation0]]
  $region30: #{multi_head_attention.2} parent=0
    _
  %s8 = ssub.s32 1, %s6
  %s9 = scalar_select 0, %s8, %s6
  // Predicated region
  $region2: #{multi_head_attention.2} parent=0 // pred_check
    _
  $region3: #{multi_head_attention.2} parent=0 // pred_check_branch
    %11 = sbr.rel (0) target = $region5
  $region4: #{multi_head_attention.2} parent=0 // pred_region
    _
  $region5: #{multi_head_attention.2} parent=0 // pred_fallthru
    _
  // Predicated region
  $region6: #{multi_head_attention.2} parent=0 // pred_check
    _
  $region7: #{multi_head_attention.2} parent=0 // pred_check_branch
    %13 = sbr.rel (0) target = $region9
  $region8: #{multi_head_attention.2} parent=0 // pred_region
    _
  $region9: #{multi_head_attention.2} parent=0 // pred_fallthru
    _
  // Predicated region
  $region10: #{multi_head_attention.2} parent=0 // pred_check
    _
  $region11: #{multi_head_attention.2} parent=0 // pred_check_branch
    %15 = sbr.rel (0) target = $region13
  $region12: #{multi_head_attention.2} parent=0 // pred_region
    _
  $region13: #{multi_head_attention.2} parent=0 // pred_fallthru
    _
  // Predicated region
  $region14: #{multi_head_attention.2} parent=0 // pred_check
    _
  $region15: #{multi_head_attention.2} parent=0 // pred_check_branch
    %17 = sbr.rel (0) target = $region17
  $region16: #{multi_head_attention.2} parent=0 // pred_region
    _
  $region17: #{multi_head_attention.2} parent=0 // pred_fallthru
    _
  // Predicated region
  $region18: #{multi_head_attention.2} parent=0 // pred_check
    _
  $region19: #{multi_head_attention.2} parent=0 // pred_check_branch
    %19 = sbr.rel (0) target = $region21
  $region20: #{multi_head_attention.2} parent=0 // pred_region
    _
  $region21: #{multi_head_attention.2} parent=0 // pred_fallthru
    _
  %v20 = vld [vmem:[%s0] sm:$0xff]
  %v21 = vld [vmem:[%s0 + $0x8] sm:$0xff]
  %v22 = vld [vmem:[%s3] sm:$0xff]
  %v23 = vld [vmem:[%s3 + $0x8] sm:$0xff]
  %v24 = vld [vmem:[%s3 + $0x10] sm:$0xff]
  %v25 = vld [vmem:[%s3 + $0x18] sm:$0xff]
  %v26 = vld [vmem:[%s4] sm:$0x1]
  %v28 = vlaneseq
  %v29 = vshrl.u32 %v28, 7
  %v30 = vsub.s32 0, %v29
  %v31 = vrot.slane %v26, %v30
  %vm33 = vcmask 261120
  %v35 = vsel %vm33, %v20, 0
  %v38 = vsel %vm33, %v21, 0
  %40 = vmatprep.subr.mxu0 0.0
  %41 = vmatpush1.msra.mxu0 0.0
  %42 = vmatprep.subr.mxu0 0.0
  %43 = vmatpush1.msra.mxu0 0.0
  %44 = vmatprep.subr.mxu0 0.0
  %45 = vmatpush1.msra.mxu0 0.0
  %46 = vmatprep.subr.mxu0 0.0
  %47 = vmatpush1.msra.mxu0 0.0
  %48 = vmatprep.subr.mxu0 0.0
  %49 = vmatpush1.msra.mxu0 0.0
  %50 = vmatprep.subr.mxu0 0.0
  %51 = vmatpush1.msra.mxu0 0.0
  %52 = vmatprep.subr.mxu0 0.0
  %53 = vmatpush1.msra.mxu0 0.0
  %54 = vmatprep.subr.mxu0 0.0
  %55 = vmatpush1.msra.mxu0 0.0
  %56 = vmatprep.subr.mxu0 0.0
  %57 = vmatpush1.msra.mxu0 0.0
  %58 = vmatprep.subr.mxu0 0.0
  %59 = vmatpush1.msra.mxu0 0.0
  %60 = vmatprep.subr.mxu0 0.0
  %61 = vmatpush1.msra.mxu0 0.0
  %62 = vmatprep.subr.mxu0 0.0
  %63 = vmatpush1.msra.mxu0 0.0
  %64 = vmatprep.subr.mxu0 0.0
  %65 = vmatpush1.msra.mxu0 %v25
  %66 = vmatprep.subr.mxu0 0.0
  %67 = vmatpush1.msra.mxu0 %v24
  %68 = vmatprep.subr.mxu0 0.0
  %69 = vmatpush1.msra.mxu0 %v23
  %70 = vmatprep.subr.mxu0 0.0
  %71 = vmatpush1.msra.mxu0 %v22
  %72 = vmatprep.subr.mxu0 0.0
  %73 = vmatpush2.msra.mxu0 0.0
  %74 = vmatprep.subr.mxu0 0.0
  %75 = vmatpush2.msra.mxu0 0.0
  %76 = vmatprep.subr.mxu0 0.0
  %77 = vmatpush2.msra.mxu0 0.0
  %78 = vmatprep.subr.mxu0 0.0
  %79 = vmatpush2.msra.mxu0 0.0
  %80 = vmatprep.subr.mxu0 0.0
  %81 = vmatpush2.msra.mxu0 0.0
  %82 = vmatprep.subr.mxu0 0.0
  %83 = vmatpush2.msra.mxu0 0.0
  %84 = vmatprep.subr.mxu0 0.0
  %85 = vmatpush2.msra.mxu0 0.0
  %86 = vmatprep.subr.mxu0 0.0
  %87 = vmatpush2.msra.mxu0 0.0
  %88 = vmatprep.subr.mxu0 0.0
  %89 = vmatpush2.msra.mxu0 0.0
  %90 = vmatprep.subr.mxu0 0.0
  %91 = vmatpush2.msra.mxu0 0.0
  %92 = vmatprep.subr.mxu0 0.0
  %93 = vmatpush2.msra.mxu0 0.0
  %94 = vmatprep.subr.mxu0 0.0
  %95 = vmatpush2.msra.mxu0 0.0
  %96 = vmatprep.subr.mxu0 0.0
  %97 = vmatpush2.msra.mxu0 0.0
  %98 = vmatprep.subr.mxu0 0.0
  %99 = vmatpush2.msra.mxu0 0.0
  %100 = vmatprep.subr.mxu0 0.0
  %101 = vmatpush2.msra.mxu0 0.0
  %102 = vmatprep.subr.mxu0 0.0
  %103 = vmatpush2.msra.mxu0 0.0
  %104 = vmatprep.mubr.f32.mxu0 0.0
  %105 = vmatmul.mubr.f32.gmra.mxu0 %v35
  %v106 = vpop.f32.mrf.mxu0
  %v107 = vadd.f32 %v31, %v106
  %v108 = vpop.f32.mrf.mxu0
  %109 = vmatprep.mubr.f32.mxu0 0.0
  %110 = vmatmul.mubr.f32.gmra.mxu0 %v38
  %v111 = vpop.f32.mrf.mxu0
  %v112 = vadd.f32 %v31, %v111
  %v113 = vpop.f32.mrf.mxu0
  %114 = vdwg.mxu0
  %115 = vst.msk [vmem:[%s5] sm:$0xff] %vm33, %v107
  %116 = vst.msk [vmem:[%s5 + $0x8] sm:$0xff] %vm33, %v112
  %v117 = vld [vmem:[%s1] sm:$0xff]
  %v118 = vld [vmem:[%s1 + $0x8] sm:$0xff]
  %s119 = scalar_lea.vmem %s3, 32
  %v120 = vld [vmem:[%s119] sm:$0xff]
  %v121 = vld [vmem:[%s119 + $0x8] sm:$0xff]
  %v122 = vld [vmem:[%s119 + $0x10] sm:$0xff]
  %v123 = vld [vmem:[%s119 + $0x18] sm:$0xff]
  %s124 = scalar_lea.vmem %s4, 1
  %v125 = vld [vmem:[%s124] sm:$0x1]
  %v127 = vlaneseq
  %v128 = vshrl.u32 %v127, 7
  %v129 = vsub.s32 0, %v128
  %v130 = vrot.slane %v125, %v129
  %v133 = vsel %vm33, %v117, 0
  %v136 = vsel %vm33, %v118, 0
  %138 = vmatprep.subr.mxu0 0.0
  %139 = vmatpush1.msra.mxu0 0.0
  %140 = vmatprep.subr.mxu0 0.0
  %141 = vmatpush1.msra.mxu0 0.0
  %142 = vmatprep.subr.mxu0 0.0
  %143 = vmatpush1.msra.mxu0 0.0
  %144 = vmatprep.subr.mxu0 0.0
  %145 = vmatpush1.msra.mxu0 0.0
  %146 = vmatprep.subr.mxu0 0.0
  %147 = vmatpush1.msra.mxu0 0.0
  %148 = vmatprep.subr.mxu0 0.0
  %149 = vmatpush1.msra.mxu0 0.0
  %150 = vmatprep.subr.mxu0 0.0
  %151 = vmatpush1.msra.mxu0 0.0
  %152 = vmatprep.subr.mxu0 0.0
  %153 = vmatpush1.msra.mxu0 0.0
  %154 = vmatprep.subr.mxu0 0.0
  %155 = vmatpush1.msra.mxu0 0.0
  %156 = vmatprep.subr.mxu0 0.0
  %157 = vmatpush1.msra.mxu0 0.0
  %158 = vmatprep.subr.mxu0 0.0
  %159 = vmatpush1.msra.mxu0 0.0
  %160 = vmatprep.subr.mxu0 0.0
  %161 = vmatpush1.msra.mxu0 0.0
  %162 = vmatprep.subr.mxu0 0.0
  %163 = vmatpush1.msra.mxu0 %v123
  %164 = vmatprep.subr.mxu0 0.0
  %165 = vmatpush1.msra.mxu0 %v122
  %166 = vmatprep.subr.mxu0 0.0
  %167 = vmatpush1.msra.mxu0 %v121
  %168 = vmatprep.subr.mxu0 0.0
  %169 = vmatpush1.msra.mxu0 %v120
  %170 = vmatprep.subr.mxu0 0.0
  %171 = vmatpush2.msra.mxu0 0.0
  %172 = vmatprep.subr.mxu0 0.0
  %173 = vmatpush2.msra.mxu0 0.0
  %174 = vmatprep.subr.mxu0 0.0
  %175 = vmatpush2.msra.mxu0 0.0
  %176 = vmatprep.subr.mxu0 0.0
  %177 = vmatpush2.msra.mxu0 0.0
  %178 = vmatprep.subr.mxu0 0.0
  %179 = vmatpush2.msra.mxu0 0.0
  %180 = vmatprep.subr.mxu0 0.0
  %181 = vmatpush2.msra.mxu0 0.0
  %182 = vmatprep.subr.mxu0 0.0
  %183 = vmatpush2.msra.mxu0 0.0
  %184 = vmatprep.subr.mxu0 0.0
  %185 = vmatpush2.msra.mxu0 0.0
  %186 = vmatprep.subr.mxu0 0.0
  %187 = vmatpush2.msra.mxu0 0.0
  %188 = vmatprep.subr.mxu0 0.0
  %189 = vmatpush2.msra.mxu0 0.0
  %190 = vmatprep.subr.mxu0 0.0
  %191 = vmatpush2.msra.mxu0 0.0
  %192 = vmatprep.subr.mxu0 0.0
  %193 = vmatpush2.msra.mxu0 0.0
  %194 = vmatprep.subr.mxu0 0.0
  %195 = vmatpush2.msra.mxu0 0.0
  %196 = vmatprep.subr.mxu0 0.0
  %197 = vmatpush2.msra.mxu0 0.0
  %198 = vmatprep.subr.mxu0 0.0
  %199 = vmatpush2.msra.mxu0 0.0
  %200 = vmatprep.subr.mxu0 0.0
  %201 = vmatpush2.msra.mxu0 0.0
  %202 = vmatprep.mubr.f32.mxu0 0.0
  %203 = vmatmul.mubr.f32.gmra.mxu0 %v133
  %v204 = vpop.f32.mrf.mxu0
  %v205 = vadd.f32 %v130, %v204
  %v206 = vpop.f32.mrf.mxu0
  %207 = vmatprep.mubr.f32.mxu0 0.0
  %208 = vmatmul.mubr.f32.gmra.mxu0 %v136
  %v209 = vpop.f32.mrf.mxu0
  %v210 = vadd.f32 %v130, %v209
  %v211 = vpop.f32.mrf.mxu0
  %212 = vdwg.mxu0
  %s213 = scalar_lea.vmem %s5, 16
  %214 = vst.msk [vmem:[%s213] sm:$0xff] %vm33, %v205
  %215 = vst.msk [vmem:[%s213 + $0x8] sm:$0xff] %vm33, %v210
  %v216 = vld [vmem:[%s2] sm:$0xff]
  %v217 = vld [vmem:[%s2 + $0x8] sm:$0xff]
  %s218 = scalar_lea.vmem %s3, 64
  %v219 = vld [vmem:[%s218] sm:$0xff]
  %v220 = vld [vmem:[%s218 + $0x8] sm:$0xff]
  %v221 = vld [vmem:[%s218 + $0x10] sm:$0xff]
  %v222 = vld [vmem:[%s218 + $0x18] sm:$0xff]
  %s223 = scalar_lea.vmem %s4, 2
  %v224 = vld [vmem:[%s223] sm:$0x1]
  %v226 = vlaneseq
  %v227 = vshrl.u32 %v226, 7
  %v228 = vsub.s32 0, %v227
  %v229 = vrot.slane %v224, %v228
  %v232 = vsel %vm33, %v216, 0
  %v235 = vsel %vm33, %v217, 0
  %237 = vmatprep.subr.mxu0 0.0
  %238 = vmatpush1.msra.mxu0 0.0
  %239 = vmatprep.subr.mxu0 0.0
  %240 = vmatpush1.msra.mxu0 0.0
  %241 = vmatprep.subr.mxu0 0.0
  %242 = vmatpush1.msra.mxu0 0.0
  %243 = vmatprep.subr.mxu0 0.0
  %244 = vmatpush1.msra.mxu0 0.0
  %245 = vmatprep.subr.mxu0 0.0
  %246 = vmatpush1.msra.mxu0 0.0
  %247 = vmatprep.subr.mxu0 0.0
  %248 = vmatpush1.msra.mxu0 0.0
  %249 = vmatprep.subr.mxu0 0.0
  %250 = vmatpush1.msra.mxu0 0.0
  %251 = vmatprep.subr.mxu0 0.0
  %252 = vmatpush1.msra.mxu0 0.0
  %253 = vmatprep.subr.mxu0 0.0
  %254 = vmatpush1.msra.mxu0 0.0
  %255 = vmatprep.subr.mxu0 0.0
  %256 = vmatpush1.msra.mxu0 0.0
  %257 = vmatprep.subr.mxu0 0.0
  %258 = vmatpush1.msra.mxu0 0.0
  %259 = vmatprep.subr.mxu0 0.0
  %260 = vmatpush1.msra.mxu0 0.0
  %261 = vmatprep.subr.mxu0 0.0
  %262 = vmatpush1.msra.mxu0 %v222
  %263 = vmatprep.subr.mxu0 0.0
  %264 = vmatpush1.msra.mxu0 %v221
  %265 = vmatprep.subr.mxu0 0.0
  %266 = vmatpush1.msra.mxu0 %v220
  %267 = vmatprep.subr.mxu0 0.0
  %268 = vmatpush1.msra.mxu0 %v219
  %269 = vmatprep.subr.mxu0 0.0
  %270 = vmatpush2.msra.mxu0 0.0
  %271 = vmatprep.subr.mxu0 0.0
  %272 = vmatpush2.msra.mxu0 0.0
  %273 = vmatprep.subr.mxu0 0.0
  %274 = vmatpush2.msra.mxu0 0.0
  %275 = vmatprep.subr.mxu0 0.0
  %276 = vmatpush2.msra.mxu0 0.0
  %277 = vmatprep.subr.mxu0 0.0
  %278 = vmatpush2.msra.mxu0 0.0
  %279 = vmatprep.subr.mxu0 0.0
  %280 = vmatpush2.msra.mxu0 0.0
  %281 = vmatprep.subr.mxu0 0.0
  %282 = vmatpush2.msra.mxu0 0.0
  %283 = vmatprep.subr.mxu0 0.0
  %284 = vmatpush2.msra.mxu0 0.0
  %285 = vmatprep.subr.mxu0 0.0
  %286 = vmatpush2.msra.mxu0 0.0
  %287 = vmatprep.subr.mxu0 0.0
  %288 = vmatpush2.msra.mxu0 0.0
  %289 = vmatprep.subr.mxu0 0.0
  %290 = vmatpush2.msra.mxu0 0.0
  %291 = vmatprep.subr.mxu0 0.0
  %292 = vmatpush2.msra.mxu0 0.0
  %293 = vmatprep.subr.mxu0 0.0
  %294 = vmatpush2.msra.mxu0 0.0
  %295 = vmatprep.subr.mxu0 0.0
  %296 = vmatpush2.msra.mxu0 0.0
  %297 = vmatprep.subr.mxu0 0.0
  %298 = vmatpush2.msra.mxu0 0.0
  %299 = vmatprep.subr.mxu0 0.0
  %300 = vmatpush2.msra.mxu0 0.0
  %301 = vmatprep.mubr.f32.mxu0 0.0
  %302 = vmatmul.mubr.f32.gmra.mxu0 %v232
  %v303 = vpop.f32.mrf.mxu0
  %v304 = vadd.f32 %v229, %v303
  %v305 = vpop.f32.mrf.mxu0
  %306 = vmatprep.mubr.f32.mxu0 0.0
  %307 = vmatmul.mubr.f32.gmra.mxu0 %v235
  %v308 = vpop.f32.mrf.mxu0
  %v309 = vadd.f32 %v229, %v308
  %v310 = vpop.f32.mrf.mxu0
  %311 = vdwg.mxu0
  %s312 = scalar_lea.vmem %s5, 32
  %313 = vst.msk [vmem:[%s312] sm:$0xff] %vm33, %v304
  %314 = vst.msk [vmem:[%s312 + $0x8] sm:$0xff] %vm33, %v309
  // Predicated region
  $region22: #{multi_head_attention.2} parent=0 // pred_check
    _
  $region23: #{multi_head_attention.2} parent=0 // pred_check_branch
    %316 = sbr.rel (0) target = $region25
  $region24: #{multi_head_attention.2} parent=0 // pred_region
    _
  $region25: #{multi_head_attention.2} parent=0 // pred_fallthru
    _
  // Predicated region
  $region26: #{multi_head_attention.2} parent=0 // pred_check
    _
  $region27: #{multi_head_attention.2} parent=0 // pred_check_branch
    %318 = sbr.rel (0) target = $region29
  $region28: #{multi_head_attention.2} parent=0 // pred_region
    _
  $region29: #{multi_head_attention.2} parent=0 // pred_fallthru
    _

// kernel: multi_head_attention.3
$region0: #{multi_head_attention.3}
  #allocation0 [shape = 'u32[]', space=smem, size = 0x4, offset = 0x4, fixed_abs, tag = 'smem constant byte address 0x4 - core index']
  #allocation1 [shape = 'u32[144,128]{1,0:T(1,128)}', space=vmem, size = 0x12000, scoped, tag = 'internal scratch']
  #allocation2 [shape = 'f32[4,8,1]{2,1,0:T(8,128)}', space=vmem, size = 0x4000, scoped, tag = 'scratch operand']
  #allocation3 [shape = 'f32[4,8,1]{2,1,0:T(8,128)}', space=vmem, size = 0x4000, scoped, tag = 'scratch operand']
  #allocation4 [shape = 'f32[4,8,8]{2,1,0:T(8,128)}', space=vmem, size = 0x4000, scoped, tag = 'scratch operand']
  %s0 = inlined_call_operand.vmem [shape: f32[3,2,8,32], index: 0, kind: input, shape index: {}, may-alias: {0,1,2}]
  %s1 = inlined_call_operand.vmem [shape: f32[3,2,8,32], index: 1, kind: input, shape index: {}, may-alias: {0,1,2}]
  %s2 = inlined_call_operand.vmem [shape: f32[3,2,8,32], index: 2, kind: input, shape index: {}, may-alias: {0,1,2}]
  %s3 = inlined_call_operand.vmem [shape: f32[4,8,32], index: 3, kind: input, shape index: {}]
  %s4 = inlined_call_operand.vmem [shape: f32[1,32], index: 4, kind: input, shape index: {}]
  %s5 = inlined_call_operand.hbm [shape: f32[2,8,32], index: 5, kind: output, shape index: {}]
  %s6 = sld [smem:[#allocation0]]
  $region61: #{multi_head_attention.3} parent=0
    _
  %s8 = ssub.s32 1, %s6
  %s9 = scalar_select 0, %s8, %s6
  $region1: #{multi_head_attention.3} parent=0
    #allocation5 [shape = 'u8[8192]{0}', space=vmem, size = 0x2000, scoped, tag = 'output window, operand 0']
    #allocation6 [shape = 's32[2]{0}', space=sflag, size = 0x8, scoped, tag = 'scoped memory for multi_head_attention.3']
    %10 = vsyncpa [#allocation6], 0
    %s11 = scalar_lea.sflag [#allocation6], 1
    %12 = vsyncpa %s11, 0
    loop: start=0, step=1, limit=4
    $region2: #{multi_head_attention.3} parent=1 // loop_pre_header
      _
    $region3: #{multi_head_attention.3} parent=1 // loop_header
      %s14 = sphi 0, %s18
      %p15 = scmp.ge.s32.totalorder %s14, 4
      %s21 = sphi 0, %s40
      %s22 = sphi 0, %s36
      %s23 = sphi 0, %s32
      %s24 = sphi 0, %s21
      %s25 = sphi 0, %s22
      %s26 = sphi 0, %s23
      %s27 = sphi 0, %s24
      %s28 = sphi 0, %s25
      %s29 = sphi 0, %s26
      %s45 = sphi 0, %s47
      %s48 = sphi 0, %s45
      %s49 = sphi 0, %s48
      %s65 = sphi 0, %s49
      %s73 = sphi 0, %s75
      %s76 = sphi 0, %s73
      %s77 = sphi 0, %s76
      %s93 = sphi 0, %s77
      %s101 = sphi 0, %s103
      %s104 = sphi 0, %s101
      %s105 = sphi 0, %s104
      %s121 = sphi 0, %s105
      %s125 = sphi 0, %s125
      %s127 = sphi 0, %s125
      %s128 = sphi 0, %s127
      %s142 = sphi 0, %s128
      %s146 = sphi 0, %s146
      %s148 = sphi 0, %s146
      %s149 = sphi 0, %s148
      %s163 = sphi 0, %s149
      %s171 = sphi 0, %s173
      %s174 = sphi 0, %s171
      %s175 = sphi 0, %s174
      %s191 = sphi 0, %s175
    $region4: #{multi_head_attention.3} parent=1 // loop_header_branch
      %17 = sbr.rel (%p15) target = $region8
    $region5: #{multi_head_attention.3} parent=1 // loop_body
      %s19 = ssub.s32 %s14, 1
      %s20 = ssub.s32 %s14, 2
      %s30 = sadd.s32 1, %s23
      %p31 = scmp.ge.s32.totalorder %s30, 1
      %s32 = scalar_select %p31, 0, %s30
      %s33 = sadd.s32 1, %s22
      %s34 = scalar_select %p31, %s33, %s22
      %p35 = scmp.ge.s32.totalorder %s34, 1
      %s36 = scalar_select %p35, 0, %s34
      %s37 = sadd.s32 1, %s21
      %s38 = scalar_select %p35, %s37, %s21
      %p39 = scmp.ge.s32.totalorder %s38, 2
      %s40 = scalar_select %p39, 0, %s38
      %s41 = ssub.s32 %s21, %s40
      %s42 = ssub.s32 %s22, %s36
      %s43 = sor.u32 %s41, %s42
      %p44 = scmp.eq.s32.totalorder %s43, 0
      %s46 = sadd.s32 %s45, 1
      %s47 = scalar_select %p44, %s45, %s46
      %p50 = pneg %p44
      %p51 = scmp.eq.s32.totalorder %s14, 1
      %p52 = por %p50, %p51
      %p53 = scmp.ne.s32.totalorder %s45, %s48
      %p54 = scmp.eq.s32.totalorder %s14, 0
      %p55 = por %p53, %p54
      %p56 = scmp.ne.s32.totalorder %s45, %s48
      %p57 = scmp.eq.s32.totalorder %s19, 1
      %p58 = por %p56, %p57
      %p59 = scmp.ne.s32.totalorder %s48, %s49
      %p60 = scmp.eq.s32.totalorder %s19, 0
      %p61 = por %p59, %p60
      %p62 = scmp.ne.s32.totalorder %s48, %s49
      %p63 = scmp.eq.s32.totalorder %s20, 1
      %p64 = por %p62, %p63
      %p66 = scmp.ne.s32.totalorder %s49, %s65
      %p67 = scmp.eq.s32.totalorder %s20, 0
      %p68 = por %p66, %p67
      %s69 = ssub.s32 %s21, %s40
      %s70 = ssub.s32 %s23, %s32
      %s71 = sor.u32 %s69, %s70
      %p72 = scmp.eq.s32.totalorder %s71, 0
      %s74 = sadd.s32 %s73, 1
      %s75 = scalar_select %p72, %s73, %s74
      %p78 = pneg %p72
      %p79 = scmp.eq.s32.totalorder %s14, 1
      %p80 = por %p78, %p79
      %p81 = scmp.ne.s32.totalorder %s73, %s76
      %p82 = scmp.eq.s32.totalorder %s14, 0
      %p83 = por %p81, %p82
      %p84 = scmp.ne.s32.totalorder %s73, %s76
      %p85 = scmp.eq.s32.totalorder %s19, 1
      %p86 = por %p84, %p85
      %p87 = scmp.ne.s32.totalorder %s76, %s77
      %p88 = scmp.eq.s32.totalorder %s19, 0
      %p89 = por %p87, %p88
      %p90 = scmp.ne.s32.totalorder %s76, %s77
      %p91 = scmp.eq.s32.totalorder %s20, 1
      %p92 = por %p90, %p91
      %p94 = scmp.ne.s32.totalorder %s77, %s93
      %p95 = scmp.eq.s32.totalorder %s20, 0
      %p96 = por %p94, %p95
      %s97 = ssub.s32 %s21, %s40
      %s98 = ssub.s32 %s23, %s32
      %s99 = sor.u32 %s97, %s98
      %p100 = scmp.eq.s32.totalorder %s99, 0
      %s102 = sadd.s32 %s101, 1
      %s103 = scalar_select %p100, %s101, %s102
      %p106 = pneg %p100
      %p107 = scmp.eq.s32.totalorder %s14, 1
      %p108 = por %p106, %p107
      %p109 = scmp.ne.s32.totalorder %s101, %s104
      %p110 = scmp.eq.s32.totalorder %s14, 0
      %p111 = por %p109, %p110
      %p112 = scmp.ne.s32.totalorder %s101, %s104
      %p113 = scmp.eq.s32.totalorder %s19, 1
      %p114 = por %p112, %p113
      %p115 = scmp.ne.s32.totalorder %s104, %s105
      %p116 = scmp.eq.s32.totalorder %s19, 0
      %p117 = por %p115, %p116
      %p118 = scmp.ne.s32.totalorder %s104, %s105
      %p119 = scmp.eq.s32.totalorder %s20, 1
      %p120 = por %p118, %p119
      %p122 = scmp.ne.s32.totalorder %s105, %s121
      %p123 = scmp.eq.s32.totalorder %s20, 0
      %p124 = por %p122, %p123
      %s126 = sadd.s32 %s125, 1
      %p129 = scmp.eq.s32.totalorder %s14, 1
      %p130 = scmp.ne.s32.totalorder %s125, %s127
      %p131 = scmp.eq.s32.totalorder %s14, 0
      %p132 = por %p130, %p131
      %p133 = scmp.ne.s32.totalorder %s125, %s127
      %p134 = scmp.eq.s32.totalorder %s19, 1
      %p135 = por %p133, %p134
      %p136 = scmp.ne.s32.totalorder %s127, %s128
      %p137 = scmp.eq.s32.totalorder %s19, 0
      %p138 = por %p136, %p137
      %p139 = scmp.ne.s32.totalorder %s127, %s128
      %p140 = scmp.eq.s32.totalorder %s20, 1
      %p141 = por %p139, %p140
      %p143 = scmp.ne.s32.totalorder %s128, %s142
      %p144 = scmp.eq.s32.totalorder %s20, 0
      %p145 = por %p143, %p144
      %s147 = sadd.s32 %s146, 1
      %p150 = scmp.eq.s32.totalorder %s14, 1
      %p151 = scmp.ne.s32.totalorder %s146, %s148
      %p152 = scmp.eq.s32.totalorder %s14, 0
      %p153 = por %p151, %p152
      %p154 = scmp.ne.s32.totalorder %s146, %s148
      %p155 = scmp.eq.s32.totalorder %s19, 1
      %p156 = por %p154, %p155
      %p157 = scmp.ne.s32.totalorder %s148, %s149
      %p158 = scmp.eq.s32.totalorder %s19, 0
      %p159 = por %p157, %p158
      %p160 = scmp.ne.s32.totalorder %s148, %s149
      %p161 = scmp.eq.s32.totalorder %s20, 1
      %p162 = por %p160, %p161
      %p164 = scmp.ne.s32.totalorder %s149, %s163
      %p165 = scmp.eq.s32.totalorder %s20, 0
      %p166 = por %p164, %p165
      %s167 = ssub.s32 %s21, %s40
      %s168 = ssub.s32 %s22, %s36
      %s169 = sor.u32 %s167, %s168
      %p170 = scmp.eq.s32.totalorder %s169, 0
      %s172 = sadd.s32 %s171, 1
      %s173 = scalar_select %p170, %s171, %s172
      %p176 = pneg %p170
      %p177 = scmp.eq.s32.totalorder %s14, 1
      %p178 = por %p176, %p177
      %p179 = scmp.ne.s32.totalorder %s171, %s174
      %p180 = scmp.eq.s32.totalorder %s14, 0
      %p181 = por %p179, %p180
      %p182 = scmp.ne.s32.totalorder %s171, %s174
      %p183 = scmp.eq.s32.totalorder %s19, 1
      %p184 = por %p182, %p183
      %p185 = scmp.ne.s32.totalorder %s174, %s175
      %p186 = scmp.eq.s32.totalorder %s19, 0
      %p187 = por %p185, %p186
      %p188 = scmp.ne.s32.totalorder %s174, %s175
      %p189 = scmp.eq.s32.totalorder %s20, 1
      %p190 = por %p188, %p189
      %p192 = scmp.ne.s32.totalorder %s175, %s191
      %p193 = scmp.eq.s32.totalorder %s20, 0
      %p194 = por %p192, %p193
      %p195 = scmp.le.s32.totalorder 1, %s14
      %p196 = scmp.lt.s32.totalorder %s14, 3
      %p197 = pnand %p195, %p196
      %p198 = pneg %p197
      // Predicated region
      $region9: #{multi_head_attention.3} parent=5 // pred_check
        _
      $region10: #{multi_head_attention.3} parent=5 // pred_check_branch
        %200 = sbr.rel (%p197) target = $region12
      $region11: #{multi_head_attention.3} parent=5 // pred_region
        %s201 = ssub.s32 %s14, 1
        // Predicated region
        $region13: #{multi_head_attention.3} parent=11 // pred_check
          %p202 = pneg %p138
        $region14: #{multi_head_attention.3} parent=11 // pred_check_branch
          %204 = sbr.rel (%p202) target = $region16
        $region15: #{multi_head_attention.3} parent=11 // pred_region
          _
        $region16: #{multi_head_attention.3} parent=11 // pred_fallthru
          _
        // Predicated region
        $region17: #{multi_head_attention.3} parent=11 // pred_check
          %p205 = pneg %p159
        $region18: #{multi_head_attention.3} parent=11 // pred_check_branch
          %207 = sbr.rel (%p205) target = $region20
        $region19: #{multi_head_attention.3} parent=11 // pred_region
          _
        $region20: #{multi_head_attention.3} parent=11 // pred_fallthru
          _
      $region12: #{multi_head_attention.3} parent=5 // pred_fallthru
        _
      %p208 = scmp.lt.s32.totalorder %s14, 2
      // Predicated region
      $region21: #{multi_head_attention.3} parent=5 // pred_check
        %p209 = pneg %p208
      $region22: #{multi_head_attention.3} parent=5 // pred_check_branch
        %211 = sbr.rel (%p209) target = $region24
      $region23: #{multi_head_attention.3} parent=5 // pred_region
        // Predicated region
        $region25: #{multi_head_attention.3} parent=23 // pred_check
          %p212 = pneg %p55
        $region26: #{multi_head_attention.3} parent=23 // pred_check_branch
          %214 = sbr.rel (%p212) target = $region28
        $region27: #{multi_head_attention.3} parent=23 // pred_region
          %p215 = scmp.lt.s32.totalorder %s21, 1
          %s216 = scalar_select %p215, %s21, 1
          %p217 = scmp.lt.s32.totalorder %s22, 0
          %s218 = scalar_select %p217, %s22, 0
          %s219 = sadd.s32 %s218, %s216
          %s220 = smul.addr %s219, 8
          %s221 = scalar_lea.vmem %s0, %s220
        $region28: #{multi_head_attention.3} parent=23 // pred_fallthru
          _
        // Predicated region
        $region29: #{multi_head_attention.3} parent=23 // pred_check
          %p222 = pneg %p83
        $region30: #{multi_head_attention.3} parent=23 // pred_check_branch
          %224 = sbr.rel (%p222) target = $region32
        $region31: #{multi_head_attention.3} parent=23 // pred_region
          %p225 = scmp.lt.s32.totalorder %s21, 1
          %s226 = scalar_select %p225, %s21, 1
          %p227 = scmp.lt.s32.totalorder %s23, 0
          %s228 = scalar_select %p227, %s23, 0
          %s229 = sadd.s32 %s228, %s226
          %s230 = sadd.s32 %s229, 2
          %s231 = smul.addr %s230, 8
          %s232 = scalar_lea.vmem %s1, %s231
        $region32: #{multi_head_attention.3} parent=23 // pred_fallthru
          _
        // Predicated region
        $region33: #{multi_head_attention.3} parent=23 // pred_check
          %p233 = pneg %p111
        $region34: #{multi_head_attention.3} parent=23 // pred_check_branch
          %235 = sbr.rel (%p233) target = $region36
        $region35: #{multi_head_attention.3} parent=23 // pred_region
          %p236 = scmp.lt.s32.totalorder %s21, 1
          %s237 = scalar_select %p236, %s21, 1
          %p238 = scmp.lt.s32.totalorder %s23, 0
          %s239 = scalar_select %p238, %s23, 0
          %s240 = sadd.s32 %s239, %s237
          %s241 = sadd.s32 %s240, 4
          %s242 = smul.addr %s241, 8
          %s243 = scalar_lea.vmem %s2, %s242
        $region36: #{multi_head_attention.3} parent=23 // pred_fallthru
          _
      $region24: #{multi_head_attention.3} parent=5 // pred_fallthru
        _
      %p244 = scmp.le.s32.totalorder 1, %s14
      %p245 = scmp.lt.s32.totalorder %s14, 3
      %p246 = pnand %p244, %p245
      %p247 = pneg %p246
      // Predicated region
      $region37: #{multi_head_attention.3} parent=5 // pred_check
        _
      $region38: #{multi_head_attention.3} parent=5 // pred_check_branch
        %249 = sbr.rel (%p246) target = $region40
      $region39: #{multi_head_attention.3} parent=5 // pred_region
        %s250 = ssub.s32 %s14, 1
        %p251 = scmp.lt.s32.totalorder %s24, 1
        %s252 = scalar_select %p251, %s24, 1
        %p253 = scmp.lt.s32.totalorder %s25, 0
        %s254 = scalar_select %p253, %s25, 0
        %s255 = sadd.s32 %s254, %s252
        %s256 = smul.addr %s255, 8
        %s257 = scalar_lea.vmem %s0, %s256
        %p258 = pneg %p61
        %p259 = pneg %p58
        %p260 = scmp.lt.s32.totalorder %s24, 1
        %s261 = scalar_select %p260, %s24, 1
        %p262 = scmp.lt.s32.totalorder %s26, 0
        %s263 = scalar_select %p262, %s26, 0
        %s264 = sadd.s32 %s263, %s261
        %s265 = sadd.s32 %s264, 2
        %s266 = smul.addr %s265, 8
        %s267 = scalar_lea.vmem %s1, %s266
        %p268 = pneg %p89
        %p269 = pneg %p86
        %p270 = scmp.lt.s32.totalorder %s24, 1
        %s271 = scalar_select %p270, %s24, 1
        %p272 = scmp.lt.s32.totalorder %s26, 0
        %s273 = scalar_select %p272, %s26, 0
        %s274 = sadd.s32 %s273, %s271
        %s275 = sadd.s32 %s274, 4
        %s276 = smul.addr %s275, 8
        %s277 = scalar_lea.vmem %s2, %s276
        %p278 = pneg %p117
        %p279 = pneg %p114
        %p280 = pneg %p138
        %p281 = pneg %p135
        %p282 = pneg %p159
        %p283 = pneg %p156
        %p284 = pneg %p187
        %p285 = pneg %p184
        %s286 = sand.u32 %s174, 1
        %s287 = scalar_lea.sflag [#allocation6], %s286
        %s288 = sand.u32 %s174, 1
        %s289 = smul.addr %s288, 8
        %s290 = scalar_lea.vmem [#allocation5], %s289
        %p291 = scmp.lt.s32.totalorder %s24, 1
        %s292 = scalar_select %p291, %s24, 1
        %p293 = scmp.lt.s32.totalorder %s25, 0
        %s294 = scalar_select %p293, %s25, 0
        %s295 = sadd.s32 %s294, %s292
        %s296 = smul.addr %s295, 8
        %s297 = scalar_lea.vmem %s0, %s296
        %p298 = scmp.lt.s32.totalorder %s24, 1
        %s299 = scalar_select %p298, %s24, 1
        %p300 = scmp.lt.s32.totalorder %s26, 0
        %s301 = scalar_select %p300, %s26, 0
        %s302 = sadd.s32 %s301, %s299
        %s303 = sadd.s32 %s302, 2
        %s304 = smul.addr %s303, 8
        %s305 = scalar_lea.vmem %s1, %s304
        %p306 = scmp.lt.s32.totalorder %s24, 1
        %s307 = scalar_select %p306, %s24, 1
        %p308 = scmp.lt.s32.totalorder %s26, 0
        %s309 = scalar_select %p308, %s26, 0
        %s310 = sadd.s32 %s309, %s307
        %s311 = sadd.s32 %s310, 4
        %s312 = smul.addr %s311, 8
        %s313 = scalar_lea.vmem %s2, %s312
        %p314 = scmp.eq.s32.totalorder %s26, 0
        // Predicated region
        $region41: #{multi_head_attention.3} parent=39 // pred_check
          %p315 = pneg %p314
        $region42: #{multi_head_attention.3} parent=39 // pred_check_branch
          %317 = sbr.rel (%p315) target = $region44
        $region43: #{multi_head_attention.3} parent=39 // pred_region
          %vm318 = vcmask 7168
          %319 = vst.msk [vmem:[#allocation2] sm:$0xff] %vm318, -inf
          %320 = vst.msk [vmem:[#allocation2 + $0x8] sm:$0xff] %vm318, -inf
          %321 = vst.msk [vmem:[#allocation2 + $0x10] sm:$0xff] %vm318, -inf
          %322 = vst.msk [vmem:[#allocation2 + $0x18] sm:$0xff] %vm318, -inf
          %323 = vst.msk [vmem:[#allocation3] sm:$0xff] %vm318, 0.0
          %324 = vst.msk [vmem:[#allocation3 + $0x8] sm:$0xff] %vm318, 0.0
          %325 = vst.msk [vmem:[#allocation3 + $0x10] sm:$0xff] %vm318, 0.0
          %326 = vst.msk [vmem:[#allocation3 + $0x18] sm:$0xff] %vm318, 0.0
          %vm327 = vcmask 64512
          %328 = vst.msk [vmem:[#allocation4] sm:$0xff] %vm327, 0.0
          %329 = vst.msk [vmem:[#allocation4 + $0x8] sm:$0xff] %vm327, 0.0
          %330 = vst.msk [vmem:[#allocation4 + $0x10] sm:$0xff] %vm327, 0.0
          %331 = vst.msk [vmem:[#allocation4 + $0x18] sm:$0xff] %vm327, 0.0
        $region44: #{multi_head_attention.3} parent=39 // pred_fallthru
          _
        %v332 = vld [vmem:[%s297] sm:$0xff]
        %334 = vrot.lane.b32.xlu0 %v332, 120
        %v335 = vpop.permute.xlu0 %334
        %337 = vrot.lane.b32.xlu0 %v332, 112
        %v338 = vpop.permute.xlu0 %337
        %340 = vrot.lane.b32.xlu0 %v332, 104
        %v341 = vpop.permute.xlu0 %340
        %v343 = vcombine.low %v332, %v338
        %v344 = vcombine.high %v332, %v338
        %v346 = vunpack.c.l.s4 1983009808
        %v347 = vunpack.c.0.s8 %v346
        %v348 = vlaneseq
        %v349 = vshrl.u32 %v348, 7
        %v350 = vsub.s32 %v347, %v349
        %v351 = vrot.slane %v343, %v350
        %v353 = vunpack.c.l.s4 1983009808
        %v354 = vunpack.c.0.s8 %v353
        %v355 = vlaneseq
        %v356 = vshrl.u32 %v355, 7
        %v357 = vsub.s32 %v354, %v356
        %v358 = vrot.slane %v344, %v357
        %v359 = vcombine.low %v335, %v341
        %v360 = vcombine.high %v335, %v341
        %v362 = vunpack.c.l.s4 1983009808
        %v363 = vunpack.c.0.s8 %v362
        %v364 = vlaneseq
        %v365 = vshrl.u32 %v364, 7
        %v366 = vsub.s32 %v363, %v365
        %v367 = vrot.slane %v359, %v366
        %v369 = vunpack.c.l.s4 1983009808
        %v370 = vunpack.c.0.s8 %v369
        %v371 = vlaneseq
        %v372 = vshrl.u32 %v371, 7
        %v373 = vsub.s32 %v370, %v372
        %v374 = vrot.slane %v360, %v373
        %v375 = vcombine.low %v351, %v367
        %v376 = vcombine.high %v351, %v367
        %v378 = vunpack.c.l.s4 1934713408
        %v379 = vunpack.c.0.s8 %v378
        %v380 = vlaneseq
        %v381 = vshrl.u32 %v380, 7
        %v382 = vsub.s32 %v379, %v381
        %v383 = vrot.slane %v375, %v382
        %v385 = vunpack.c.l.s4 1934713408
        %v386 = vunpack.c.0.s8 %v385
        %v387 = vlaneseq
        %v388 = vshrl.u32 %v387, 7
        %v389 = vsub.s32 %v386, %v388
        %v390 = vrot.slane %v376, %v389
        %v391 = vcombine.low %v358, %v374
        %v392 = vcombine.high %v358, %v374
        %v394 = vunpack.c.l.s4 1934713408
        %v395 = vunpack.c.0.s8 %v394
        %v396 = vlaneseq
        %v397 = vshrl.u32 %v396, 7
        %v398 = vsub.s32 %v395, %v397
        %v399 = vrot.slane %v391, %v398
        %v401 = vunpack.c.l.s4 1934713408
        %v402 = vunpack.c.0.s8 %v401
        %v403 = vlaneseq
        %v404 = vshrl.u32 %v403, 7
        %v405 = vsub.s32 %v402, %v404
        %v406 = vrot.slane %v392, %v405
        %v407 = vcombine.high %v383, 0.0
        %v408 = vcombine.high %v390, 0.0
        %v409 = vcombine.high %v399, 0.0
        %v410 = vcombine.high %v406, 0.0
        %v411 = vld [vmem:[%s305] sm:$0xff]
        %413 = vrot.lane.b32.xlu0 %v411, 120
        %v414 = vpop.permute.xlu0 %413
        %416 = vrot.lane.b32.xlu0 %v411, 112
        %v417 = vpop.permute.xlu0 %416
        %419 = vrot.lane.b32.xlu0 %v411, 104
        %v420 = vpop.permute.xlu0 %419
        %v422 = vcombine.low %v411, %v417
        %v423 = vcombine.high %v411, %v417
        %v425 = vunpack.c.l.s4 1983009808
        %v426 = vunpack.c.0.s8 %v425
        %v427 = vlaneseq
        %v428 = vshrl.u32 %v427, 7
        %v429 = vsub.s32 %v426, %v428
        %v430 = vrot.slane %v422, %v429
        %v432 = vunpack.c.l.s4 1983009808
        %v433 = vunpack.c.0.s8 %v432
        %v434 = vlaneseq
        %v435 = vshrl.u32 %v434, 7
        %v436 = vsub.s32 %v433, %v435
        %v437 = vrot.slane %v423, %v436
        %v438 = vcombine.low %v414, %v420
        %v439 = vcombine.high %v414, %v420
        %v441 = vunpack.c.l.s4 1983009808
        %v442 = vunpack.c.0.s8 %v441
        %v443 = vlaneseq
        %v444 = vshrl.u32 %v443, 7
        %v445 = vsub.s32 %v442, %v444
        %v446 = vrot.slane %v438, %v445
        %v448 = vunpack.c.l.s4 1983009808
        %v449 = vunpack.c.0.s8 %v448
        %v450 = vlaneseq
        %v451 = vshrl.u32 %v450, 7
        %v452 = vsub.s32 %v449, %v451
        %v453 = vrot.slane %v439, %v452
        %v454 = vcombine.low %v430, %v446
        %v455 = vcombine.high %v430, %v446
        %v457 = vunpack.c.l.s4 1934713408
        %v458 = vunpack.c.0.s8 %v457
        %v459 = vlaneseq
        %v460 = vshrl.u32 %v459, 7
        %v461 = vsub.s32 %v458, %v460
        %v462 = vrot.slane %v454, %v461
        %v464 = vunpack.c.l.s4 1934713408
        %v465 = vunpack.c.0.s8 %v464
        %v466 = vlaneseq
        %v467 = vshrl.u32 %v466, 7
        %v468 = vsub.s32 %v465, %v467
        %v469 = vrot.slane %v455, %v468
        %v470 = vcombine.low %v437, %v453
        %v471 = vcombine.high %v437, %v453
        %v473 = vunpack.c.l.s4 1934713408
        %v474 = vunpack.c.0.s8 %v473
        %v475 = vlaneseq
        %v476 = vshrl.u32 %v475, 7
        %v477 = vsub.s32 %v474, %v476
        %v478 = vrot.slane %v470, %v477
        %v480 = vunpack.c.l.s4 1934713408
        %v481 = vunpack.c.0.s8 %v480
        %v482 = vlaneseq
        %v483 = vshrl.u32 %v482, 7
        %v484 = vsub.s32 %v481, %v483
        %v485 = vrot.slane %v471, %v484
        %v486 = vcombine.high %v462, 0.0
        %v487 = vcombine.high %v469, 0.0
        %v488 = vcombine.high %v478, 0.0
        %v489 = vcombine.high %v485, 0.0
        %v490 = vld [vmem:[%s313] sm:$0xff]
        %492 = vrot.lane.b32.xlu0 %v490, 120
        %v493 = vpop.permute.xlu0 %492
        %495 = vrot.lane.b32.xlu0 %v490, 112
        %v496 = vpop.permute.xlu0 %495
        %498 = vrot.lane.b32.xlu0 %v490, 104
        %v499 = vpop.permute.xlu0 %498
        %v501 = vcombine.low %v490, %v496
        %v502 = vcombine.high %v490, %v496
        %v504 = vunpack.c.l.s4 1983009808
        %v505 = vunpack.c.0.s8 %v504
        %v506 = vlaneseq
        %v507 = vshrl.u32 %v506, 7
        %v508 = vsub.s32 %v505, %v507
        %v509 = vrot.slane %v501, %v508
        %v511 = vunpack.c.l.s4 1983009808
        %v512 = vunpack.c.0.s8 %v511
        %v513 = vlaneseq
        %v514 = vshrl.u32 %v513, 7
        %v515 = vsub.s32 %v512, %v514
        %v516 = vrot.slane %v502, %v515
        %v517 = vcombine.low %v493, %v499
        %v518 = vcombine.high %v493, %v499
        %v520 = vunpack.c.l.s4 1983009808
        %v521 = vunpack.c.0.s8 %v520
        %v522 = vlaneseq
        %v523 = vshrl.u32 %v522, 7
        %v524 = vsub.s32 %v521, %v523
        %v525 = vrot.slane %v517, %v524
        %v527 = vunpack.c.l.s4 1983009808
        %v528 = vunpack.c.0.s8 %v527
        %v529 = vlaneseq
        %v530 = vshrl.u32 %v529, 7
        %v531 = vsub.s32 %v528, %v530
        %v532 = vrot.slane %v518, %v531
        %v533 = vcombine.low %v509, %v525
        %v534 = vcombine.high %v509, %v525
        %v536 = vunpack.c.l.s4 1934713408
        %v537 = vunpack.c.0.s8 %v536
        %v538 = vlaneseq
        %v539 = vshrl.u32 %v538, 7
        %v540 = vsub.s32 %v537, %v539
        %v541 = vrot.slane %v533, %v540
        %v543 = vunpack.c.l.s4 1934713408
        %v544 = vunpack.c.0.s8 %v543
        %v545 = vlaneseq
        %v546 = vshrl.u32 %v545, 7
        %v547 = vsub.s32 %v544, %v546
        %v548 = vrot.slane %v534, %v547
        %v549 = vcombine.low %v516, %v532
        %v550 = vcombine.high %v516, %v532
        %v552 = vunpack.c.l.s4 1934713408
        %v553 = vunpack.c.0.s8 %v552
        %v554 = vlaneseq
        %v555 = vshrl.u32 %v554, 7
        %v556 = vsub.s32 %v553, %v555
        %v557 = vrot.slane %v549, %v556
        %v559 = vunpack.c.l.s4 1934713408
        %v560 = vunpack.c.0.s8 %v559
        %v561 = vlaneseq
        %v562 = vshrl.u32 %v561, 7
        %v563 = vsub.s32 %v560, %v562
        %v564 = vrot.slane %v550, %v563
        %v565 = vcombine.high %v541, 0.0
        %v566 = vcombine.high %v548, 0.0
        %v567 = vcombine.high %v557, 0.0
        %v568 = vcombine.high %v564, 0.0
        %v569 = vcombine.low %v383, %v390
        %v571 = vunpack.c.l.s4 1983009808
        %v572 = vunpack.c.0.s8 %v571
        %v573 = vlaneseq
        %v574 = vshrl.u32 %v573, 7
        %v575 = vsub.s32 %v572, %v574
        %v576 = vrot.slane %v569, %v575
        %v577 = vcombine.low %v407, %v408
        %v579 = vunpack.c.l.s4 1983009808
        %v580 = vunpack.c.0.s8 %v579
        %v581 = vlaneseq
        %v582 = vshrl.u32 %v581, 7
        %v583 = vsub.s32 %v580, %v582
        %v584 = vrot.slane %v577, %v583
        %v585 = vcombine.low %v399, %v406
        %v587 = vunpack.c.l.s4 1983009808
        %v588 = vunpack.c.0.s8 %v587
        %v589 = vlaneseq
        %v590 = vshrl.u32 %v589, 7
        %v591 = vsub.s32 %v588, %v590
        %v592 = vrot.slane %v585, %v591
        %v593 = vcombine.low %v409, %v410
        %v595 = vunpack.c.l.s4 1983009808
        %v596 = vunpack.c.0.s8 %v595
        %v597 = vlaneseq
        %v598 = vshrl.u32 %v597, 7
        %v599 = vsub.s32 %v596, %v598
        %v600 = vrot.slane %v593, %v599
        %v601 = vcombine.low %v576, %v584
        %v602 = vcombine.high %v576, %v584
        %v604 = vunpack.c.l.s4 1934713408
        %v605 = vunpack.c.0.s8 %v604
        %v606 = vlaneseq
        %v607 = vshrl.u32 %v606, 7
        %v608 = vsub.s32 %v605, %v607
        %v609 = vrot.slane %v601, %v608
        %v611 = vunpack.c.l.s4 1934713408
        %v612 = vunpack.c.0.s8 %v611
        %v613 = vlaneseq
        %v614 = vshrl.u32 %v613, 7
        %v615 = vsub.s32 %v612, %v614
        %v616 = vrot.slane %v602, %v615
        %v617 = vcombine.low %v592, %v600
        %v618 = vcombine.high %v592, %v600
        %v620 = vunpack.c.l.s4 1934713408
        %v621 = vunpack.c.0.s8 %v620
        %v622 = vlaneseq
        %v623 = vshrl.u32 %v622, 7
        %v624 = vsub.s32 %v621, %v623
        %v625 = vrot.slane %v617, %v624
        %v627 = vunpack.c.l.s4 1934713408
        %v628 = vunpack.c.0.s8 %v627
        %v629 = vlaneseq
        %v630 = vshrl.u32 %v629, 7
        %v631 = vsub.s32 %v628, %v630
        %v632 = vrot.slane %v618, %v631
        %v633 = vcombine.low %v609, %v625
        %v634 = vcombine.high %v609, %v625
        %v635 = vcombine.low %v616, %v632
        %v636 = vcombine.high %v616, %v632
        %637 = vxpose.xlu0.b32.start [1/16] %v462, 128
        %638 = vxpose.xlu0.b32.cont [2/16] 0.0, 128
        %639 = vxpose.xlu0.b32.cont [3/16] 0.0, 128
        %640 = vxpose.xlu0.b32.cont [4/16] 0.0, 128
        %641 = vxpose.xlu0.b32.cont [5/16] 0.0, 128
        %642 = vxpose.xlu0.b32.cont [6/16] 0.0, 128
        %643 = vxpose.xlu0.b32.cont [7/16] 0.0, 128
        %644 = vxpose.xlu0.b32.cont [8/16] 0.0, 128
        %645 = vxpose.xlu0.b32.cont [9/16] 0.0, 128
        %646 = vxpose.xlu0.b32.cont [10/16] 0.0, 128
        %647 = vxpose.xlu0.b32.cont [11/16] 0.0, 128
        %648 = vxpose.xlu0.b32.cont [12/16] 0.0, 128
        %649 = vxpose.xlu0.b32.cont [13/16] 0.0, 128
        %650 = vxpose.xlu0.b32.cont [14/16] 0.0, 128
        %651 = vxpose.xlu0.b32.cont [15/16] 0.0, 128
        %652 = vxpose.xlu0.b32.end [16/16] 0.0, 128
        %v653 = vpop.trf.xlu0
        %v654 = vpop.trf.xlu0
        %v655 = vpop.trf.xlu0
        %v656 = vpop.trf.xlu0
        %v657 = vpop.trf.xlu0
        %v658 = vpop.trf.xlu0
        %v659 = vpop.trf.xlu0
        %v660 = vpop.trf.xlu0
        %v661 = vpop.trf.xlu0
        %v662 = vpop.trf.xlu0
        %v663 = vpop.trf.xlu0
        %v664 = vpop.trf.xlu0
        %v665 = vpop.trf.xlu0
        %v666 = vpop.trf.xlu0
        %v667 = vpop.trf.xlu0
        %v668 = vpop.trf.xlu0
        %669 = vxpose.xlu0.b32.start [1/16] %v486, 128
        %670 = vxpose.xlu0.b32.cont [2/16] 0.0, 128
        %671 = vxpose.xlu0.b32.cont [3/16] 0.0, 128
        %672 = vxpose.xlu0.b32.cont [4/16] 0.0, 128
        %673 = vxpose.xlu0.b32.cont [5/16] 0.0, 128
        %674 = vxpose.xlu0.b32.cont [6/16] 0.0, 128
        %675 = vxpose.xlu0.b32.cont [7/16] 0.0, 128
        %676 = vxpose.xlu0.b32.cont [8/16] 0.0, 128
        %677 = vxpose.xlu0.b32.cont [9/16] 0.0, 128
        %678 = vxpose.xlu0.b32.cont [10/16] 0.0, 128
        %679 = vxpose.xlu0.b32.cont [11/16] 0.0, 128
        %680 = vxpose.xlu0.b32.cont [12/16] 0.0, 128
        %681 = vxpose.xlu0.b32.cont [13/16] 0.0, 128
        %682 = vxpose.xlu0.b32.cont [14/16] 0.0, 128
        %683 = vxpose.xlu0.b32.cont [15/16] 0.0, 128
        %684 = vxpose.xlu0.b32.end [16/16] 0.0, 128
        %v685 = vpop.trf.xlu0
        %v686 = vpop.trf.xlu0
        %v687 = vpop.trf.xlu0
        %v688 = vpop.trf.xlu0
        %v689 = vpop.trf.xlu0
        %v690 = vpop.trf.xlu0
        %v691 = vpop.trf.xlu0
        %v692 = vpop.trf.xlu0
        %v693 = vpop.trf.xlu0
        %v694 = vpop.trf.xlu0
        %v695 = vpop.trf.xlu0
        %v696 = vpop.trf.xlu0
        %v697 = vpop.trf.xlu0
        %v698 = vpop.trf.xlu0
        %v699 = vpop.trf.xlu0
        %v700 = vpop.trf.xlu0
        %701 = vxpose.xlu0.b32.start [1/16] %v469, 128
        %702 = vxpose.xlu0.b32.cont [2/16] 0.0, 128
        %703 = vxpose.xlu0.b32.cont [3/16] 0.0, 128
        %704 = vxpose.xlu0.b32.cont [4/16] 0.0, 128
        %705 = vxpose.xlu0.b32.cont [5/16] 0.0, 128
        %706 = vxpose.xlu0.b32.cont [6/16] 0.0, 128
        %707 = vxpose.xlu0.b32.cont [7/16] 0.0, 128
        %708 = vxpose.xlu0.b32.cont [8/16] 0.0, 128
        %709 = vxpose.xlu0.b32.cont [9/16] 0.0, 128
        %710 = vxpose.xlu0.b32.cont [10/16] 0.0, 128
        %711 = vxpose.xlu0.b32.cont [11/16] 0.0, 128
        %712 = vxpose.xlu0.b32.cont [12/16] 0.0, 128
        %713 = vxpose.xlu0.b32.cont [13/16] 0.0, 128
        %714 = vxpose.xlu0.b32.cont [14/16] 0.0, 128
        %715 = vxpose.xlu0.b32.cont [15/16] 0.0, 128
        %716 = vxpose.xlu0.b32.end [16/16] 0.0, 128
        %v717 = vpop.trf.xlu0
        %v718 = vpop.trf.xlu0
        %v719 = vpop.trf.xlu0
        %v720 = vpop.trf.xlu0
        %v721 = vpop.trf.xlu0
        %v722 = vpop.trf.xlu0
        %v723 = vpop.trf.xlu0
        %v724 = vpop.trf.xlu0
        %v725 = vpop.trf.xlu0
        %v726 = vpop.trf.xlu0
        %v727 = vpop.trf.xlu0
        %v728 = vpop.trf.xlu0
        %v729 = vpop.trf.xlu0
        %v730 = vpop.trf.xlu0
        %v731 = vpop.trf.xlu0
        %v732 = vpop.trf.xlu0
        %733 = vxpose.xlu0.b32.start [1/16] %v487, 128
        %734 = vxpose.xlu0.b32.cont [2/16] 0.0, 128
        %735 = vxpose.xlu0.b32.cont [3/16] 0.0, 128
        %736 = vxpose.xlu0.b32.cont [4/16] 0.0, 128
        %737 = vxpose.xlu0.b32.cont [5/16] 0.0, 128
        %738 = vxpose.xlu0.b32.cont [6/16] 0.0, 128
        %739 = vxpose.xlu0.b32.cont [7/16] 0.0, 128
        %740 = vxpose.xlu0.b32.cont [8/16] 0.0, 128
        %741 = vxpose.xlu0.b32.cont [9/16] 0.0, 128
        %742 = vxpose.xlu0.b32.cont [10/16] 0.0, 128
        %743 = vxpose.xlu0.b32.cont [11/16] 0.0, 128
        %744 = vxpose.xlu0.b32.cont [12/16] 0.0, 128
        %745 = vxpose.xlu0.b32.cont [13/16] 0.0, 128
        %746 = vxpose.xlu0.b32.cont [14/16] 0.0, 128
        %747 = vxpose.xlu0.b32.cont [15/16] 0.0, 128
        %748 = vxpose.xlu0.b32.end [16/16] 0.0, 128
        %v749 = vpop.trf.xlu0
        %v750 = vpop.trf.xlu0
        %v751 = vpop.trf.xlu0
        %v752 = vpop.trf.xlu0
        %v753 = vpop.trf.xlu0
        %v754 = vpop.trf.xlu0
        %v755 = vpop.trf.xlu0
        %v756 = vpop.trf.xlu0
        %v757 = vpop.trf.xlu0
        %v758 = vpop.trf.xlu0
        %v759 = vpop.trf.xlu0
        %v760 = vpop.trf.xlu0
        %v761 = vpop.trf.xlu0
        %v762 = vpop.trf.xlu0
        %v763 = vpop.trf.xlu0
        %v764 = vpop.trf.xlu0
        %765 = vxpose.xlu0.b32.start [1/16] %v478, 128
        %766 = vxpose.xlu0.b32.cont [2/16] 0.0, 128
        %767 = vxpose.xlu0.b32.cont [3/16] 0.0, 128
        %768 = vxpose.xlu0.b32.cont [4/16] 0.0, 128
        %769 = vxpose.xlu0.b32.cont [5/16] 0.0, 128
        %770 = vxpose.xlu0.b32.cont [6/16] 0.0, 128
        %771 = vxpose.xlu0.b32.cont [7/16] 0.0, 128
        %772 = vxpose.xlu0.b32.cont [8/16] 0.0, 128
        %773 = vxpose.xlu0.b32.cont [9/16] 0.0, 128
        %774 = vxpose.xlu0.b32.cont [10/16] 0.0, 128
        %775 = vxpose.xlu0.b32.cont [11/16] 0.0, 128
        %776 = vxpose.xlu0.b32.cont [12/16] 0.0, 128
        %777 = vxpose.xlu0.b32.cont [13/16] 0.0, 128
        %778 = vxpose.xlu0.b32.cont [14/16] 0.0, 128
        %779 = vxpose.xlu0.b32.cont [15/16] 0.0, 128
        %780 = vxpose.xlu0.b32.end [16/16] 0.0, 128
        %v781 = vpop.trf.xlu0
        %v782 = vpop.trf.xlu0
        %v783 = vpop.trf.xlu0
        %v784 = vpop.trf.xlu0
        %v785 = vpop.trf.xlu0
        %v786 = vpop.trf.xlu0
        %v787 = vpop.trf.xlu0
        %v788 = vpop.trf.xlu0
        %v789 = vpop.trf.xlu0
        %v790 = vpop.trf.xlu0
        %v791 = vpop.trf.xlu0
        %v792 = vpop.trf.xlu0
        %v793 = vpop.trf.xlu0
        %v794 = vpop.trf.xlu0
        %v795 = vpop.trf.xlu0
        %v796 = vpop.trf.xlu0
        %797 = vxpose.xlu0.b32.start [1/16] %v488, 128
        %798 = vxpose.xlu0.b32.cont [2/16] 0.0, 128
        %799 = vxpose.xlu0.b32.cont [3/16] 0.0, 128
        %800 = vxpose.xlu0.b32.cont [4/16] 0.0, 128
        %801 = vxpose.xlu0.b32.cont [5/16] 0.0, 128
        %802 = vxpose.xlu0.b32.cont [6/16] 0.0, 128
        %803 = vxpose.xlu0.b32.cont [7/16] 0.0, 128
        %804 = vxpose.xlu0.b32.cont [8/16] 0.0, 128
        %805 = vxpose.xlu0.b32.cont [9/16] 0.0, 128
        %806 = vxpose.xlu0.b32.cont [10/16] 0.0, 128
        %807 = vxpose.xlu0.b32.cont [11/16] 0.0, 128
        %808 = vxpose.xlu0.b32.cont [12/16] 0.0, 128
        %809 = vxpose.xlu0.b32.cont [13/16] 0.0, 128
        %810 = vxpose.xlu0.b32.cont [14/16] 0.0, 128
        %811 = vxpose.xlu0.b32.cont [15/16] 0.0, 128
        %812 = vxpose.xlu0.b32.end [16/16] 0.0, 128
        %v813 = vpop.trf.xlu0
        %v814 = vpop.trf.xlu0
        %v815 = vpop.trf.xlu0
        %v816 = vpop.trf.xlu0
        %v817 = vpop.trf.xlu0
        %v818 = vpop.trf.xlu0
        %v819 = vpop.trf.xlu0
        %v820 = vpop.trf.xlu0
        %v821 = vpop.trf.xlu0
        %v822 = vpop.trf.xlu0
        %v823 = vpop.trf.xlu0
        %v824 = vpop.trf.xlu0
        %v825 = vpop.trf.xlu0
        %v826 = vpop.trf.xlu0
        %v827 = vpop.trf.xlu0
        %v828 = vpop.trf.xlu0
        %829 = vxpose.xlu0.b32.start [1/16] %v485, 128
        %830 = vxpose.xlu0.b32.cont [2/16] 0.0, 128
        %831 = vxpose.xlu0.b32.cont [3/16] 0.0, 128
        %832 = vxpose.xlu0.b32.cont [4/16] 0.0, 128
        %833 = vxpose.xlu0.b32.cont [5/16] 0.0, 128
        %834 = vxpose.xlu0.b32.cont [6/16] 0.0, 128
        %835 = vxpose.xlu0.b32.cont [7/16] 0.0, 128
        %836 = vxpose.xlu0.b32.cont [8/16] 0.0, 128
        %837 = vxpose.xlu0.b32.cont [9/16] 0.0, 128
        %838 = vxpose.xlu0.b32.cont [10/16] 0.0, 128
        %839 = vxpose.xlu0.b32.cont [11/16] 0.0, 128
        %840 = vxpose.xlu0.b32.cont [12/16] 0.0, 128
        %841 = vxpose.xlu0.b32.cont [13/16] 0.0, 128
        %842 = vxpose.xlu0.b32.cont [14/16] 0.0, 128
        %843 = vxpose.xlu0.b32.cont [15/16] 0.0, 128
        %844 = vxpose.xlu0.b32.end [16/16] 0.0, 128
        %v845 = vpop.trf.xlu0
        %v846 = vpop.trf.xlu0
        %v847 = vpop.trf.xlu0
        %v848 = vpop.trf.xlu0
        %v849 = vpop.trf.xlu0
        %v850 = vpop.trf.xlu0
        %v851 = vpop.trf.xlu0
        %v852 = vpop.trf.xlu0
        %v853 = vpop.trf.xlu0
        %v854 = vpop.trf.xlu0
        %v855 = vpop.trf.xlu0
        %v856 = vpop.trf.xlu0
        %v857 = vpop.trf.xlu0
        %v858 = vpop.trf.xlu0
        %v859 = vpop.trf.xlu0
        %v860 = vpop.trf.xlu0
        %861 = vxpose.xlu0.b32.start [1/16] %v489, 128
        %862 = vxpose.xlu0.b32.cont [2/16] 0.0, 128
        %863 = vxpose.xlu0.b32.cont [3/16] 0.0, 128
        %864 = vxpose.xlu0.b32.cont [4/16] 0.0, 128
        %865 = vxpose.xlu0.b32.cont [5/16] 0.0, 128
        %866 = vxpose.xlu0.b32.cont [6/16] 0.0, 128
        %867 = vxpose.xlu0.b32.cont [7/16] 0.0, 128
        %868 = vxpose.xlu0.b32.cont [8/16] 0.0, 128
        %869 = vxpose.xlu0.b32.cont [9/16] 0.0, 128
        %870 = vxpose.xlu0.b32.cont [10/16] 0.0, 128
        %871 = vxpose.xlu0.b32.cont [11/16] 0.0, 128
        %872 = vxpose.xlu0.b32.cont [12/16] 0.0, 128
        %873 = vxpose.xlu0.b32.cont [13/16] 0.0, 128
        %874 = vxpose.xlu0.b32.cont [14/16] 0.0, 128
        %875 = vxpose.xlu0.b32.cont [15/16] 0.0, 128
        %876 = vxpose.xlu0.b32.end [16/16] 0.0, 128
        %v877 = vpop.trf.xlu0
        %v878 = vpop.trf.xlu0
        %v879 = vpop.trf.xlu0
        %v880 = vpop.trf.xlu0
        %v881 = vpop.trf.xlu0
        %v882 = vpop.trf.xlu0
        %v883 = vpop.trf.xlu0
        %v884 = vpop.trf.xlu0
        %v885 = vpop.trf.xlu0
        %v886 = vpop.trf.xlu0
        %v887 = vpop.trf.xlu0
        %v888 = vpop.trf.xlu0
        %v889 = vpop.trf.xlu0
        %v890 = vpop.trf.xlu0
        %v891 = vpop.trf.xlu0
        %v892 = vpop.trf.xlu0
        %v893 = vcombine.low %v653, %v717
        %v894 = vcombine.high %v653, %v717
        %v896 = vunpack.c.l.s4 1983009808
        %v897 = vunpack.c.0.s8 %v896
        %v898 = vlaneseq
        %v899 = vshrl.u32 %v898, 7
        %v900 = vsub.s32 %v897, %v899
        %v901 = vrot.slane %v893, %v900
        %v903 = vunpack.c.l.s4 1983009808
        %v904 = vunpack.c.0.s8 %v903
        %v905 = vlaneseq
        %v906 = vshrl.u32 %v905, 7
        %v907 = vsub.s32 %v904, %v906
        %v908 = vrot.slane %v894, %v907
        %v909 = vcombine.low %v685, %v749
        %v910 = vcombine.high %v685, %v749
        %v912 = vunpack.c.l.s4 1983009808
        %v913 = vunpack.c.0.s8 %v912
        %v914 = vlaneseq
        %v915 = vshrl.u32 %v914, 7
        %v916 = vsub.s32 %v913, %v915
        %v917 = vrot.slane %v909, %v916
        %v919 = vunpack.c.l.s4 1983009808
        %v920 = vunpack.c.0.s8 %v919
        %v921 = vlaneseq
        %v922 = vshrl.u32 %v921, 7
        %v923 = vsub.s32 %v920, %v922
        %v924 = vrot.slane %v910, %v923
        %v925 = vcombine.low %v781, %v845
        %v926 = vcombine.high %v781, %v845
        %v928 = vunpack.c.l.s4 1983009808
        %v929 = vunpack.c.0.s8 %v928
        %v930 = vlaneseq
        %v931 = vshrl.u32 %v930, 7
        %v932 = vsub.s32 %v929, %v931
        %v933 = vrot.slane %v925, %v932
        %v935 = vunpack.c.l.s4 1983009808
        %v936 = vunpack.c.0.s8 %v935
        %v937 = vlaneseq
        %v938 = vshrl.u32 %v937, 7
        %v939 = vsub.s32 %v936, %v938
        %v940 = vrot.slane %v926, %v939
        %v941 = vcombine.low %v813, %v877
        %v942 = vcombine.high %v813, %v877
        %v944 = vunpack.c.l.s4 1983009808
        %v945 = vunpack.c.0.s8 %v944
        %v946 = vlaneseq
        %v947 = vshrl.u32 %v946, 7
        %v948 = vsub.s32 %v945, %v947
        %v949 = vrot.slane %v941, %v948
        %v951 = vunpack.c.l.s4 1983009808
        %v952 = vunpack.c.0.s8 %v951
        %v953 = vlaneseq
        %v954 = vshrl.u32 %v953, 7
        %v955 = vsub.s32 %v952, %v954
        %v956 = vrot.slane %v942, %v955
        %v957 = vcombine.low %v901, %v917
        %v958 = vcombine.high %v901, %v917
        %v960 = vunpack.c.l.s4 1934713408
        %v961 = vunpack.c.0.s8 %v960
        %v962 = vlaneseq
        %v963 = vshrl.u32 %v962, 7
        %v964 = vsub.s32 %v961, %v963
        %v965 = vrot.slane %v957, %v964
        %v967 = vunpack.c.l.s4 1934713408
        %v968 = vunpack.c.0.s8 %v967
        %v969 = vlaneseq
        %v970 = vshrl.u32 %v969, 7
        %v971 = vsub.s32 %v968, %v970
        %v972 = vrot.slane %v958, %v971
        %v973 = vcombine.low %v908, %v924
        %v974 = vcombine.high %v908, %v924
        %v976 = vunpack.c.l.s4 1934713408
        %v977 = vunpack.c.0.s8 %v976
        %v978 = vlaneseq
        %v979 = vshrl.u32 %v978, 7
        %v980 = vsub.s32 %v977, %v979
        %v981 = vrot.slane %v973, %v980
        %v983 = vunpack.c.l.s4 1934713408
        %v984 = vunpack.c.0.s8 %v983
        %v985 = vlaneseq
        %v986 = vshrl.u32 %v985, 7
        %v987 = vsub.s32 %v984, %v986
        %v988 = vrot.slane %v974, %v987
        %v989 = vcombine.low %v933, %v949
        %v990 = vcombine.high %v933, %v949
        %v992 = vunpack.c.l.s4 1934713408
        %v993 = vunpack.c.0.s8 %v992
        %v994 = vlaneseq
        %v995 = vshrl.u32 %v994, 7
        %v996 = vsub.s32 %v993, %v995
        %v997 = vrot.slane %v989, %v996
        %v999 = vunpack.c.l.s4 1934713408
        %v1000 = vunpack.c.0.s8 %v999
        %v1001 = vlaneseq
        %v1002 = vshrl.u32 %v1001, 7
        %v1003 = vsub.s32 %v1000, %v1002
        %v1004 = vrot.slane %v990, %v1003
        %v1005 = vcombine.low %v940, %v956
        %v1006 = vcombine.high %v940, %v956
        %v1008 = vunpack.c.l.s4 1934713408
        %v1009 = vunpack.c.0.s8 %v1008
        %v1010 = vlaneseq
        %v1011 = vshrl.u32 %v1010, 7
        %v1012 = vsub.s32 %v1009, %v1011
        %v1013 = vrot.slane %v1005, %v1012
        %v1015 = vunpack.c.l.s4 1934713408
        %v1016 = vunpack.c.0.s8 %v1015
        %v1017 = vlaneseq
        %v1018 = vshrl.u32 %v1017, 7
        %v1019 = vsub.s32 %v1016, %v1018
        %v1020 = vrot.slane %v1006, %v1019
        %v1021 = vcombine.low %v965, %v997
        %v1022 = vcombine.high %v965, %v997
        %v1023 = vcombine.low %v972, %v1004
        %v1024 = vcombine.high %v972, %v1004
        %v1025 = vcombine.low %v981, %v1013
        %v1026 = vcombine.high %v981, %v1013
        %v1027 = vcombine.low %v988, %v1020
        %v1028 = vcombine.high %v988, %v1020
        %1029 = vxpose.xlu0.b32.start [1/16] %v1021, 128
        %1030 = vxpose.xlu0.b32.cont [2/16] 0.0, 128
        %1031 = vxpose.xlu0.b32.cont [3/16] 0.0, 128
        %1032 = vxpose.xlu0.b32.cont [4/16] 0.0, 128
        %1033 = vxpose.xlu0.b32.cont [5/16] 0.0, 128
        %1034 = vxpose.xlu0.b32.cont [6/16] 0.0, 128
        %1035 = vxpose.xlu0.b32.cont [7/16] 0.0, 128
        %1036 = vxpose.xlu0.b32.cont [8/16] 0.0, 128
        %1037 = vxpose.xlu0.b32.cont [9/16] 0.0, 128
        %1038 = vxpose.xlu0.b32.cont [10/16] 0.0, 128
        %1039 = vxpose.xlu0.b32.cont [11/16] 0.0, 128
        %1040 = vxpose.xlu0.b32.cont [12/16] 0.0, 128
        %1041 = vxpose.xlu0.b32.cont [13/16] 0.0, 128
        %1042 = vxpose.xlu0.b32.cont [14/16] 0.0, 128
        %1043 = vxpose.xlu0.b32.cont [15/16] 0.0, 128
        %1044 = vxpose.xlu0.b32.end [16/16] 0.0, 128
        %v1045 = vpop.trf.xlu0
        %v1046 = vpop.trf.xlu0
        %v1047 = vpop.trf.xlu0
        %v1048 = vpop.trf.xlu0
        %v1049 = vpop.trf.xlu0
        %v1050 = vpop.trf.xlu0
        %v1051 = vpop.trf.xlu0
        %v1052 = vpop.trf.xlu0
        %v1053 = vpop.trf.xlu0
        %v1054 = vpop.trf.xlu0
        %v1055 = vpop.trf.xlu0
        %v1056 = vpop.trf.xlu0
        %v1057 = vpop.trf.xlu0
        %v1058 = vpop.trf.xlu0
        %v1059 = vpop.trf.xlu0
        %v1060 = vpop.trf.xlu0
        %1061 = vxpose.xlu0.b32.start [1/16] %v1022, 128
        %1062 = vxpose.xlu0.b32.cont [2/16] 0.0, 128
        %1063 = vxpose.xlu0.b32.cont [3/16] 0.0, 128
        %1064 = vxpose.xlu0.b32.cont [4/16] 0.0, 128
        %1065 = vxpose.xlu0.b32.cont [5/16] 0.0, 128
        %1066 = vxpose.xlu0.b32.cont [6/16] 0.0, 128
        %1067 = vxpose.xlu0.b32.cont [7/16] 0.0, 128
        %1068 = vxpose.xlu0.b32.cont [8/16] 0.0, 128
        %1069 = vxpose.xlu0.b32.cont [9/16] 0.0, 128
        %1070 = vxpose.xlu0.b32.cont [10/16] 0.0, 128
        %1071 = vxpose.xlu0.b32.cont [11/16] 0.0, 128
        %1072 = vxpose.xlu0.b32.cont [12/16] 0.0, 128
        %1073 = vxpose.xlu0.b32.cont [13/16] 0.0, 128
        %1074 = vxpose.xlu0.b32.cont [14/16] 0.0, 128
        %1075 = vxpose.xlu0.b32.cont [15/16] 0.0, 128
        %1076 = vxpose.xlu0.b32.end [16/16] 0.0, 128
        %v1077 = vpop.trf.xlu0
        %v1078 = vpop.trf.xlu0
        %v1079 = vpop.trf.xlu0
        %v1080 = vpop.trf.xlu0
        %v1081 = vpop.trf.xlu0
        %v1082 = vpop.trf.xlu0
        %v1083 = vpop.trf.xlu0
        %v1084 = vpop.trf.xlu0
        %v1085 = vpop.trf.xlu0
        %v1086 = vpop.trf.xlu0
        %v1087 = vpop.trf.xlu0
        %v1088 = vpop.trf.xlu0
        %v1089 = vpop.trf.xlu0
        %v1090 = vpop.trf.xlu0
        %v1091 = vpop.trf.xlu0
        %v1092 = vpop.trf.xlu0
        %1093 = vxpose.xlu0.b32.start [1/16] %v1023, 128
        %1094 = vxpose.xlu0.b32.cont [2/16] 0.0, 128
        %1095 = vxpose.xlu0.b32.cont [3/16] 0.0, 128
        %1096 = vxpose.xlu0.b32.cont [4/16] 0.0, 128
        %1097 = vxpose.xlu0.b32.cont [5/16] 0.0, 128
        %1098 = vxpose.xlu0.b32.cont [6/16] 0.0, 128
        %1099 = vxpose.xlu0.b32.cont [7/16] 0.0, 128
        %1100 = vxpose.xlu0.b32.cont [8/16] 0.0, 128
        %1101 = vxpose.xlu0.b32.cont [9/16] 0.0, 128
        %1102 = vxpose.xlu0.b32.cont [10/16] 0.0, 128
        %1103 = vxpose.xlu0.b32.cont [11/16] 0.0, 128
        %1104 = vxpose.xlu0.b32.cont [12/16] 0.0, 128
        %1105 = vxpose.xlu0.b32.cont [13/16] 0.0, 128
        %1106 = vxpose.xlu0.b32.cont [14/16] 0.0, 128
        %1107 = vxpose.xlu0.b32.cont [15/16] 0.0, 128
        %1108 = vxpose.xlu0.b32.end [16/16] 0.0, 128
        %v1109 = vpop.trf.xlu0
        %v1110 = vpop.trf.xlu0
        %v1111 = vpop.trf.xlu0
        %v1112 = vpop.trf.xlu0
        %v1113 = vpop.trf.xlu0
        %v1114 = vpop.trf.xlu0
        %v1115 = vpop.trf.xlu0
        %v1116 = vpop.trf.xlu0
        %v1117 = vpop.trf.xlu0
        %v1118 = vpop.trf.xlu0
        %v1119 = vpop.trf.xlu0
        %v1120 = vpop.trf.xlu0
        %v1121 = vpop.trf.xlu0
        %v1122 = vpop.trf.xlu0
        %v1123 = vpop.trf.xlu0
        %v1124 = vpop.trf.xlu0
        %1125 = vxpose.xlu0.b32.start [1/16] %v1024, 128
        %1126 = vxpose.xlu0.b32.cont [2/16] 0.0, 128
        %1127 = vxpose.xlu0.b32.cont [3/16] 0.0, 128
        %1128 = vxpose.xlu0.b32.cont [4/16] 0.0, 128
        %1129 = vxpose.xlu0.b32.cont [5/16] 0.0, 128
        %1130 = vxpose.xlu0.b32.cont [6/16] 0.0, 128
        %1131 = vxpose.xlu0.b32.cont [7/16] 0.0, 128
        %1132 = vxpose.xlu0.b32.cont [8/16] 0.0, 128
        %1133 = vxpose.xlu0.b32.cont [9/16] 0.0, 128
        %1134 = vxpose.xlu0.b32.cont [10/16] 0.0, 128
        %1135 = vxpose.xlu0.b32.cont [11/16] 0.0, 128
        %1136 = vxpose.xlu0.b32.cont [12/16] 0.0, 128
        %1137 = vxpose.xlu0.b32.cont [13/16] 0.0, 128
        %1138 = vxpose.xlu0.b32.cont [14/16] 0.0, 128
        %1139 = vxpose.xlu0.b32.cont [15/16] 0.0, 128
        %1140 = vxpose.xlu0.b32.end [16/16] 0.0, 128
        %v1141 = vpop.trf.xlu0
        %v1142 = vpop.trf.xlu0
        %v1143 = vpop.trf.xlu0
        %v1144 = vpop.trf.xlu0
        %v1145 = vpop.trf.xlu0
        %v1146 = vpop.trf.xlu0
        %v1147 = vpop.trf.xlu0
        %v1148 = vpop.trf.xlu0
        %v1149 = vpop.trf.xlu0
        %v1150 = vpop.trf.xlu0
        %v1151 = vpop.trf.xlu0
        %v1152 = vpop.trf.xlu0
        %v1153 = vpop.trf.xlu0
        %v1154 = vpop.trf.xlu0
        %v1155 = vpop.trf.xlu0
        %v1156 = vpop.trf.xlu0
        %1157 = vxpose.xlu0.b32.start [1/16] %v1025, 128
        %1158 = vxpose.xlu0.b32.cont [2/16] 0.0, 128
        %1159 = vxpose.xlu0.b32.cont [3/16] 0.0, 128
        %1160 = vxpose.xlu0.b32.cont [4/16] 0.0, 128
        %1161 = vxpose.xlu0.b32.cont [5/16] 0.0, 128
        %1162 = vxpose.xlu0.b32.cont [6/16] 0.0, 128
        %1163 = vxpose.xlu0.b32.cont [7/16] 0.0, 128
        %1164 = vxpose.xlu0.b32.cont [8/16] 0.0, 128
        %1165 = vxpose.xlu0.b32.cont [9/16] 0.0, 128
        %1166 = vxpose.xlu0.b32.cont [10/16] 0.0, 128
        %1167 = vxpose.xlu0.b32.cont [11/16] 0.0, 128
        %1168 = vxpose.xlu0.b32.cont [12/16] 0.0, 128
        %1169 = vxpose.xlu0.b32.cont [13/16] 0.0, 128
        %1170 = vxpose.xlu0.b32.cont [14/16] 0.0, 128
        %1171 = vxpose.xlu0.b32.cont [15/16] 0.0, 128
        %1172 = vxpose.xlu0.b32.end [16/16] 0.0, 128
        %v1173 = vpop.trf.xlu0
        %v1174 = vpop.trf.xlu0
        %v1175 = vpop.trf.xlu0
        %v1176 = vpop.trf.xlu0
        %v1177 = vpop.trf.xlu0
        %v1178 = vpop.trf.xlu0
        %v1179 = vpop.trf.xlu0
        %v1180 = vpop.trf.xlu0
        %v1181 = vpop.trf.xlu0
        %v1182 = vpop.trf.xlu0
        %v1183 = vpop.trf.xlu0
        %v1184 = vpop.trf.xlu0
        %v1185 = vpop.trf.xlu0
        %v1186 = vpop.trf.xlu0
        %v1187 = vpop.trf.xlu0
        %v1188 = vpop.trf.xlu0
        %1189 = vxpose.xlu0.b32.start [1/16] %v1026, 128
        %1190 = vxpose.xlu0.b32.cont [2/16] 0.0, 128
        %1191 = vxpose.xlu0.b32.cont [3/16] 0.0, 128
        %1192 = vxpose.xlu0.b32.cont [4/16] 0.0, 128
        %1193 = vxpose.xlu0.b32.cont [5/16] 0.0, 128
        %1194 = vxpose.xlu0.b32.cont [6/16] 0.0, 128
        %1195 = vxpose.xlu0.b32.cont [7/16] 0.0, 128
        %1196 = vxpose.xlu0.b32.cont [8/16] 0.0, 128
        %1197 = vxpose.xlu0.b32.cont [9/16] 0.0, 128
        %1198 = vxpose.xlu0.b32.cont [10/16] 0.0, 128
        %1199 = vxpose.xlu0.b32.cont [11/16] 0.0, 128
        %1200 = vxpose.xlu0.b32.cont [12/16] 0.0, 128
        %1201 = vxpose.xlu0.b32.cont [13/16] 0.0, 128
        %1202 = vxpose.xlu0.b32.cont [14/16] 0.0, 128
        %1203 = vxpose.xlu0.b32.cont [15/16] 0.0, 128
        %1204 = vxpose.xlu0.b32.end [16/16] 0.0, 128
        %v1205 = vpop.trf.xlu0
        %v1206 = vpop.trf.xlu0
        %v1207 = vpop.trf.xlu0
        %v1208 = vpop.trf.xlu0
        %v1209 = vpop.trf.xlu0
        %v1210 = vpop.trf.xlu0
        %v1211 = vpop.trf.xlu0
        %v1212 = vpop.trf.xlu0
        %v1213 = vpop.trf.xlu0
        %v1214 = vpop.trf.xlu0
        %v1215 = vpop.trf.xlu0
        %v1216 = vpop.trf.xlu0
        %v1217 = vpop.trf.xlu0
        %v1218 = vpop.trf.xlu0
        %v1219 = vpop.trf.xlu0
        %v1220 = vpop.trf.xlu0
        %1221 = vxpose.xlu0.b32.start [1/16] %v1027, 128
        %1222 = vxpose.xlu0.b32.cont [2/16] 0.0, 128
        %1223 = vxpose.xlu0.b32.cont [3/16] 0.0, 128
        %1224 = vxpose.xlu0.b32.cont [4/16] 0.0, 128
        %1225 = vxpose.xlu0.b32.cont [5/16] 0.0, 128
        %1226 = vxpose.xlu0.b32.cont [6/16] 0.0, 128
        %1227 = vxpose.xlu0.b32.cont [7/16] 0.0, 128
        %1228 = vxpose.xlu0.b32.cont [8/16] 0.0, 128
        %1229 = vxpose.xlu0.b32.cont [9/16] 0.0, 128
        %1230 = vxpose.xlu0.b32.cont [10/16] 0.0, 128
        %1231 = vxpose.xlu0.b32.cont [11/16] 0.0, 128
        %1232 = vxpose.xlu0.b32.cont [12/16] 0.0, 128
        %1233 = vxpose.xlu0.b32.cont [13/16] 0.0, 128
        %1234 = vxpose.xlu0.b32.cont [14/16] 0.0, 128
        %1235 = vxpose.xlu0.b32.cont [15/16] 0.0, 128
        %1236 = vxpose.xlu0.b32.end [16/16] 0.0, 128
        %v1237 = vpop.trf.xlu0
        %v1238 = vpop.trf.xlu0
        %v1239 = vpop.trf.xlu0
        %v1240 = vpop.trf.xlu0
        %v1241 = vpop.trf.xlu0
        %v1242 = vpop.trf.xlu0
        %v1243 = vpop.trf.xlu0
        %v1244 = vpop.trf.xlu0
        %v1245 = vpop.trf.xlu0
        %v1246 = vpop.trf.xlu0
        %v1247 = vpop.trf.xlu0
        %v1248 = vpop.trf.xlu0
        %v1249 = vpop.trf.xlu0
        %v1250 = vpop.trf.xlu0
        %v1251 = vpop.trf.xlu0
        %v1252 = vpop.trf.xlu0
        %1253 = vxpose.xlu0.b32.start [1/16] %v1028, 128
        %1254 = vxpose.xlu0.b32.cont [2/16] 0.0, 128
        %1255 = vxpose.xlu0.b32.cont [3/16] 0.0, 128
        %1256 = vxpose.xlu0.b32.cont [4/16] 0.0, 128
        %1257 = vxpose.xlu0.b32.cont [5/16] 0.0, 128
        %1258 = vxpose.xlu0.b32.cont [6/16] 0.0, 128
        %1259 = vxpose.xlu0.b32.cont [7/16] 0.0, 128
        %1260 = vxpose.xlu0.b32.cont [8/16] 0.0, 128
        %1261 = vxpose.xlu0.b32.cont [9/16] 0.0, 128
        %1262 = vxpose.xlu0.b32.cont [10/16] 0.0, 128
        %1263 = vxpose.xlu0.b32.cont [11/16] 0.0, 128
        %1264 = vxpose.xlu0.b32.cont [12/16] 0.0, 128
        %1265 = vxpose.xlu0.b32.cont [13/16] 0.0, 128
        %1266 = vxpose.xlu0.b32.cont [14/16] 0.0, 128
        %1267 = vxpose.xlu0.b32.cont [15/16] 0.0, 128
        %1268 = vxpose.xlu0.b32.end [16/16] 0.0, 128
        %v1269 = vpop.trf.xlu0
        %v1270 = vpop.trf.xlu0
        %v1271 = vpop.trf.xlu0
        %v1272 = vpop.trf.xlu0
        %v1273 = vpop.trf.xlu0
        %v1274 = vpop.trf.xlu0
        %v1275 = vpop.trf.xlu0
        %v1276 = vpop.trf.xlu0
        %v1277 = vpop.trf.xlu0
        %v1278 = vpop.trf.xlu0
        %v1279 = vpop.trf.xlu0
        %v1280 = vpop.trf.xlu0
        %v1281 = vpop.trf.xlu0
        %v1282 = vpop.trf.xlu0
        %v1283 = vpop.trf.xlu0
        %v1284 = vpop.trf.xlu0
        %v1285 = vcombine.low %v1045, %v1109
        %v1287 = vunpack.c.l.s4 1983009808
        %v1288 = vunpack.c.0.s8 %v1287
        %v1289 = vlaneseq
        %v1290 = vshrl.u32 %v1289, 7
        %v1291 = vsub.s32 %v1288, %v1290
        %v1292 = vrot.slane %v1285, %v1291
        %v1293 = vcombine.low %v1077, %v1141
        %v1295 = vunpack.c.l.s4 1983009808
        %v1296 = vunpack.c.0.s8 %v1295
        %v1297 = vlaneseq
        %v1298 = vshrl.u32 %v1297, 7
        %v1299 = vsub.s32 %v1296, %v1298
        %v1300 = vrot.slane %v1293, %v1299
        %v1301 = vcombine.low %v1173, %v1237
        %v1303 = vunpack.c.l.s4 1983009808
        %v1304 = vunpack.c.0.s8 %v1303
        %v1305 = vlaneseq
        %v1306 = vshrl.u32 %v1305, 7
        %v1307 = vsub.s32 %v1304, %v1306
        %v1308 = vrot.slane %v1301, %v1307
        %v1309 = vcombine.low %v1205, %v1269
        %v1311 = vunpack.c.l.s4 1983009808
        %v1312 = vunpack.c.0.s8 %v1311
        %v1313 = vlaneseq
        %v1314 = vshrl.u32 %v1313, 7
        %v1315 = vsub.s32 %v1312, %v1314
        %v1316 = vrot.slane %v1309, %v1315
        %v1317 = vcombine.low %v1292, %v1300
        %v1318 = vcombine.high %v1292, %v1300
        %v1320 = vunpack.c.l.s4 1934713408
        %v1321 = vunpack.c.0.s8 %v1320
        %v1322 = vlaneseq
        %v1323 = vshrl.u32 %v1322, 7
        %v1324 = vsub.s32 %v1321, %v1323
        %v1325 = vrot.slane %v1317, %v1324
        %v1327 = vunpack.c.l.s4 1934713408
        %v1328 = vunpack.c.0.s8 %v1327
        %v1329 = vlaneseq
        %v1330 = vshrl.u32 %v1329, 7
        %v1331 = vsub.s32 %v1328, %v1330
        %v1332 = vrot.slane %v1318, %v1331
        %v1333 = vcombine.low %v1308, %v1316
        %v1334 = vcombine.high %v1308, %v1316
        %v1336 = vunpack.c.l.s4 1934713408
        %v1337 = vunpack.c.0.s8 %v1336
        %v1338 = vlaneseq
        %v1339 = vshrl.u32 %v1338, 7
        %v1340 = vsub.s32 %v1337, %v1339
        %v1341 = vrot.slane %v1333, %v1340
        %v1343 = vunpack.c.l.s4 1934713408
        %v1344 = vunpack.c.0.s8 %v1343
        %v1345 = vlaneseq
        %v1346 = vshrl.u32 %v1345, 7
        %v1347 = vsub.s32 %v1344, %v1346
        %v1348 = vrot.slane %v1334, %v1347
        %v1349 = vcombine.low %v1325, %v1341
        %v1350 = vcombine.high %v1325, %v1341
        %v1351 = vcombine.low %v1332, %v1348
        %v1352 = vcombine.high %v1332, %v1348
        %vm1353 = vcmask 64512
        %v1355 = vsel %vm1353, %v633, 0
        %1357 = vmatprep.subr.mxu0 0.0
        %1358 = vmatpush1.msra.mxu0 0.0
        %1359 = vmatprep.subr.mxu0 0.0
        %1360 = vmatpush1.msra.mxu0 0.0
        %1361 = vmatprep.subr.mxu0 0.0
        %1362 = vmatpush1.msra.mxu0 0.0
        %1363 = vmatprep.subr.mxu0 0.0
        %1364 = vmatpush1.msra.mxu0 0.0
        %1365 = vmatprep.subr.mxu0 0.0
        %1366 = vmatpush1.msra.mxu0 0.0
        %1367 = vmatprep.subr.mxu0 0.0
        %1368 = vmatpush1.msra.mxu0 0.0
        %1369 = vmatprep.subr.mxu0 0.0
        %1370 = vmatpush1.msra.mxu0 0.0
        %1371 = vmatprep.subr.mxu0 0.0
        %1372 = vmatpush1.msra.mxu0 0.0
        %1373 = vmatprep.subr.mxu0 0.0
        %1374 = vmatpush1.msra.mxu0 0.0
        %1375 = vmatprep.subr.mxu0 0.0
        %1376 = vmatpush1.msra.mxu0 0.0
        %1377 = vmatprep.subr.mxu0 0.0
        %1378 = vmatpush1.msra.mxu0 0.0
        %1379 = vmatprep.subr.mxu0 0.0
        %1380 = vmatpush1.msra.mxu0 0.0
        %1381 = vmatprep.subr.mxu0 0.0
        %1382 = vmatpush1.msra.mxu0 0.0
        %1383 = vmatprep.subr.mxu0 0.0
        %1384 = vmatpush1.msra.mxu0 0.0
        %1385 = vmatprep.subr.mxu0 0.0
        %1386 = vmatpush1.msra.mxu0 0.0
        %1387 = vmatprep.subr.mxu0 0.0
        %1388 = vmatpush1.msra.mxu0 %v1349
        %1389 = vmatprep.subr.mxu0 0.0
        %1390 = vmatpush2.msra.mxu0 0.0
        %1391 = vmatprep.subr.mxu0 0.0
        %1392 = vmatpush2.msra.mxu0 0.0
        %1393 = vmatprep.subr.mxu0 0.0
        %1394 = vmatpush2.msra.mxu0 0.0
        %1395 = vmatprep.subr.mxu0 0.0
        %1396 = vmatpush2.msra.mxu0 0.0
        %1397 = vmatprep.subr.mxu0 0.0
        %1398 = vmatpush2.msra.mxu0 0.0
        %1399 = vmatprep.subr.mxu0 0.0
        %1400 = vmatpush2.msra.mxu0 0.0
        %1401 = vmatprep.subr.mxu0 0.0
        %1402 = vmatpush2.msra.mxu0 0.0
        %1403 = vmatprep.subr.mxu0 0.0
        %1404 = vmatpush2.msra.mxu0 0.0
        %1405 = vmatprep.subr.mxu0 0.0
        %1406 = vmatpush2.msra.mxu0 0.0
        %1407 = vmatprep.subr.mxu0 0.0
        %1408 = vmatpush2.msra.mxu0 0.0
        %1409 = vmatprep.subr.mxu0 0.0
        %1410 = vmatpush2.msra.mxu0 0.0
        %1411 = vmatprep.subr.mxu0 0.0
        %1412 = vmatpush2.msra.mxu0 0.0
        %1413 = vmatprep.subr.mxu0 0.0
        %1414 = vmatpush2.msra.mxu0 0.0
        %1415 = vmatprep.subr.mxu0 0.0
        %1416 = vmatpush2.msra.mxu0 0.0
        %1417 = vmatprep.subr.mxu0 0.0
        %1418 = vmatpush2.msra.mxu0 0.0
        %1419 = vmatprep.subr.mxu0 0.0
        %1420 = vmatpush2.msra.mxu0 0.0
        %1421 = vmatprep.mubr.f32.mxu0 0.0
        %1422 = vmatmul.mubr.f32.gmra.mxu0 %v1355
        %v1423 = vpop.f32.mrf.mxu0
        %v1424 = vadd.f32 0.0, %v1423
        %v1425 = vpop.f32.mrf.mxu0
        %1426 = vdwg.mxu0
        %v1428 = vsel %vm1353, %v634, 0
        %1430 = vmatprep.subr.mxu0 0.0
        %1431 = vmatpush1.msra.mxu0 0.0
        %1432 = vmatprep.subr.mxu0 0.0
        %1433 = vmatpush1.msra.mxu0 0.0
        %1434 = vmatprep.subr.mxu0 0.0
        %1435 = vmatpush1.msra.mxu0 0.0
        %1436 = vmatprep.subr.mxu0 0.0
        %1437 = vmatpush1.msra.mxu0 0.0
        %1438 = vmatprep.subr.mxu0 0.0
        %1439 = vmatpush1.msra.mxu0 0.0
        %1440 = vmatprep.subr.mxu0 0.0
        %1441 = vmatpush1.msra.mxu0 0.0
        %1442 = vmatprep.subr.mxu0 0.0
        %1443 = vmatpush1.msra.mxu0 0.0
        %1444 = vmatprep.subr.mxu0 0.0
        %1445 = vmatpush1.msra.mxu0 0.0
        %1446 = vmatprep.subr.mxu0 0.0
        %1447 = vmatpush1.msra.mxu0 0.0
        %1448 = vmatprep.subr.mxu0 0.0
        %1449 = vmatpush1.msra.mxu0 0.0
        %1450 = vmatprep.subr.mxu0 0.0
        %1451 = vmatpush1.msra.mxu0 0.0
        %1452 = vmatprep.subr.mxu0 0.0
        %1453 = vmatpush1.msra.mxu0 0.0
        %1454 = vmatprep.subr.mxu0 0.0
        %1455 = vmatpush1.msra.mxu0 0.0
        %1456 = vmatprep.subr.mxu0 0.0
        %1457 = vmatpush1.msra.mxu0 0.0
        %1458 = vmatprep.subr.mxu0 0.0
        %1459 = vmatpush1.msra.mxu0 0.0
        %1460 = vmatprep.subr.mxu0 0.0
        %1461 = vmatpush1.msra.mxu0 %v1350
        %1462 = vmatprep.subr.mxu0 0.0
        %1463 = vmatpush2.msra.mxu0 0.0
        %1464 = vmatprep.subr.mxu0 0.0
        %1465 = vmatpush2.msra.mxu0 0.0
        %1466 = vmatprep.subr.mxu0 0.0
        %1467 = vmatpush2.msra.mxu0 0.0
        %1468 = vmatprep.subr.mxu0 0.0
        %1469 = vmatpush2.msra.mxu0 0.0
        %1470 = vmatprep.subr.mxu0 0.0
        %1471 = vmatpush2.msra.mxu0 0.0
        %1472 = vmatprep.subr.mxu0 0.0
        %1473 = vmatpush2.msra.mxu0 0.0
        %1474 = vmatprep.subr.mxu0 0.0
        %1475 = vmatpush2.msra.mxu0 0.0
        %1476 = vmatprep.subr.mxu0 0.0
        %1477 = vmatpush2.msra.mxu0 0.0
        %1478 = vmatprep.subr.mxu0 0.0
        %1479 = vmatpush2.msra.mxu0 0.0
        %1480 = vmatprep.subr.mxu0 0.0
        %1481 = vmatpush2.msra.mxu0 0.0
        %1482 = vmatprep.subr.mxu0 0.0
        %1483 = vmatpush2.msra.mxu0 0.0
        %1484 = vmatprep.subr.mxu0 0.0
        %1485 = vmatpush2.msra.mxu0 0.0
        %1486 = vmatprep.subr.mxu0 0.0
        %1487 = vmatpush2.msra.mxu0 0.0
        %1488 = vmatprep.subr.mxu0 0.0
        %1489 = vmatpush2.msra.mxu0 0.0
        %1490 = vmatprep.subr.mxu0 0.0
        %1491 = vmatpush2.msra.mxu0 0.0
        %1492 = vmatprep.subr.mxu0 0.0
        %1493 = vmatpush2.msra.mxu0 0.0
        %1494 = vmatprep.mubr.f32.mxu0 0.0
        %1495 = vmatmul.mubr.f32.gmra.mxu0 %v1428
        %v1496 = vpop.f32.mrf.mxu0
        %v1497 = vadd.f32 0.0, %v1496
        %v1498 = vpop.f32.mrf.mxu0
        %1499 = vdwg.mxu0
        %v1501 = vsel %vm1353, %v635, 0
        %1503 = vmatprep.subr.mxu0 0.0
        %1504 = vmatpush1.msra.mxu0 0.0
        %1505 = vmatprep.subr.mxu0 0.0
        %1506 = vmatpush1.msra.mxu0 0.0
        %1507 = vmatprep.subr.mxu0 0.0
        %1508 = vmatpush1.msra.mxu0 0.0
        %1509 = vmatprep.subr.mxu0 0.0
        %1510 = vmatpush1.msra.mxu0 0.0
        %1511 = vmatprep.subr.mxu0 0.0
        %1512 = vmatpush1.msra.mxu0 0.0
        %1513 = vmatprep.subr.mxu0 0.0
        %1514 = vmatpush1.msra.mxu0 0.0
        %1515 = vmatprep.subr.mxu0 0.0
        %1516 = vmatpush1.msra.mxu0 0.0
        %1517 = vmatprep.subr.mxu0 0.0
        %1518 = vmatpush1.msra.mxu0 0.0
        %1519 = vmatprep.subr.mxu0 0.0
        %1520 = vmatpush1.msra.mxu0 0.0
        %1521 = vmatprep.subr.mxu0 0.0
        %1522 = vmatpush1.msra.mxu0 0.0
        %1523 = vmatprep.subr.mxu0 0.0
        %1524 = vmatpush1.msra.mxu0 0.0
        %1525 = vmatprep.subr.mxu0 0.0
        %1526 = vmatpush1.msra.mxu0 0.0
        %1527 = vmatprep.subr.mxu0 0.0
        %1528 = vmatpush1.msra.mxu0 0.0
        %1529 = vmatprep.subr.mxu0 0.0
        %1530 = vmatpush1.msra.mxu0 0.0
        %1531 = vmatprep.subr.mxu0 0.0
        %1532 = vmatpush1.msra.mxu0 0.0
        %1533 = vmatprep.subr.mxu0 0.0
        %1534 = vmatpush1.msra.mxu0 %v1351
        %1535 = vmatprep.subr.mxu0 0.0
        %1536 = vmatpush2.msra.mxu0 0.0
        %1537 = vmatprep.subr.mxu0 0.0
        %1538 = vmatpush2.msra.mxu0 0.0
        %1539 = vmatprep.subr.mxu0 0.0
        %1540 = vmatpush2.msra.mxu0 0.0
        %1541 = vmatprep.subr.mxu0 0.0
        %1542 = vmatpush2.msra.mxu0 0.0
        %1543 = vmatprep.subr.mxu0 0.0
        %1544 = vmatpush2.msra.mxu0 0.0
        %1545 = vmatprep.subr.mxu0 0.0
        %1546 = vmatpush2.msra.mxu0 0.0
        %1547 = vmatprep.subr.mxu0 0.0
        %1548 = vmatpush2.msra.mxu0 0.0
        %1549 = vmatprep.subr.mxu0 0.0
        %1550 = vmatpush2.msra.mxu0 0.0
        %1551 = vmatprep.subr.mxu0 0.0
        %1552 = vmatpush2.msra.mxu0 0.0
        %1553 = vmatprep.subr.mxu0 0.0
        %1554 = vmatpush2.msra.mxu0 0.0
        %1555 = vmatprep.subr.mxu0 0.0
        %1556 = vmatpush2.msra.mxu0 0.0
        %1557 = vmatprep.subr.mxu0 0.0
        %1558 = vmatpush2.msra.mxu0 0.0
        %1559 = vmatprep.subr.mxu0 0.0
        %1560 = vmatpush2.msra.mxu0 0.0
        %1561 = vmatprep.subr.mxu0 0.0
        %1562 = vmatpush2.msra.mxu0 0.0
        %1563 = vmatprep.subr.mxu0 0.0
        %1564 = vmatpush2.msra.mxu0 0.0
        %1565 = vmatprep.subr.mxu0 0.0
        %1566 = vmatpush2.msra.mxu0 0.0
        %1567 = vmatprep.mubr.f32.mxu0 0.0
        %1568 = vmatmul.mubr.f32.gmra.mxu0 %v1501
        %v1569 = vpop.f32.mrf.mxu0
        %v1570 = vadd.f32 0.0, %v1569
        %v1571 = vpop.f32.mrf.mxu0
        %1572 = vdwg.mxu0
        %v1574 = vsel %vm1353, %v636, 0
        %1576 = vmatprep.subr.mxu0 0.0
        %1577 = vmatpush1.msra.mxu0 0.0
        %1578 = vmatprep.subr.mxu0 0.0
        %1579 = vmatpush1.msra.mxu0 0.0
        %1580 = vmatprep.subr.mxu0 0.0
        %1581 = vmatpush1.msra.mxu0 0.0
        %1582 = vmatprep.subr.mxu0 0.0
        %1583 = vmatpush1.msra.mxu0 0.0
        %1584 = vmatprep.subr.mxu0 0.0
        %1585 = vmatpush1.msra.mxu0 0.0
        %1586 = vmatprep.subr.mxu0 0.0
        %1587 = vmatpush1.msra.mxu0 0.0
        %1588 = vmatprep.subr.mxu0 0.0
        %1589 = vmatpush1.msra.mxu0 0.0
        %1590 = vmatprep.subr.mxu0 0.0
        %1591 = vmatpush1.msra.mxu0 0.0
        %1592 = vmatprep.subr.mxu0 0.0
        %1593 = vmatpush1.msra.mxu0 0.0
        %1594 = vmatprep.subr.mxu0 0.0
        %1595 = vmatpush1.msra.mxu0 0.0
        %1596 = vmatprep.subr.mxu0 0.0
        %1597 = vmatpush1.msra.mxu0 0.0
        %1598 = vmatprep.subr.mxu0 0.0
        %1599 = vmatpush1.msra.mxu0 0.0
        %1600 = vmatprep.subr.mxu0 0.0
        %1601 = vmatpush1.msra.mxu0 0.0
        %1602 = vmatprep.subr.mxu0 0.0
        %1603 = vmatpush1.msra.mxu0 0.0
        %1604 = vmatprep.subr.mxu0 0.0
        %1605 = vmatpush1.msra.mxu0 0.0
        %1606 = vmatprep.subr.mxu0 0.0
        %1607 = vmatpush1.msra.mxu0 %v1352
        %1608 = vmatprep.subr.mxu0 0.0
        %1609 = vmatpush2.msra.mxu0 0.0
        %1610 = vmatprep.subr.mxu0 0.0
        %1611 = vmatpush2.msra.mxu0 0.0
        %1612 = vmatprep.subr.mxu0 0.0
        %1613 = vmatpush2.msra.mxu0 0.0
        %1614 = vmatprep.subr.mxu0 0.0
        %1615 = vmatpush2.msra.mxu0 0.0
        %1616 = vmatprep.subr.mxu0 0.0
        %1617 = vmatpush2.msra.mxu0 0.0
        %1618 = vmatprep.subr.mxu0 0.0
        %1619 = vmatpush2.msra.mxu0 0.0
        %1620 = vmatprep.subr.mxu0 0.0
        %1621 = vmatpush2.msra.mxu0 0.0
        %1622 = vmatprep.subr.mxu0 0.0
        %1623 = vmatpush2.msra.mxu0 0.0
        %1624 = vmatprep.subr.mxu0 0.0
        %1625 = vmatpush2.msra.mxu0 0.0
        %1626 = vmatprep.subr.mxu0 0.0
        %1627 = vmatpush2.msra.mxu0 0.0
        %1628 = vmatprep.subr.mxu0 0.0
        %1629 = vmatpush2.msra.mxu0 0.0
        %1630 = vmatprep.subr.mxu0 0.0
        %1631 = vmatpush2.msra.mxu0 0.0
        %1632 = vmatprep.subr.mxu0 0.0
        %1633 = vmatpush2.msra.mxu0 0.0
        %1634 = vmatprep.subr.mxu0 0.0
        %1635 = vmatpush2.msra.mxu0 0.0
        %1636 = vmatprep.subr.mxu0 0.0
        %1637 = vmatpush2.msra.mxu0 0.0
        %1638 = vmatprep.subr.mxu0 0.0
        %1639 = vmatpush2.msra.mxu0 0.0
        %1640 = vmatprep.mubr.f32.mxu0 0.0
        %1641 = vmatmul.mubr.f32.gmra.mxu0 %v1574
        %v1642 = vpop.f32.mrf.mxu0
        %v1643 = vadd.f32 0.0, %v1642
        %v1644 = vpop.f32.mrf.mxu0
        %1645 = vdwg.mxu0
        %v1646 = vld [vmem:[#allocation2] sm:$0xff]
        %v1647 = vld [vmem:[#allocation2 + $0x8] sm:$0xff]
        %v1648 = vld [vmem:[#allocation2 + $0x10] sm:$0xff]
        %v1649 = vld [vmem:[#allocation2 + $0x18] sm:$0xff]
        %v1650 = vsel %vm1353, %v1424, -inf
        %1651 = vmax.xlane.f32.xlu0 %v1650
        %v1652 = vpop.xlane.xlu0 %1651
        %v1653 = vsel %vm1353, %v1497, -inf
        %1654 = vmax.xlane.f32.xlu0 %v1653
        %v1655 = vpop.xlane.xlu0 %1654
        %v1656 = vsel %vm1353, %v1570, -inf
        %1657 = vmax.xlane.f32.xlu0 %v1656
        %v1658 = vpop.xlane.xlu0 %1657
        %v1659 = vsel %vm1353, %v1643, -inf
        %1660 = vmax.xlane.f32.xlu0 %v1659
        %v1661 = vpop.xlane.xlu0 %1660
        %v1662 = vmax.f32 %v1646, %v1652
        %v1663 = vmax.f32 %v1647, %v1655
        %v1664 = vmax.f32 %v1648, %v1658
        %v1665 = vmax.f32 %v1649, %v1661
        %v1666 = vsub.f32 %v1646, %v1662
        %v1667 = vsub.f32 %v1647, %v1663
        %v1668 = vsub.f32 %v1648, %v1664
        %v1669 = vsub.f32 %v1649, %v1665
        %v1670 = vmul.f32 %v1666, 1.442695
        %v1671 = vpow.pop %v1670
        %v1672 = vmul.f32 %v1667, 1.442695
        %v1673 = vpow.pop %v1672
        %v1674 = vmul.f32 %v1668, 1.442695
        %v1675 = vpow.pop %v1674
        %v1676 = vmul.f32 %v1669, 1.442695
        %v1677 = vpow.pop %v1676
        %1679 = vset.pattern.permute.xlu0 0
        %1680 = vperm.xlu0 %1679, %v1662
        %v1681 = vpop.permute.xlu0 %1680
        %1684 = vset.pattern.permute.xlu0 0
        %1685 = vperm.xlu0 %1684, %v1663
        %v1686 = vpop.permute.xlu0 %1685
        %1689 = vset.pattern.permute.xlu0 0
        %1690 = vperm.xlu0 %1689, %v1664
        %v1691 = vpop.permute.xlu0 %1690
        %1694 = vset.pattern.permute.xlu0 0
        %1695 = vperm.xlu0 %1694, %v1665
        %v1696 = vpop.permute.xlu0 %1695
        %v1698 = vsub.f32 %v1424, %v1681
        %v1699 = vsub.f32 %v1497, %v1686
        %v1700 = vsub.f32 %v1570, %v1691
        %v1701 = vsub.f32 %v1643, %v1696
        %v1702 = vmul.f32 %v1698, 1.442695
        %v1703 = vpow.pop %v1702
        %v1704 = vmul.f32 %v1699, 1.442695
        %v1705 = vpow.pop %v1704
        %v1706 = vmul.f32 %v1700, 1.442695
        %v1707 = vpow.pop %v1706
        %v1708 = vmul.f32 %v1701, 1.442695
        %v1709 = vpow.pop %v1708
        %v1710 = vld [vmem:[#allocation3] sm:$0xff]
        %v1711 = vld [vmem:[#allocation3 + $0x8] sm:$0xff]
        %v1712 = vld [vmem:[#allocation3 + $0x10] sm:$0xff]
        %v1713 = vld [vmem:[#allocation3 + $0x18] sm:$0xff]
        %v1714 = vmul.f32 %v1671, %v1710
        %v1715 = vmul.f32 %v1673, %v1711
        %v1716 = vmul.f32 %v1675, %v1712
        %v1717 = vmul.f32 %v1677, %v1713
        %v1718 = vsel %vm1353, %v1703, 0.0
        %1719 = vadd.xlane.f32.xlu0 %v1718
        %v1720 = vpop.xlane.xlu0 %1719
        %v1721 = vsel %vm1353, %v1705, 0.0
        %1722 = vadd.xlane.f32.xlu0 %v1721
        %v1723 = vpop.xlane.xlu0 %1722
        %v1724 = vsel %vm1353, %v1707, 0.0
        %1725 = vadd.xlane.f32.xlu0 %v1724
        %v1726 = vpop.xlane.xlu0 %1725
        %v1727 = vsel %vm1353, %v1709, 0.0
        %1728 = vadd.xlane.f32.xlu0 %v1727
        %v1729 = vpop.xlane.xlu0 %1728
        %v1730 = vadd.f32 %v1714, %v1720
        %v1731 = vadd.f32 %v1715, %v1723
        %v1732 = vadd.f32 %v1716, %v1726
        %v1733 = vadd.f32 %v1717, %v1729
        %vm1734 = vcmask 7168
        %1735 = vst.msk [vmem:[#allocation3] sm:$0xff] %vm1734, %v1730
        %1736 = vst.msk [vmem:[#allocation3 + $0x8] sm:$0xff] %vm1734, %v1731
        %1737 = vst.msk [vmem:[#allocation3 + $0x10] sm:$0xff] %vm1734, %v1732
        %1738 = vst.msk [vmem:[#allocation3 + $0x18] sm:$0xff] %vm1734, %v1733
        %v1739 = vcombine.low %v541, %v548
        %v1741 = vunpack.c.l.s4 1983009808
        %v1742 = vunpack.c.0.s8 %v1741
        %v1743 = vlaneseq
        %v1744 = vshrl.u32 %v1743, 7
        %v1745 = vsub.s32 %v1742, %v1744
        %v1746 = vrot.slane %v1739, %v1745
        %v1747 = vcombine.low %v565, %v566
        %v1749 = vunpack.c.l.s4 1983009808
        %v1750 = vunpack.c.0.s8 %v1749
        %v1751 = vlaneseq
        %v1752 = vshrl.u32 %v1751, 7
        %v1753 = vsub.s32 %v1750, %v1752
        %v1754 = vrot.slane %v1747, %v1753
        %v1755 = vcombine.low %v557, %v564
        %v1757 = vunpack.c.l.s4 1983009808
        %v1758 = vunpack.c.0.s8 %v1757
        %v1759 = vlaneseq
        %v1760 = vshrl.u32 %v1759, 7
        %v1761 = vsub.s32 %v1758, %v1760
        %v1762 = vrot.slane %v1755, %v1761
        %v1763 = vcombine.low %v567, %v568
        %v1765 = vunpack.c.l.s4 1983009808
        %v1766 = vunpack.c.0.s8 %v1765
        %v1767 = vlaneseq
        %v1768 = vshrl.u32 %v1767, 7
        %v1769 = vsub.s32 %v1766, %v1768
        %v1770 = vrot.slane %v1763, %v1769
        %v1771 = vcombine.low %v1746, %v1754
        %v1772 = vcombine.high %v1746, %v1754
        %v1774 = vunpack.c.l.s4 1934713408
        %v1775 = vunpack.c.0.s8 %v1774
        %v1776 = vlaneseq
        %v1777 = vshrl.u32 %v1776, 7
        %v1778 = vsub.s32 %v1775, %v1777
        %v1779 = vrot.slane %v1771, %v1778
        %v1781 = vunpack.c.l.s4 1934713408
        %v1782 = vunpack.c.0.s8 %v1781
        %v1783 = vlaneseq
        %v1784 = vshrl.u32 %v1783, 7
        %v1785 = vsub.s32 %v1782, %v1784
        %v1786 = vrot.slane %v1772, %v1785
        %v1787 = vcombine.low %v1762, %v1770
        %v1788 = vcombine.high %v1762, %v1770
        %v1790 = vunpack.c.l.s4 1934713408
        %v1791 = vunpack.c.0.s8 %v1790
        %v1792 = vlaneseq
        %v1793 = vshrl.u32 %v1792, 7
        %v1794 = vsub.s32 %v1791, %v1793
        %v1795 = vrot.slane %v1787, %v1794
        %v1797 = vunpack.c.l.s4 1934713408
        %v1798 = vunpack.c.0.s8 %v1797
        %v1799 = vlaneseq
        %v1800 = vshrl.u32 %v1799, 7
        %v1801 = vsub.s32 %v1798, %v1800
        %v1802 = vrot.slane %v1788, %v1801
        %v1803 = vcombine.low %v1779, %v1795
        %v1804 = vcombine.high %v1779, %v1795
        %v1805 = vcombine.low %v1786, %v1802
        %v1806 = vcombine.high %v1786, %v1802
        %v1808 = vsel %vm1353, %v1703, 0
        %1810 = vmatprep.subr.mxu0 0.0
        %1811 = vmatpush1.msra.mxu0 0.0
        %1812 = vmatprep.subr.mxu0 0.0
        %1813 = vmatpush1.msra.mxu0 0.0
        %1814 = vmatprep.subr.mxu0 0.0
        %1815 = vmatpush1.msra.mxu0 0.0
        %1816 = vmatprep.subr.mxu0 0.0
        %1817 = vmatpush1.msra.mxu0 0.0
        %1818 = vmatprep.subr.mxu0 0.0
        %1819 = vmatpush1.msra.mxu0 0.0
        %1820 = vmatprep.subr.mxu0 0.0
        %1821 = vmatpush1.msra.mxu0 0.0
        %1822 = vmatprep.subr.mxu0 0.0
        %1823 = vmatpush1.msra.mxu0 0.0
        %1824 = vmatprep.subr.mxu0 0.0
        %1825 = vmatpush1.msra.mxu0 0.0
        %1826 = vmatprep.subr.mxu0 0.0
        %1827 = vmatpush1.msra.mxu0 0.0
        %1828 = vmatprep.subr.mxu0 0.0
        %1829 = vmatpush1.msra.mxu0 0.0
        %1830 = vmatprep.subr.mxu0 0.0
        %1831 = vmatpush1.msra.mxu0 0.0
        %1832 = vmatprep.subr.mxu0 0.0
        %1833 = vmatpush1.msra.mxu0 0.0
        %1834 = vmatprep.subr.mxu0 0.0
        %1835 = vmatpush1.msra.mxu0 0.0
        %1836 = vmatprep.subr.mxu0 0.0
        %1837 = vmatpush1.msra.mxu0 0.0
        %1838 = vmatprep.subr.mxu0 0.0
        %1839 = vmatpush1.msra.mxu0 0.0
        %1840 = vmatprep.subr.mxu0 0.0
        %1841 = vmatpush1.msra.mxu0 %v1803
        %1842 = vmatprep.subr.mxu0 0.0
        %1843 = vmatpush2.msra.mxu0 0.0
        %1844 = vmatprep.subr.mxu0 0.0
        %1845 = vmatpush2.msra.mxu0 0.0
        %1846 = vmatprep.subr.mxu0 0.0
        %1847 = vmatpush2.msra.mxu0 0.0
        %1848 = vmatprep.subr.mxu0 0.0
        %1849 = vmatpush2.msra.mxu0 0.0
        %1850 = vmatprep.subr.mxu0 0.0
        %1851 = vmatpush2.msra.mxu0 0.0
        %1852 = vmatprep.subr.mxu0 0.0
        %1853 = vmatpush2.msra.mxu0 0.0
        %1854 = vmatprep.subr.mxu0 0.0
        %1855 = vmatpush2.msra.mxu0 0.0
        %1856 = vmatprep.subr.mxu0 0.0
        %1857 = vmatpush2.msra.mxu0 0.0
        %1858 = vmatprep.subr.mxu0 0.0
        %1859 = vmatpush2.msra.mxu0 0.0
        %1860 = vmatprep.subr.mxu0 0.0
        %1861 = vmatpush2.msra.mxu0 0.0
        %1862 = vmatprep.subr.mxu0 0.0
        %1863 = vmatpush2.msra.mxu0 0.0
        %1864 = vmatprep.subr.mxu0 0.0
        %1865 = vmatpush2.msra.mxu0 0.0
        %1866 = vmatprep.subr.mxu0 0.0
        %1867 = vmatpush2.msra.mxu0 0.0
        %1868 = vmatprep.subr.mxu0 0.0
        %1869 = vmatpush2.msra.mxu0 0.0
        %1870 = vmatprep.subr.mxu0 0.0
        %1871 = vmatpush2.msra.mxu0 0.0
        %1872 = vmatprep.subr.mxu0 0.0
        %1873 = vmatpush2.msra.mxu0 0.0
        %1874 = vmatprep.mubr.f32.mxu0 0.0
        %1875 = vmatmul.mubr.f32.gmra.mxu0 %v1808
        %v1876 = vpop.f32.mrf.mxu0
        %v1877 = vadd.f32 0.0, %v1876
        %v1878 = vpop.f32.mrf.mxu0
        %1879 = vdwg.mxu0
        %v1881 = vsel %vm1353, %v1705, 0
        %1883 = vmatprep.subr.mxu0 0.0
        %1884 = vmatpush1.msra.mxu0 0.0
        %1885 = vmatprep.subr.mxu0 0.0
        %1886 = vmatpush1.msra.mxu0 0.0
        %1887 = vmatprep.subr.mxu0 0.0
        %1888 = vmatpush1.msra.mxu0 0.0
        %1889 = vmatprep.subr.mxu0 0.0
        %1890 = vmatpush1.msra.mxu0 0.0
        %1891 = vmatprep.subr.mxu0 0.0
        %1892 = vmatpush1.msra.mxu0 0.0
        %1893 = vmatprep.subr.mxu0 0.0
        %1894 = vmatpush1.msra.mxu0 0.0
        %1895 = vmatprep.subr.mxu0 0.0
        %1896 = vmatpush1.msra.mxu0 0.0
        %1897 = vmatprep.subr.mxu0 0.0
        %1898 = vmatpush1.msra.mxu0 0.0
        %1899 = vmatprep.subr.mxu0 0.0
        %1900 = vmatpush1.msra.mxu0 0.0
        %1901 = vmatprep.subr.mxu0 0.0
        %1902 = vmatpush1.msra.mxu0 0.0
        %1903 = vmatprep.subr.mxu0 0.0
        %1904 = vmatpush1.msra.mxu0 0.0
        %1905 = vmatprep.subr.mxu0 0.0
        %1906 = vmatpush1.msra.mxu0 0.0
        %1907 = vmatprep.subr.mxu0 0.0
        %1908 = vmatpush1.msra.mxu0 0.0
        %1909 = vmatprep.subr.mxu0 0.0
        %1910 = vmatpush1.msra.mxu0 0.0
        %1911 = vmatprep.subr.mxu0 0.0
        %1912 = vmatpush1.msra.mxu0 0.0
        %1913 = vmatprep.subr.mxu0 0.0
        %1914 = vmatpush1.msra.mxu0 %v1804
        %1915 = vmatprep.subr.mxu0 0.0
        %1916 = vmatpush2.msra.mxu0 0.0
        %1917 = vmatprep.subr.mxu0 0.0
        %1918 = vmatpush2.msra.mxu0 0.0
        %1919 = vmatprep.subr.mxu0 0.0
        %1920 = vmatpush2.msra.mxu0 0.0
        %1921 = vmatprep.subr.mxu0 0.0
        %1922 = vmatpush2.msra.mxu0 0.0
        %1923 = vmatprep.subr.mxu0 0.0
        %1924 = vmatpush2.msra.mxu0 0.0
        %1925 = vmatprep.subr.mxu0 0.0
        %1926 = vmatpush2.msra.mxu0 0.0
        %1927 = vmatprep.subr.mxu0 0.0
        %1928 = vmatpush2.msra.mxu0 0.0
        %1929 = vmatprep.subr.mxu0 0.0
        %1930 = vmatpush2.msra.mxu0 0.0
        %1931 = vmatprep.subr.mxu0 0.0
        %1932 = vmatpush2.msra.mxu0 0.0
        %1933 = vmatprep.subr.mxu0 0.0
        %1934 = vmatpush2.msra.mxu0 0.0
        %1935 = vmatprep.subr.mxu0 0.0
        %1936 = vmatpush2.msra.mxu0 0.0
        %1937 = vmatprep.subr.mxu0 0.0
        %1938 = vmatpush2.msra.mxu0 0.0
        %1939 = vmatprep.subr.mxu0 0.0
        %1940 = vmatpush2.msra.mxu0 0.0
        %1941 = vmatprep.subr.mxu0 0.0
        %1942 = vmatpush2.msra.mxu0 0.0
        %1943 = vmatprep.subr.mxu0 0.0
        %1944 = vmatpush2.msra.mxu0 0.0
        %1945 = vmatprep.subr.mxu0 0.0
        %1946 = vmatpush2.msra.mxu0 0.0
        %1947 = vmatprep.mubr.f32.mxu0 0.0
        %1948 = vmatmul.mubr.f32.gmra.mxu0 %v1881
        %v1949 = vpop.f32.mrf.mxu0
        %v1950 = vadd.f32 0.0, %v1949
        %v1951 = vpop.f32.mrf.mxu0
        %1952 = vdwg.mxu0
        %v1954 = vsel %vm1353, %v1707, 0
        %1956 = vmatprep.subr.mxu0 0.0
        %1957 = vmatpush1.msra.mxu0 0.0
        %1958 = vmatprep.subr.mxu0 0.0
        %1959 = vmatpush1.msra.mxu0 0.0
        %1960 = vmatprep.subr.mxu0 0.0
        %1961 = vmatpush1.msra.mxu0 0.0
        %1962 = vmatprep.subr.mxu0 0.0
        %1963 = vmatpush1.msra.mxu0 0.0
        %1964 = vmatprep.subr.mxu0 0.0
        %1965 = vmatpush1.msra.mxu0 0.0
        %1966 = vmatprep.subr.mxu0 0.0
        %1967 = vmatpush1.msra.mxu0 0.0
        %1968 = vmatprep.subr.mxu0 0.0
        %1969 = vmatpush1.msra.mxu0 0.0
        %1970 = vmatprep.subr.mxu0 0.0
        %1971 = vmatpush1.msra.mxu0 0.0
        %1972 = vmatprep.subr.mxu0 0.0
        %1973 = vmatpush1.msra.mxu0 0.0
        %1974 = vmatprep.subr.mxu0 0.0
        %1975 = vmatpush1.msra.mxu0 0.0
        %1976 = vmatprep.subr.mxu0 0.0
        %1977 = vmatpush1.msra.mxu0 0.0
        %1978 = vmatprep.subr.mxu0 0.0
        %1979 = vmatpush1.msra.mxu0 0.0
        %1980 = vmatprep.subr.mxu0 0.0
        %1981 = vmatpush1.msra.mxu0 0.0
        %1982 = vmatprep.subr.mxu0 0.0
        %1983 = vmatpush1.msra.mxu0 0.0
        %1984 = vmatprep.subr.mxu0 0.0
        %1985 = vmatpush1.msra.mxu0 0.0
        %1986 = vmatprep.subr.mxu0 0.0
        %1987 = vmatpush1.msra.mxu0 %v1805
        %1988 = vmatprep.subr.mxu0 0.0
        %1989 = vmatpush2.msra.mxu0 0.0
        %1990 = vmatprep.subr.mxu0 0.0
        %1991 = vmatpush2.msra.mxu0 0.0
        %1992 = vmatprep.subr.mxu0 0.0
        %1993 = vmatpush2.msra.mxu0 0.0
        %1994 = vmatprep.subr.mxu0 0.0
        %1995 = vmatpush2.msra.mxu0 0.0
        %1996 = vmatprep.subr.mxu0 0.0
        %1997 = vmatpush2.msra.mxu0 0.0
        %1998 = vmatprep.subr.mxu0 0.0
        %1999 = vmatpush2.msra.mxu0 0.0
        %2000 = vmatprep.subr.mxu0 0.0
        %2001 = vmatpush2.msra.mxu0 0.0
        %2002 = vmatprep.subr.mxu0 0.0
        %2003 = vmatpush2.msra.mxu0 0.0
        %2004 = vmatprep.subr.mxu0 0.0
        %2005 = vmatpush2.msra.mxu0 0.0
        %2006 = vmatprep.subr.mxu0 0.0
        %2007 = vmatpush2.msra.mxu0 0.0
        %2008 = vmatprep.subr.mxu0 0.0
        %2009 = vmatpush2.msra.mxu0 0.0
        %2010 = vmatprep.subr.mxu0 0.0
        %2011 = vmatpush2.msra.mxu0 0.0
        %2012 = vmatprep.subr.mxu0 0.0
        %2013 = vmatpush2.msra.mxu0 0.0
        %2014 = vmatprep.subr.mxu0 0.0
        %2015 = vmatpush2.msra.mxu0 0.0
        %2016 = vmatprep.subr.mxu0 0.0
        %2017 = vmatpush2.msra.mxu0 0.0
        %2018 = vmatprep.subr.mxu0 0.0
        %2019 = vmatpush2.msra.mxu0 0.0
        %2020 = vmatprep.mubr.f32.mxu0 0.0
        %2021 = vmatmul.mubr.f32.gmra.mxu0 %v1954
        %v2022 = vpop.f32.mrf.mxu0
        %v2023 = vadd.f32 0.0, %v2022
        %v2024 = vpop.f32.mrf.mxu0
        %2025 = vdwg.mxu0
        %v2027 = vsel %vm1353, %v1709, 0
        %2029 = vmatprep.subr.mxu0 0.0
        %2030 = vmatpush1.msra.mxu0 0.0
        %2031 = vmatprep.subr.mxu0 0.0
        %2032 = vmatpush1.msra.mxu0 0.0
        %2033 = vmatprep.subr.mxu0 0.0
        %2034 = vmatpush1.msra.mxu0 0.0
        %2035 = vmatprep.subr.mxu0 0.0
        %2036 = vmatpush1.msra.mxu0 0.0
        %2037 = vmatprep.subr.mxu0 0.0
        %2038 = vmatpush1.msra.mxu0 0.0
        %2039 = vmatprep.subr.mxu0 0.0
        %2040 = vmatpush1.msra.mxu0 0.0
        %2041 = vmatprep.subr.mxu0 0.0
        %2042 = vmatpush1.msra.mxu0 0.0
        %2043 = vmatprep.subr.mxu0 0.0
        %2044 = vmatpush1.msra.mxu0 0.0
        %2045 = vmatprep.subr.mxu0 0.0
        %2046 = vmatpush1.msra.mxu0 0.0
        %2047 = vmatprep.subr.mxu0 0.0
        %2048 = vmatpush1.msra.mxu0 0.0
        %2049 = vmatprep.subr.mxu0 0.0
        %2050 = vmatpush1.msra.mxu0 0.0
        %2051 = vmatprep.subr.mxu0 0.0
        %2052 = vmatpush1.msra.mxu0 0.0
        %2053 = vmatprep.subr.mxu0 0.0
        %2054 = vmatpush1.msra.mxu0 0.0
        %2055 = vmatprep.subr.mxu0 0.0
        %2056 = vmatpush1.msra.mxu0 0.0
        %2057 = vmatprep.subr.mxu0 0.0
        %2058 = vmatpush1.msra.mxu0 0.0
        %2059 = vmatprep.subr.mxu0 0.0
        %2060 = vmatpush1.msra.mxu0 %v1806
        %2061 = vmatprep.subr.mxu0 0.0
        %2062 = vmatpush2.msra.mxu0 0.0
        %2063 = vmatprep.subr.mxu0 0.0
        %2064 = vmatpush2.msra.mxu0 0.0
        %2065 = vmatprep.subr.mxu0 0.0
        %2066 = vmatpush2.msra.mxu0 0.0
        %2067 = vmatprep.subr.mxu0 0.0
        %2068 = vmatpush2.msra.mxu0 0.0
        %2069 = vmatprep.subr.mxu0 0.0
        %2070 = vmatpush2.msra.mxu0 0.0
        %2071 = vmatprep.subr.mxu0 0.0
        %2072 = vmatpush2.msra.mxu0 0.0
        %2073 = vmatprep.subr.mxu0 0.0
        %2074 = vmatpush2.msra.mxu0 0.0
        %2075 = vmatprep.subr.mxu0 0.0
        %2076 = vmatpush2.msra.mxu0 0.0
        %2077 = vmatprep.subr.mxu0 0.0
        %2078 = vmatpush2.msra.mxu0 0.0
        %2079 = vmatprep.subr.mxu0 0.0
        %2080 = vmatpush2.msra.mxu0 0.0
        %2081 = vmatprep.subr.mxu0 0.0
        %2082 = vmatpush2.msra.mxu0 0.0
        %2083 = vmatprep.subr.mxu0 0.0
        %2084 = vmatpush2.msra.mxu0 0.0
        %2085 = vmatprep.subr.mxu0 0.0
        %2086 = vmatpush2.msra.mxu0 0.0
        %2087 = vmatprep.subr.mxu0 0.0
        %2088 = vmatpush2.msra.mxu0 0.0
        %2089 = vmatprep.subr.mxu0 0.0
        %2090 = vmatpush2.msra.mxu0 0.0
        %2091 = vmatprep.subr.mxu0 0.0
        %2092 = vmatpush2.msra.mxu0 0.0
        %2093 = vmatprep.mubr.f32.mxu0 0.0
        %2094 = vmatmul.mubr.f32.gmra.mxu0 %v2027
        %v2095 = vpop.f32.mrf.mxu0
        %v2096 = vadd.f32 0.0, %v2095
        %v2097 = vpop.f32.mrf.mxu0
        %2098 = vdwg.mxu0
        %v2099 = vld [vmem:[#allocation4] sm:$0xff]
        %v2100 = vld [vmem:[#allocation4 + $0x8] sm:$0xff]
        %v2101 = vld [vmem:[#allocation4 + $0x10] sm:$0xff]
        %v2102 = vld [vmem:[#allocation4 + $0x18] sm:$0xff]
        %2104 = vset.pattern.permute.xlu0 0
        %2105 = vperm.xlu0 %2104, %v1671
        %v2106 = vpop.permute.xlu0 %2105
        %2109 = vset.pattern.permute.xlu0 0
        %2110 = vperm.xlu0 %2109, %v1673
        %v2111 = vpop.permute.xlu0 %2110
        %2114 = vset.pattern.permute.xlu0 0
        %2115 = vperm.xlu0 %2114, %v1675
        %v2116 = vpop.permute.xlu0 %2115
        %2119 = vset.pattern.permute.xlu0 0
        %2120 = vperm.xlu0 %2119, %v1677
        %v2121 = vpop.permute.xlu0 %2120
        %v2123 = vmul.f32 %v2106, %v2099
        %v2124 = vmul.f32 %v2111, %v2100
        %v2125 = vmul.f32 %v2116, %v2101
        %v2126 = vmul.f32 %v2121, %v2102
        %v2127 = vadd.f32 %v2123, %v1877
        %v2128 = vadd.f32 %v2124, %v1950
        %v2129 = vadd.f32 %v2125, %v2023
        %v2130 = vadd.f32 %v2126, %v2096
        %2131 = vst.msk [vmem:[#allocation4] sm:$0xff] %vm1353, %v2127
        %2132 = vst.msk [vmem:[#allocation4 + $0x8] sm:$0xff] %vm1353, %v2128
        %2133 = vst.msk [vmem:[#allocation4 + $0x10] sm:$0xff] %vm1353, %v2129
        %2134 = vst.msk [vmem:[#allocation4 + $0x18] sm:$0xff] %vm1353, %v2130
        %2135 = vst.msk [vmem:[#allocation2] sm:$0xff] %vm1734, %v1662
        %2136 = vst.msk [vmem:[#allocation2 + $0x8] sm:$0xff] %vm1734, %v1663
        %2137 = vst.msk [vmem:[#allocation2 + $0x10] sm:$0xff] %vm1734, %v1664
        %2138 = vst.msk [vmem:[#allocation2 + $0x18] sm:$0xff] %vm1734, %v1665
        // Predicated region
        $region45: #{multi_head_attention.3} parent=39 // pred_check
          %p2139 = pneg %p314
        $region46: #{multi_head_attention.3} parent=39 // pred_check_branch
          %2141 = sbr.rel (%p2139) target = $region48
        $region47: #{multi_head_attention.3} parent=39 // pred_region
          %v2142 = vld [vmem:[#allocation3] sm:$0xff]
          %v2143 = vld [vmem:[#allocation3 + $0x8] sm:$0xff]
          %v2144 = vld [vmem:[#allocation3 + $0x10] sm:$0xff]
          %v2145 = vld [vmem:[#allocation3 + $0x18] sm:$0xff]
          %v2146 = vrcp.pop %v2142
          %v2147 = vrcp.pop %v2143
          %v2148 = vrcp.pop %v2144
          %v2149 = vrcp.pop %v2145
          %v2150 = vld [vmem:[#allocation4] sm:$0xff]
          %v2151 = vld [vmem:[#allocation4 + $0x8] sm:$0xff]
          %v2152 = vld [vmem:[#allocation4 + $0x10] sm:$0xff]
          %v2153 = vld [vmem:[#allocation4 + $0x18] sm:$0xff]
          %2155 = vset.pattern.permute.xlu0 0
          %2156 = vperm.xlu0 %2155, %v2146
          %v2157 = vpop.permute.xlu0 %2156
          %2160 = vset.pattern.permute.xlu0 0
          %2161 = vperm.xlu0 %2160, %v2147
          %v2162 = vpop.permute.xlu0 %2161
          %2165 = vset.pattern.permute.xlu0 0
          %2166 = vperm.xlu0 %2165, %v2148
          %v2167 = vpop.permute.xlu0 %2166
          %2170 = vset.pattern.permute.xlu0 0
          %2171 = vperm.xlu0 %2170, %v2149
          %v2172 = vpop.permute.xlu0 %2171
          %v2174 = vmul.f32 %v2150, %v2157
          %v2175 = vmul.f32 %v2151, %v2162
          %v2176 = vmul.f32 %v2152, %v2167
          %v2177 = vmul.f32 %v2153, %v2172
          %v2178 = vld [vmem:[%s3] sm:$0xff]
          %s2179 = scalar_lea.vmem %s3, 8
          %v2180 = vld [vmem:[%s2179] sm:$0xff]
          %v2182 = vsel %vm1353, %v2175, 0
          %2184 = vmatprep.subr.mxu0 0.0
          %2185 = vmatpush1.msra.mxu0 0.0
          %2186 = vmatprep.subr.mxu0 0.0
          %2187 = vmatpush1.msra.mxu0 0.0
          %2188 = vmatprep.subr.mxu0 0.0
          %2189 = vmatpush1.msra.mxu0 0.0
          %2190 = vmatprep.subr.mxu0 0.0
          %2191 = vmatpush1.msra.mxu0 0.0
          %2192 = vmatprep.subr.mxu0 0.0
          %2193 = vmatpush1.msra.mxu0 0.0
          %2194 = vmatprep.subr.mxu0 0.0
          %2195 = vmatpush1.msra.mxu0 0.0
          %2196 = vmatprep.subr.mxu0 0.0
          %2197 = vmatpush1.msra.mxu0 0.0
          %2198 = vmatprep.subr.mxu0 0.0
          %2199 = vmatpush1.msra.mxu0 0.0
          %2200 = vmatprep.subr.mxu0 0.0
          %2201 = vmatpush1.msra.mxu0 0.0
          %2202 = vmatprep.subr.mxu0 0.0
          %2203 = vmatpush1.msra.mxu0 0.0
          %2204 = vmatprep.subr.mxu0 0.0
          %2205 = vmatpush1.msra.mxu0 0.0
          %2206 = vmatprep.subr.mxu0 0.0
          %2207 = vmatpush1.msra.mxu0 0.0
          %2208 = vmatprep.subr.mxu0 0.0
          %2209 = vmatpush1.msra.mxu0 0.0
          %2210 = vmatprep.subr.mxu0 0.0
          %2211 = vmatpush1.msra.mxu0 0.0
          %2212 = vmatprep.subr.mxu0 0.0
          %2213 = vmatpush1.msra.mxu0 0.0
          %2214 = vmatprep.subr.mxu0 0.0
          %2215 = vmatpush1.msra.mxu0 %v2180
          %2216 = vmatprep.subr.mxu0 0.0
          %2217 = vmatpush2.msra.mxu0 0.0
          %2218 = vmatprep.subr.mxu0 0.0
          %2219 = vmatpush2.msra.mxu0 0.0
          %2220 = vmatprep.subr.mxu0 0.0
          %2221 = vmatpush2.msra.mxu0 0.0
          %2222 = vmatprep.subr.mxu0 0.0
          %2223 = vmatpush2.msra.mxu0 0.0
          %2224 = vmatprep.subr.mxu0 0.0
          %2225 = vmatpush2.msra.mxu0 0.0
          %2226 = vmatprep.subr.mxu0 0.0
          %2227 = vmatpush2.msra.mxu0 0.0
          %2228 = vmatprep.subr.mxu0 0.0
          %2229 = vmatpush2.msra.mxu0 0.0
          %2230 = vmatprep.subr.mxu0 0.0
          %2231 = vmatpush2.msra.mxu0 0.0
          %2232 = vmatprep.subr.mxu0 0.0
          %2233 = vmatpush2.msra.mxu0 0.0
          %2234 = vmatprep.subr.mxu0 0.0
          %2235 = vmatpush2.msra.mxu0 0.0
          %2236 = vmatprep.subr.mxu0 0.0
          %2237 = vmatpush2.msra.mxu0 0.0
          %2238 = vmatprep.subr.mxu0 0.0
          %2239 = vmatpush2.msra.mxu0 0.0
          %2240 = vmatprep.subr.mxu0 0.0
          %2241 = vmatpush2.msra.mxu0 0.0
          %2242 = vmatprep.subr.mxu0 0.0
          %2243 = vmatpush2.msra.mxu0 0.0
          %2244 = vmatprep.subr.mxu0 0.0
          %2245 = vmatpush2.msra.mxu0 0.0
          %2246 = vmatprep.subr.mxu0 0.0
          %2247 = vmatpush2.msra.mxu0 0.0
          %2248 = vmatprep.mubr.f32.mxu0 0.0
          %2249 = vmatmul.mubr.f32.gmra.mxu0 %v2182
          %v2250 = vpop.f32.mrf.mxu0
          %v2251 = vadd.f32 0.0, %v2250
          %v2252 = vpop.f32.mrf.mxu0
          %2253 = vdwg.mxu0
          %v2255 = vsel %vm1353, %v2174, 0
          %2257 = vmatprep.subr.mxu0 0.0
          %2258 = vmatpush1.msra.mxu0 0.0
          %2259 = vmatprep.subr.mxu0 0.0
          %2260 = vmatpush1.msra.mxu0 0.0
          %2261 = vmatprep.subr.mxu0 0.0
          %2262 = vmatpush1.msra.mxu0 0.0
          %2263 = vmatprep.subr.mxu0 0.0
          %2264 = vmatpush1.msra.mxu0 0.0
          %2265 = vmatprep.subr.mxu0 0.0
          %2266 = vmatpush1.msra.mxu0 0.0
          %2267 = vmatprep.subr.mxu0 0.0
          %2268 = vmatpush1.msra.mxu0 0.0
          %2269 = vmatprep.subr.mxu0 0.0
          %2270 = vmatpush1.msra.mxu0 0.0
          %2271 = vmatprep.subr.mxu0 0.0
          %2272 = vmatpush1.msra.mxu0 0.0
          %2273 = vmatprep.subr.mxu0 0.0
          %2274 = vmatpush1.msra.mxu0 0.0
          %2275 = vmatprep.subr.mxu0 0.0
          %2276 = vmatpush1.msra.mxu0 0.0
          %2277 = vmatprep.subr.mxu0 0.0
          %2278 = vmatpush1.msra.mxu0 0.0
          %2279 = vmatprep.subr.mxu0 0.0
          %2280 = vmatpush1.msra.mxu0 0.0
          %2281 = vmatprep.subr.mxu0 0.0
          %2282 = vmatpush1.msra.mxu0 0.0
          %2283 = vmatprep.subr.mxu0 0.0
          %2284 = vmatpush1.msra.mxu0 0.0
          %2285 = vmatprep.subr.mxu0 0.0
          %2286 = vmatpush1.msra.mxu0 0.0
          %2287 = vmatprep.subr.mxu0 0.0
          %2288 = vmatpush1.msra.mxu0 %v2178
          %2289 = vmatprep.subr.mxu0 0.0
          %2290 = vmatpush2.msra.mxu0 0.0
          %2291 = vmatprep.subr.mxu0 0.0
          %2292 = vmatpush2.msra.mxu0 0.0
          %2293 = vmatprep.subr.mxu0 0.0
          %2294 = vmatpush2.msra.mxu0 0.0
          %2295 = vmatprep.subr.mxu0 0.0
          %2296 = vmatpush2.msra.mxu0 0.0
          %2297 = vmatprep.subr.mxu0 0.0
          %2298 = vmatpush2.msra.mxu0 0.0
          %2299 = vmatprep.subr.mxu0 0.0
          %2300 = vmatpush2.msra.mxu0 0.0
          %2301 = vmatprep.subr.mxu0 0.0
          %2302 = vmatpush2.msra.mxu0 0.0
          %2303 = vmatprep.subr.mxu0 0.0
          %2304 = vmatpush2.msra.mxu0 0.0
          %2305 = vmatprep.subr.mxu0 0.0
          %2306 = vmatpush2.msra.mxu0 0.0
          %2307 = vmatprep.subr.mxu0 0.0
          %2308 = vmatpush2.msra.mxu0 0.0
          %2309 = vmatprep.subr.mxu0 0.0
          %2310 = vmatpush2.msra.mxu0 0.0
          %2311 = vmatprep.subr.mxu0 0.0
          %2312 = vmatpush2.msra.mxu0 0.0
          %2313 = vmatprep.subr.mxu0 0.0
          %2314 = vmatpush2.msra.mxu0 0.0
          %2315 = vmatprep.subr.mxu0 0.0
          %2316 = vmatpush2.msra.mxu0 0.0
          %2317 = vmatprep.subr.mxu0 0.0
          %2318 = vmatpush2.msra.mxu0 0.0
          %2319 = vmatprep.subr.mxu0 0.0
          %2320 = vmatpush2.msra.mxu0 0.0
          %2321 = vmatprep.mubr.f32.mxu0 0.0
          %2322 = vmatmul.mubr.f32.gmra.mxu0 %v2255
          %v2323 = vpop.f32.mrf.mxu0
          %v2324 = vadd.f32 %v2251, %v2323
          %v2325 = vpop.f32.mrf.mxu0
          %2326 = vdwg.mxu0
          %s2327 = scalar_lea.vmem %s3, 16
          %v2328 = vld [vmem:[%s2327] sm:$0xff]
          %v2330 = vsel %vm1353, %v2176, 0
          %2332 = vmatprep.subr.mxu0 0.0
          %2333 = vmatpush1.msra.mxu0 0.0
          %2334 = vmatprep.subr.mxu0 0.0
          %2335 = vmatpush1.msra.mxu0 0.0
          %2336 = vmatprep.subr.mxu0 0.0
          %2337 = vmatpush1.msra.mxu0 0.0
          %2338 = vmatprep.subr.mxu0 0.0
          %2339 = vmatpush1.msra.mxu0 0.0
          %2340 = vmatprep.subr.mxu0 0.0
          %2341 = vmatpush1.msra.mxu0 0.0
          %2342 = vmatprep.subr.mxu0 0.0
          %2343 = vmatpush1.msra.mxu0 0.0
          %2344 = vmatprep.subr.mxu0 0.0
          %2345 = vmatpush1.msra.mxu0 0.0
          %2346 = vmatprep.subr.mxu0 0.0
          %2347 = vmatpush1.msra.mxu0 0.0
          %2348 = vmatprep.subr.mxu0 0.0
          %2349 = vmatpush1.msra.mxu0 0.0
          %2350 = vmatprep.subr.mxu0 0.0
          %2351 = vmatpush1.msra.mxu0 0.0
          %2352 = vmatprep.subr.mxu0 0.0
          %2353 = vmatpush1.msra.mxu0 0.0
          %2354 = vmatprep.subr.mxu0 0.0
          %2355 = vmatpush1.msra.mxu0 0.0
          %2356 = vmatprep.subr.mxu0 0.0
          %2357 = vmatpush1.msra.mxu0 0.0
          %2358 = vmatprep.subr.mxu0 0.0
          %2359 = vmatpush1.msra.mxu0 0.0
          %2360 = vmatprep.subr.mxu0 0.0
          %2361 = vmatpush1.msra.mxu0 0.0
          %2362 = vmatprep.subr.mxu0 0.0
          %2363 = vmatpush1.msra.mxu0 %v2328
          %2364 = vmatprep.subr.mxu0 0.0
          %2365 = vmatpush2.msra.mxu0 0.0
          %2366 = vmatprep.subr.mxu0 0.0
          %2367 = vmatpush2.msra.mxu0 0.0
          %2368 = vmatprep.subr.mxu0 0.0
          %2369 = vmatpush2.msra.mxu0 0.0
          %2370 = vmatprep.subr.mxu0 0.0
          %2371 = vmatpush2.msra.mxu0 0.0
          %2372 = vmatprep.subr.mxu0 0.0
          %2373 = vmatpush2.msra.mxu0 0.0
          %2374 = vmatprep.subr.mxu0 0.0
          %2375 = vmatpush2.msra.mxu0 0.0
          %2376 = vmatprep.subr.mxu0 0.0
          %2377 = vmatpush2.msra.mxu0 0.0
          %2378 = vmatprep.subr.mxu0 0.0
          %2379 = vmatpush2.msra.mxu0 0.0
          %2380 = vmatprep.subr.mxu0 0.0
          %2381 = vmatpush2.msra.mxu0 0.0
          %2382 = vmatprep.subr.mxu0 0.0
          %2383 = vmatpush2.msra.mxu0 0.0
          %2384 = vmatprep.subr.mxu0 0.0
          %2385 = vmatpush2.msra.mxu0 0.0
          %2386 = vmatprep.subr.mxu0 0.0
          %2387 = vmatpush2.msra.mxu0 0.0
          %2388 = vmatprep.subr.mxu0 0.0
          %2389 = vmatpush2.msra.mxu0 0.0
          %2390 = vmatprep.subr.mxu0 0.0
          %2391 = vmatpush2.msra.mxu0 0.0
          %2392 = vmatprep.subr.mxu0 0.0
          %2393 = vmatpush2.msra.mxu0 0.0
          %2394 = vmatprep.subr.mxu0 0.0
          %2395 = vmatpush2.msra.mxu0 0.0
          %2396 = vmatprep.mubr.f32.mxu0 0.0
          %2397 = vmatmul.mubr.f32.gmra.mxu0 %v2330
          %v2398 = vpop.f32.mrf.mxu0
          %v2399 = vadd.f32 0.0, %v2398
          %v2400 = vpop.f32.mrf.mxu0
          %2401 = vdwg.mxu0
          %v2402 = vadd.f32 %v2324, %v2399
          %s2403 = scalar_lea.vmem %s3, 24
          %v2404 = vld [vmem:[%s2403] sm:$0xff]
          %v2406 = vsel %vm1353, %v2177, 0
          %2408 = vmatprep.subr.mxu0 0.0
          %2409 = vmatpush1.msra.mxu0 0.0
          %2410 = vmatprep.subr.mxu0 0.0
          %2411 = vmatpush1.msra.mxu0 0.0
          %2412 = vmatprep.subr.mxu0 0.0
          %2413 = vmatpush1.msra.mxu0 0.0
          %2414 = vmatprep.subr.mxu0 0.0
          %2415 = vmatpush1.msra.mxu0 0.0
          %2416 = vmatprep.subr.mxu0 0.0
          %2417 = vmatpush1.msra.mxu0 0.0
          %2418 = vmatprep.subr.mxu0 0.0
          %2419 = vmatpush1.msra.mxu0 0.0
          %2420 = vmatprep.subr.mxu0 0.0
          %2421 = vmatpush1.msra.mxu0 0.0
          %2422 = vmatprep.subr.mxu0 0.0
          %2423 = vmatpush1.msra.mxu0 0.0
          %2424 = vmatprep.subr.mxu0 0.0
          %2425 = vmatpush1.msra.mxu0 0.0
          %2426 = vmatprep.subr.mxu0 0.0
          %2427 = vmatpush1.msra.mxu0 0.0
          %2428 = vmatprep.subr.mxu0 0.0
          %2429 = vmatpush1.msra.mxu0 0.0
          %2430 = vmatprep.subr.mxu0 0.0
          %2431 = vmatpush1.msra.mxu0 0.0
          %2432 = vmatprep.subr.mxu0 0.0
          %2433 = vmatpush1.msra.mxu0 0.0
          %2434 = vmatprep.subr.mxu0 0.0
          %2435 = vmatpush1.msra.mxu0 0.0
          %2436 = vmatprep.subr.mxu0 0.0
          %2437 = vmatpush1.msra.mxu0 0.0
          %2438 = vmatprep.subr.mxu0 0.0
          %2439 = vmatpush1.msra.mxu0 %v2404
          %2440 = vmatprep.subr.mxu0 0.0
          %2441 = vmatpush2.msra.mxu0 0.0
          %2442 = vmatprep.subr.mxu0 0.0
          %2443 = vmatpush2.msra.mxu0 0.0
          %2444 = vmatprep.subr.mxu0 0.0
          %2445 = vmatpush2.msra.mxu0 0.0
          %2446 = vmatprep.subr.mxu0 0.0
          %2447 = vmatpush2.msra.mxu0 0.0
          %2448 = vmatprep.subr.mxu0 0.0
          %2449 = vmatpush2.msra.mxu0 0.0
          %2450 = vmatprep.subr.mxu0 0.0
          %2451 = vmatpush2.msra.mxu0 0.0
          %2452 = vmatprep.subr.mxu0 0.0
          %2453 = vmatpush2.msra.mxu0 0.0
          %2454 = vmatprep.subr.mxu0 0.0
          %2455 = vmatpush2.msra.mxu0 0.0
          %2456 = vmatprep.subr.mxu0 0.0
          %2457 = vmatpush2.msra.mxu0 0.0
          %2458 = vmatprep.subr.mxu0 0.0
          %2459 = vmatpush2.msra.mxu0 0.0
          %2460 = vmatprep.subr.mxu0 0.0
          %2461 = vmatpush2.msra.mxu0 0.0
          %2462 = vmatprep.subr.mxu0 0.0
          %2463 = vmatpush2.msra.mxu0 0.0
          %2464 = vmatprep.subr.mxu0 0.0
          %2465 = vmatpush2.msra.mxu0 0.0
          %2466 = vmatprep.subr.mxu0 0.0
          %2467 = vmatpush2.msra.mxu0 0.0
          %2468 = vmatprep.subr.mxu0 0.0
          %2469 = vmatpush2.msra.mxu0 0.0
          %2470 = vmatprep.subr.mxu0 0.0
          %2471 = vmatpush2.msra.mxu0 0.0
          %2472 = vmatprep.mubr.f32.mxu0 0.0
          %2473 = vmatmul.mubr.f32.gmra.mxu0 %v2406
          %v2474 = vpop.f32.mrf.mxu0
          %v2475 = vadd.f32 0.0, %v2474
          %v2476 = vpop.f32.mrf.mxu0
          %2477 = vdwg.mxu0
          %v2478 = vadd.f32 %v2402, %v2475
          %v2479 = vld [vmem:[%s4] sm:$0x1]
          %v2481 = vlaneseq
          %v2482 = vshrl.u32 %v2481, 7
          %v2483 = vsub.s32 0, %v2482
          %v2484 = vrot.slane %v2479, %v2483
          %v2486 = vadd.f32 %v2478, %v2484
          %vm2487 = vcmask 261120
          %2488 = vst.msk [vmem:[%s290] sm:$0xff] %vm2487, %v2486
        $region48: #{multi_head_attention.3} parent=39 // pred_fallthru
          _
        %s2489 = sand.u32 %s174, 1
        %s2490 = scalar_lea.sflag [#allocation6], %s2489
        %s2491 = sand.u32 %s174, 1
        %s2492 = smul.addr %s2491, 8
        %s2493 = scalar_lea.vmem [#allocation5], %s2492
        // Predicated region
        $region49: #{multi_head_attention.3} parent=39 // pred_check
          %p2494 = pneg %p184
        $region50: #{multi_head_attention.3} parent=39 // pred_check_branch
          %2496 = sbr.rel (%p2494) target = $region52
        $region51: #{multi_head_attention.3} parent=39 // pred_region
          %s2498 = ssub.s32 128, 128
          %2499 = vsyncadd %s2490, %s2498
          %s2500 = sadd.s32 %s25, %s24
          %s2501 = smul.addr %s2500, 128
          %s2502 = scalar_lea.hbm %s5, %s2501
          %s2504 = sshll.u32 %s2493, 4
          %s2505 = int_to_ptr.vmem [resolvable:$true] %s2504
          %2507 = dma.vmem_to_hbm [thread:$0]  %s2505, 128, %s2502, %s2490
        $region52: #{multi_head_attention.3} parent=39 // pred_fallthru
          _
      $region40: #{multi_head_attention.3} parent=5 // pred_fallthru
        _
      %p2508 = scmp.le.s32.totalorder 2, %s14
      // Predicated region
      $region53: #{multi_head_attention.3} parent=5 // pred_check
        %p2509 = pneg %p2508
      $region54: #{multi_head_attention.3} parent=5 // pred_check_branch
        %2511 = sbr.rel (%p2509) target = $region56
      $region55: #{multi_head_attention.3} parent=5 // pred_region
        %s2512 = ssub.s32 %s14, 2
        // Predicated region
        $region57: #{multi_head_attention.3} parent=55 // pred_check
          %p2513 = pneg %p190
        $region58: #{multi_head_attention.3} parent=55 // pred_check_branch
          %2515 = sbr.rel (%p2513) target = $region60
        $region59: #{multi_head_attention.3} parent=55 // pred_region
          %s2516 = sand.u32 %s175, 1
          %s2517 = scalar_lea.sflag [#allocation6], %s2516
          %s2518 = sand.u32 %s175, 1
          %s2519 = smul.addr %s2518, 8
          %s2520 = scalar_lea.vmem [#allocation5], %s2519
          %2521 = dma.done %s2517, 128
        $region60: #{multi_head_attention.3} parent=55 // pred_fallthru
          _
      $region56: #{multi_head_attention.3} parent=5 // pred_fallthru
        _
    $region6: #{multi_head_attention.3} parent=1 // loop_footer
      %s18 = sadd.s32 1, %s14
    $region7: #{multi_head_attention.3} parent=1 // loop_footer_branch
      %13 = sbr.rel target = $region3
    $region8: #{multi_head_attention.3} parent=1 // loop_exit
      _
    %2522 = vsyncpa [#allocation6], 1
    %s2523 = scalar_lea.sflag [#allocation6], 1
    %2524 = vsyncpa %s2523, 1

</llo_original>
